<compile_context>
chip_gen: v7x
topology: tpu7x:2x2x1
jax: 0.10.0
libtpu: 0.0.40
codegen_flags: <defaults>
</compile_context>

<pallas_src>
import jax
import jax.numpy as jnp
from jax.experimental import pallas as pl
from jax.experimental.pallas import tpu as pltpu

POOL_K = 5
POOL_PAD = POOL_K // 2  # 2


def _silu(x):
    """SiLU = x * sigmoid(x).  sigmoid = 1/(1+exp(-x)): exp and the reciprocal
    both go to the EUP, keeping the divide off the (saturated) VPU."""
    return x * pl.reciprocal(1.0 + jnp.exp(-x), approx=True)


def _max5_rows(x):
    """5-tap max along axis 0 (H), stride 1, pad 2 (pad value = dtype min)."""
    H = x.shape[0]
    neg = jnp.finfo(x.dtype).min
    pad = jnp.full((POOL_PAD,) + x.shape[1:], neg, dtype=x.dtype)
    xp = jnp.concatenate([pad, x, pad], axis=0)          # (H+4, W, C)
    out = xp[0:H]
    for d in range(1, POOL_K):
        out = jnp.maximum(out, xp[d:d + H])
    return out


def _max5_cols(x):
    """5-tap max along axis 1 (W, the sublane axis), stride 1, pad 2.

    Shifts go through pltpu.roll (XLU slot); wrap-around values are masked to
    -inf with a broadcasted-iota edge mask, so no padded scratch buffer."""
    H, W, C = x.shape
    neg = jnp.finfo(x.dtype).min
    w_idx = jax.lax.broadcasted_iota(jnp.int32, (H, W, C), dimension=1)
    out = x
    for d in range(1, POOL_PAD + 1):
        fwd = pltpu.roll(x, shift=W - d, axis=1)         # fwd[:, j] = x[:, (j+d) % W]
        fwd = jnp.where(w_idx < W - d, fwd, neg)
        bwd = pltpu.roll(x, shift=d, axis=1)             # bwd[:, j] = x[:, (j-d) % W]
        bwd = jnp.where(w_idx >= d, bwd, neg)
        out = jnp.maximum(out, jnp.maximum(fwd, bwd))
    return out


def _maxpool5x5_same(x):
    """Separable MaxPool2d(k=5, stride=1, pad=2) on an (H, W, C) array."""
    return _max5_cols(_max5_rows(x))


def _sppf_kernel(x_ref, w1_ref, b1_ref, w2_ref, b2_ref, o_ref):
    # x_ref: (1, H, W, Cin)   w1_ref: (Cin, inter)   b1_ref: (1, inter)
    # w2_ref: (4, inter, Cout)  b2_ref: (1, Cout)    o_ref: (1, H, W, Cout)
    _, H, W, Cin = x_ref.shape
    Cout = o_ref.shape[-1]
    inter = w1_ref.shape[-1]

    # conv1: 1x1 conv == channel matmul (BN folded into w1/b1) + SiLU.
    # NOTE: the (H, W, C) -> (H*W, C) flatten is layout-free when W is a
    # multiple of the sublane count (8 for f32); keep W padded accordingly.
    x2d = x_ref[0].reshape(H * W, Cin)
    y = jnp.dot(x2d, w1_ref[...], preferred_element_type=jnp.float32)
    y = _silu(y + b1_ref[...]).astype(x_ref.dtype).reshape(H, W, inter)

    # Fused pool chain + conv2: each pool stage is immediately contracted with
    # its w2 slice and accumulated in f32 — the 4*inter channel concat is
    # never materialized, and only `acc` + the current pool stage stay live.
    acc = jnp.dot(y.reshape(H * W, inter), w2_ref[0],
                  preferred_element_type=jnp.float32)
    p = y
    for k in range(1, 4):
        p = _maxpool5x5_same(p)
        acc = acc + jnp.dot(p.reshape(H * W, inter), w2_ref[k],
                            preferred_element_type=jnp.float32)

    z = _silu(acc + b2_ref[...]).astype(o_ref.dtype)
    o_ref[...] = z.reshape(1, H, W, Cout)


def sppf_forward_nhwc(x_nhwc, w1, b1, w2, b2):
    """NHWC-native SPPF forward (preferred: no boundary transposes).

    x_nhwc: (N, H, W, Cin); w1: (Cin, inter); b1: (1, inter);
    w2: (4*inter, Cout); b2: (1, Cout).  Returns (N, H, W, Cout)."""
    assert jnp.issubdtype(x_nhwc.dtype, jnp.floating), \
        "SPPF kernel expects a floating dtype (max-pool pads with dtype min)"
    N, H, W, Cin = x_nhwc.shape
    inter = w1.shape[1]
    Cout = w2.shape[1]
    assert w2.shape[0] == 4 * inter

    # Split conv2 weights per pool stage: rows [k*inter:(k+1)*inter] of the
    # PyTorch cat([y, p1, p2, p3]) ordering -> leading-dim index k.
    w2_split = w2.reshape(4, inter, Cout)

    return pl.pallas_call(
        _sppf_kernel,
        out_shape=jax.ShapeDtypeStruct((N, H, W, Cout), x_nhwc.dtype),
        grid_spec=pltpu.PrefetchScalarGridSpec(
            num_scalar_prefetch=0,
            grid=(N,),
            in_specs=[
                pl.BlockSpec((1, H, W, Cin), lambda b: (b, 0, 0, 0)),
                pl.BlockSpec((Cin, inter), lambda b: (0, 0)),
                pl.BlockSpec((1, inter), lambda b: (0, 0)),
                pl.BlockSpec((4, inter, Cout), lambda b: (0, 0, 0)),
                pl.BlockSpec((1, Cout), lambda b: (0, 0)),
            ],
            out_specs=pl.BlockSpec((1, H, W, Cout), lambda b: (b, 0, 0, 0)),
        ),
        compiler_params=pltpu.CompilerParams(
            dimension_semantics=("parallel",),
            # v5e's default scoped-VMEM limit is 16 MiB; raise it so realistic
            # SPPF shapes keep whole-image-per-batch blocks.
            vmem_limit_bytes=32 * 1024 * 1024,
        ),
    )(x_nhwc, w1, b1, w2_split, b2)


def sppf_forward(x_nchw, w1, b1, w2, b2):
    """NCHW-compatibility wrapper matching the PyTorch module interface.
    Prefer sppf_forward_nhwc in an NHWC graph — these transposes are pure
    extra HBM traffic."""
    x_nhwc = jnp.transpose(x_nchw, (0, 2, 3, 1))
    out_nhwc = sppf_forward_nhwc(x_nhwc, w1, b1, w2, b2)
    return jnp.transpose(out_nhwc, (0, 3, 1, 2))


def make_params(key, in_dim, out_dim, expand_radio=0.5, eps=1e-5,
                dtype=jnp.float32):
    """Deterministic synthetic params; BN folded into the 1x1 convs."""
    inter_dim = int(in_dim * expand_radio)
    ks = jax.random.split(key, 10)

    def conv_bn(keys, cin, cout):
        kw, kg, kb, km, kv = keys
        # PyTorch conv weight (cout, cin, 1, 1) equivalent -> stored as (cin, cout)
        w = jax.random.normal(kw, (cin, cout), dtype) * 0.1
        gamma = 1.0 + 0.1 * jax.random.normal(kg, (cout,), dtype)
        beta = 0.1 * jax.random.normal(kb, (cout,), dtype)
        mean = 0.1 * jax.random.normal(km, (cout,), dtype)
        var = jnp.abs(jax.random.normal(kv, (cout,), dtype)) + 0.5
        scale = gamma / jnp.sqrt(var + eps)
        return w * scale[None, :], (beta - mean * scale)[None, :]

    w1, b1 = conv_bn(ks[0:5], in_dim, inter_dim)
    w2, b2 = conv_bn(ks[5:10], 4 * inter_dim, out_dim)
    return w1, b1, w2, b2


if __name__ == "__main__":
    # Small shapes consistent with the module: batch=2, in_dim=4, 16x16 spatial.
    N, Cin, H, W = 2, 4, 16, 16
    out_dim = 4

    key = jax.random.PRNGKey(0)
    kx, kp = jax.random.split(key)
    x_nchw = jax.random.normal(kx, (N, Cin, H, W), jnp.float32)
    w1, b1, w2, b2 = make_params(kp, Cin, out_dim)

    # Preferred NHWC-native path (no boundary transposes).
    x_nhwc = jnp.transpose(x_nchw, (0, 2, 3, 1))
    out_nhwc = jax.jit(sppf_forward_nhwc)(x_nhwc, w1, b1, w2, b2)
    jax.block_until_ready(out_nhwc)
    assert out_nhwc.shape == (N, H, W, out_dim), out_nhwc.shape

    # NCHW-compatibility wrapper (matches the PyTorch module interface).
    out_nchw = jax.jit(sppf_forward)(x_nchw, w1, b1, w2, b2)
    jax.block_until_ready(out_nchw)
    assert out_nchw.shape == (N, out_dim, H, W), out_nchw.shape

    # The two layouts must agree (same kernel underneath).
    diff = jnp.max(jnp.abs(jnp.transpose(out_nchw, (0, 2, 3, 1)) - out_nhwc))
    assert float(diff) < 1e-5, float(diff)

    print("KERNEL_OK")
</pallas_src>

<mosaic_0001>
module attributes {stable_mosaic.version = 11 : i64} {
  func.func @_sppf_kernel(%arg0: i32, %arg1: memref<1x16x16x4xf32, #tpu.memory_space<vmem>>, %arg2: memref<4x2xf32, #tpu.memory_space<vmem>>, %arg3: memref<1x2xf32, #tpu.memory_space<vmem>>, %arg4: memref<4x2x4xf32, #tpu.memory_space<vmem>>, %arg5: memref<1x4xf32, #tpu.memory_space<vmem>>, %arg6: memref<1x16x16x4xf32, #tpu.memory_space<vmem>>) attributes {dimension_semantics = [#tpu.dimension_semantics<parallel>], iteration_bounds = array<i64: 2>, scalar_prefetch = 0 : i64, scratch_operands = 0 : i64, tpu.core_type = #tpu.core_type<tc>, window_params = [{transform_indices = @transform_0, window_bounds = array<i64: 1, 16, 16, 4>}, {pipeline_mode = #tpu.pipeline_mode<synchronous>, transform_indices = @transform_1, window_bounds = array<i64: 4, 2>}, {pipeline_mode = #tpu.pipeline_mode<synchronous>, transform_indices = @transform_2, window_bounds = array<i64: 1, 2>}, {pipeline_mode = #tpu.pipeline_mode<synchronous>, transform_indices = @transform_3, window_bounds = array<i64: 4, 2, 4>}, {pipeline_mode = #tpu.pipeline_mode<synchronous>, transform_indices = @transform_4, window_bounds = array<i64: 1, 4>}, {transform_indices = @transform_5, window_bounds = array<i64: 1, 16, 16, 4>}]} {
    %c0 = arith.constant 0 : index
    %c0_0 = arith.constant 0 : index
    %c0_1 = arith.constant 0 : index
    %c0_2 = arith.constant 0 : index
    %0 = vector.load %arg1[%c0, %c0_0, %c0_1, %c0_2] : memref<1x16x16x4xf32, #tpu.memory_space<vmem>>, vector<1x16x16x4xf32>
    %1 = vector.shape_cast %0 : vector<1x16x16x4xf32> to vector<16x16x4xf32>
    %2 = vector.shape_cast %1 : vector<16x16x4xf32> to vector<256x4xf32>
    %c0_3 = arith.constant 0 : index
    %c0_4 = arith.constant 0 : index
    %3 = vector.load %arg2[%c0_3, %c0_4] : memref<4x2xf32, #tpu.memory_space<vmem>>, vector<4x2xf32>
    %cst = arith.constant dense<0.000000e+00> : vector<256x2xf32>
    %4 = tpu.matmul %2, %3, %cst {dimension_numbers = #tpu.dot_dimension_numbers<[1], [0], [0], [1], [0, 0, 1, 1], [], []>} : vector<256x4xf32>, vector<4x2xf32>, vector<256x2xf32> -> vector<256x2xf32>
    %c0_5 = arith.constant 0 : index
    %c0_6 = arith.constant 0 : index
    %5 = vector.load %arg3[%c0_5, %c0_6] : memref<1x2xf32, #tpu.memory_space<vmem>>, vector<1x2xf32>
    %6 = vector.broadcast %5 : vector<1x2xf32> to vector<256x2xf32>
    %7 = arith.addf %4, %6 : vector<256x2xf32>
    %cst_7 = arith.constant 0.000000e+00 : f32
    %8 = vector.broadcast %cst_7 : f32 to vector<256x2xf32>
    %9 = arith.subf %8, %7 : vector<256x2xf32>
    %10 = math.exp %9 : vector<256x2xf32>
    %cst_8 = arith.constant 1.000000e+00 : f32
    %11 = vector.broadcast %cst_8 : f32 to vector<256x2xf32>
    %12 = arith.addf %11, %10 : vector<256x2xf32>
    %13 = tpu.reciprocal %12 {approx = true} : vector<256x2xf32> -> vector<256x2xf32>
    %14 = arith.mulf %7, %13 : vector<256x2xf32>
    %15 = vector.shape_cast %14 : vector<256x2xf32> to vector<16x16x2xf32>
    %16 = vector.shape_cast %15 : vector<16x16x2xf32> to vector<256x2xf32>
    %c0_9 = arith.constant 0 : index
    %c0_10 = arith.constant 0 : index
    %c0_11 = arith.constant 0 : index
    %17 = vector.load %arg4[%c0_9, %c0_10, %c0_11] : memref<4x2x4xf32, #tpu.memory_space<vmem>>, vector<1x2x4xf32>
    %18 = vector.shape_cast %17 : vector<1x2x4xf32> to vector<2x4xf32>
    %cst_12 = arith.constant dense<0.000000e+00> : vector<256x4xf32>
    %19 = tpu.matmul %16, %18, %cst_12 {dimension_numbers = #tpu.dot_dimension_numbers<[1], [0], [0], [1], [0, 0, 1, 1], [], []>} : vector<256x2xf32>, vector<2x4xf32>, vector<256x4xf32> -> vector<256x4xf32>
    %cst_13 = arith.constant -3.40282347E+38 : f32
    %20 = vector.broadcast %cst_13 : f32 to vector<2x16x2xf32>
    %21 = tpu.concatenate %20, %15, %20 in 0 : vector<2x16x2xf32>, vector<16x16x2xf32>, vector<2x16x2xf32> -> vector<20x16x2xf32>
    %22 = vector.extract_strided_slice %21 {offsets = [0, 0, 0], sizes = [16, 16, 2], strides = [1, 1, 1]} : vector<20x16x2xf32> to vector<16x16x2xf32>
    %23 = vector.extract_strided_slice %21 {offsets = [1, 0, 0], sizes = [16, 16, 2], strides = [1, 1, 1]} : vector<20x16x2xf32> to vector<16x16x2xf32>
    %24 = arith.maximumf %22, %23 : vector<16x16x2xf32>
    %25 = vector.extract_strided_slice %21 {offsets = [2, 0, 0], sizes = [16, 16, 2], strides = [1, 1, 1]} : vector<20x16x2xf32> to vector<16x16x2xf32>
    %26 = arith.maximumf %24, %25 : vector<16x16x2xf32>
    %27 = vector.extract_strided_slice %21 {offsets = [3, 0, 0], sizes = [16, 16, 2], strides = [1, 1, 1]} : vector<20x16x2xf32> to vector<16x16x2xf32>
    %28 = arith.maximumf %26, %27 : vector<16x16x2xf32>
    %29 = vector.extract_strided_slice %21 {offsets = [4, 0, 0], sizes = [16, 16, 2], strides = [1, 1, 1]} : vector<20x16x2xf32> to vector<16x16x2xf32>
    %30 = arith.maximumf %28, %29 : vector<16x16x2xf32>
    %31 = tpu.iota {dimensions = array<i32: 1>} : vector<16x16x2xi32>
    %c15_i32 = arith.constant 15 : i32
    %32 = tpu.dynamic_rotate %30 by %c15_i32 dim 1 : vector<16x16x2xf32>, i32 -> vector<16x16x2xf32>
    %c15_i32_14 = arith.constant 15 : i32
    %33 = vector.broadcast %c15_i32_14 : i32 to vector<16x16x2xi32>
    %34 = arith.cmpi slt, %31, %33 : vector<16x16x2xi32>
    %cst_15 = arith.constant -3.40282347E+38 : f32
    %35 = vector.broadcast %cst_15 : f32 to vector<16x16x2xf32>
    %36 = arith.select %34, %32, %35 : vector<16x16x2xi1>, vector<16x16x2xf32>
    %c1_i32 = arith.constant 1 : i32
    %37 = tpu.dynamic_rotate %30 by %c1_i32 dim 1 : vector<16x16x2xf32>, i32 -> vector<16x16x2xf32>
    %c1_i32_16 = arith.constant 1 : i32
    %38 = vector.broadcast %c1_i32_16 : i32 to vector<16x16x2xi32>
    %39 = arith.cmpi sge, %31, %38 : vector<16x16x2xi32>
    %cst_17 = arith.constant -3.40282347E+38 : f32
    %40 = vector.broadcast %cst_17 : f32 to vector<16x16x2xf32>
    %41 = arith.select %39, %37, %40 : vector<16x16x2xi1>, vector<16x16x2xf32>
    %42 = arith.maximumf %36, %41 : vector<16x16x2xf32>
    %43 = arith.maximumf %30, %42 : vector<16x16x2xf32>
    %c14_i32 = arith.constant 14 : i32
    %44 = tpu.dynamic_rotate %30 by %c14_i32 dim 1 : vector<16x16x2xf32>, i32 -> vector<16x16x2xf32>
    %c14_i32_18 = arith.constant 14 : i32
    %45 = vector.broadcast %c14_i32_18 : i32 to vector<16x16x2xi32>
    %46 = arith.cmpi slt, %31, %45 : vector<16x16x2xi32>
    %cst_19 = arith.constant -3.40282347E+38 : f32
    %47 = vector.broadcast %cst_19 : f32 to vector<16x16x2xf32>
    %48 = arith.select %46, %44, %47 : vector<16x16x2xi1>, vector<16x16x2xf32>
    %c2_i32 = arith.constant 2 : i32
    %49 = tpu.dynamic_rotate %30 by %c2_i32 dim 1 : vector<16x16x2xf32>, i32 -> vector<16x16x2xf32>
    %c2_i32_20 = arith.constant 2 : i32
    %50 = vector.broadcast %c2_i32_20 : i32 to vector<16x16x2xi32>
    %51 = arith.cmpi sge, %31, %50 : vector<16x16x2xi32>
    %cst_21 = arith.constant -3.40282347E+38 : f32
    %52 = vector.broadcast %cst_21 : f32 to vector<16x16x2xf32>
    %53 = arith.select %51, %49, %52 : vector<16x16x2xi1>, vector<16x16x2xf32>
    %54 = arith.maximumf %48, %53 : vector<16x16x2xf32>
    %55 = arith.maximumf %43, %54 : vector<16x16x2xf32>
    %56 = vector.shape_cast %55 : vector<16x16x2xf32> to vector<256x2xf32>
    %c1 = arith.constant 1 : index
    %c0_22 = arith.constant 0 : index
    %c0_23 = arith.constant 0 : index
    %57 = vector.load %arg4[%c1, %c0_22, %c0_23] : memref<4x2x4xf32, #tpu.memory_space<vmem>>, vector<1x2x4xf32>
    %58 = vector.shape_cast %57 : vector<1x2x4xf32> to vector<2x4xf32>
    %cst_24 = arith.constant dense<0.000000e+00> : vector<256x4xf32>
    %59 = tpu.matmul %56, %58, %cst_24 {dimension_numbers = #tpu.dot_dimension_numbers<[1], [0], [0], [1], [0, 0, 1, 1], [], []>} : vector<256x2xf32>, vector<2x4xf32>, vector<256x4xf32> -> vector<256x4xf32>
    %60 = arith.addf %19, %59 : vector<256x4xf32>
    %cst_25 = arith.constant -3.40282347E+38 : f32
    %61 = vector.broadcast %cst_25 : f32 to vector<2x16x2xf32>
    %62 = tpu.concatenate %61, %55, %61 in 0 : vector<2x16x2xf32>, vector<16x16x2xf32>, vector<2x16x2xf32> -> vector<20x16x2xf32>
    %63 = vector.extract_strided_slice %62 {offsets = [0, 0, 0], sizes = [16, 16, 2], strides = [1, 1, 1]} : vector<20x16x2xf32> to vector<16x16x2xf32>
    %64 = vector.extract_strided_slice %62 {offsets = [1, 0, 0], sizes = [16, 16, 2], strides = [1, 1, 1]} : vector<20x16x2xf32> to vector<16x16x2xf32>
    %65 = arith.maximumf %63, %64 : vector<16x16x2xf32>
    %66 = vector.extract_strided_slice %62 {offsets = [2, 0, 0], sizes = [16, 16, 2], strides = [1, 1, 1]} : vector<20x16x2xf32> to vector<16x16x2xf32>
    %67 = arith.maximumf %65, %66 : vector<16x16x2xf32>
    %68 = vector.extract_strided_slice %62 {offsets = [3, 0, 0], sizes = [16, 16, 2], strides = [1, 1, 1]} : vector<20x16x2xf32> to vector<16x16x2xf32>
    %69 = arith.maximumf %67, %68 : vector<16x16x2xf32>
    %70 = vector.extract_strided_slice %62 {offsets = [4, 0, 0], sizes = [16, 16, 2], strides = [1, 1, 1]} : vector<20x16x2xf32> to vector<16x16x2xf32>
    %71 = arith.maximumf %69, %70 : vector<16x16x2xf32>
    %72 = tpu.iota {dimensions = array<i32: 1>} : vector<16x16x2xi32>
    %c15_i32_26 = arith.constant 15 : i32
    %73 = tpu.dynamic_rotate %71 by %c15_i32_26 dim 1 : vector<16x16x2xf32>, i32 -> vector<16x16x2xf32>
    %c15_i32_27 = arith.constant 15 : i32
    %74 = vector.broadcast %c15_i32_27 : i32 to vector<16x16x2xi32>
    %75 = arith.cmpi slt, %72, %74 : vector<16x16x2xi32>
    %cst_28 = arith.constant -3.40282347E+38 : f32
    %76 = vector.broadcast %cst_28 : f32 to vector<16x16x2xf32>
    %77 = arith.select %75, %73, %76 : vector<16x16x2xi1>, vector<16x16x2xf32>
    %c1_i32_29 = arith.constant 1 : i32
    %78 = tpu.dynamic_rotate %71 by %c1_i32_29 dim 1 : vector<16x16x2xf32>, i32 -> vector<16x16x2xf32>
    %c1_i32_30 = arith.constant 1 : i32
    %79 = vector.broadcast %c1_i32_30 : i32 to vector<16x16x2xi32>
    %80 = arith.cmpi sge, %72, %79 : vector<16x16x2xi32>
    %cst_31 = arith.constant -3.40282347E+38 : f32
    %81 = vector.broadcast %cst_31 : f32 to vector<16x16x2xf32>
    %82 = arith.select %80, %78, %81 : vector<16x16x2xi1>, vector<16x16x2xf32>
    %83 = arith.maximumf %77, %82 : vector<16x16x2xf32>
    %84 = arith.maximumf %71, %83 : vector<16x16x2xf32>
    %c14_i32_32 = arith.constant 14 : i32
    %85 = tpu.dynamic_rotate %71 by %c14_i32_32 dim 1 : vector<16x16x2xf32>, i32 -> vector<16x16x2xf32>
    %c14_i32_33 = arith.constant 14 : i32
    %86 = vector.broadcast %c14_i32_33 : i32 to vector<16x16x2xi32>
    %87 = arith.cmpi slt, %72, %86 : vector<16x16x2xi32>
    %cst_34 = arith.constant -3.40282347E+38 : f32
    %88 = vector.broadcast %cst_34 : f32 to vector<16x16x2xf32>
    %89 = arith.select %87, %85, %88 : vector<16x16x2xi1>, vector<16x16x2xf32>
    %c2_i32_35 = arith.constant 2 : i32
    %90 = tpu.dynamic_rotate %71 by %c2_i32_35 dim 1 : vector<16x16x2xf32>, i32 -> vector<16x16x2xf32>
    %c2_i32_36 = arith.constant 2 : i32
    %91 = vector.broadcast %c2_i32_36 : i32 to vector<16x16x2xi32>
    %92 = arith.cmpi sge, %72, %91 : vector<16x16x2xi32>
    %cst_37 = arith.constant -3.40282347E+38 : f32
    %93 = vector.broadcast %cst_37 : f32 to vector<16x16x2xf32>
    %94 = arith.select %92, %90, %93 : vector<16x16x2xi1>, vector<16x16x2xf32>
    %95 = arith.maximumf %89, %94 : vector<16x16x2xf32>
    %96 = arith.maximumf %84, %95 : vector<16x16x2xf32>
    %97 = vector.shape_cast %96 : vector<16x16x2xf32> to vector<256x2xf32>
    %c2 = arith.constant 2 : index
    %c0_38 = arith.constant 0 : index
    %c0_39 = arith.constant 0 : index
    %98 = vector.load %arg4[%c2, %c0_38, %c0_39] : memref<4x2x4xf32, #tpu.memory_space<vmem>>, vector<1x2x4xf32>
    %99 = vector.shape_cast %98 : vector<1x2x4xf32> to vector<2x4xf32>
    %cst_40 = arith.constant dense<0.000000e+00> : vector<256x4xf32>
    %100 = tpu.matmul %97, %99, %cst_40 {dimension_numbers = #tpu.dot_dimension_numbers<[1], [0], [0], [1], [0, 0, 1, 1], [], []>} : vector<256x2xf32>, vector<2x4xf32>, vector<256x4xf32> -> vector<256x4xf32>
    %101 = arith.addf %60, %100 : vector<256x4xf32>
    %cst_41 = arith.constant -3.40282347E+38 : f32
    %102 = vector.broadcast %cst_41 : f32 to vector<2x16x2xf32>
    %103 = tpu.concatenate %102, %96, %102 in 0 : vector<2x16x2xf32>, vector<16x16x2xf32>, vector<2x16x2xf32> -> vector<20x16x2xf32>
    %104 = vector.extract_strided_slice %103 {offsets = [0, 0, 0], sizes = [16, 16, 2], strides = [1, 1, 1]} : vector<20x16x2xf32> to vector<16x16x2xf32>
    %105 = vector.extract_strided_slice %103 {offsets = [1, 0, 0], sizes = [16, 16, 2], strides = [1, 1, 1]} : vector<20x16x2xf32> to vector<16x16x2xf32>
    %106 = arith.maximumf %104, %105 : vector<16x16x2xf32>
    %107 = vector.extract_strided_slice %103 {offsets = [2, 0, 0], sizes = [16, 16, 2], strides = [1, 1, 1]} : vector<20x16x2xf32> to vector<16x16x2xf32>
    %108 = arith.maximumf %106, %107 : vector<16x16x2xf32>
    %109 = vector.extract_strided_slice %103 {offsets = [3, 0, 0], sizes = [16, 16, 2], strides = [1, 1, 1]} : vector<20x16x2xf32> to vector<16x16x2xf32>
    %110 = arith.maximumf %108, %109 : vector<16x16x2xf32>
    %111 = vector.extract_strided_slice %103 {offsets = [4, 0, 0], sizes = [16, 16, 2], strides = [1, 1, 1]} : vector<20x16x2xf32> to vector<16x16x2xf32>
    %112 = arith.maximumf %110, %111 : vector<16x16x2xf32>
    %113 = tpu.iota {dimensions = array<i32: 1>} : vector<16x16x2xi32>
    %c15_i32_42 = arith.constant 15 : i32
    %114 = tpu.dynamic_rotate %112 by %c15_i32_42 dim 1 : vector<16x16x2xf32>, i32 -> vector<16x16x2xf32>
    %c15_i32_43 = arith.constant 15 : i32
    %115 = vector.broadcast %c15_i32_43 : i32 to vector<16x16x2xi32>
    %116 = arith.cmpi slt, %113, %115 : vector<16x16x2xi32>
    %cst_44 = arith.constant -3.40282347E+38 : f32
    %117 = vector.broadcast %cst_44 : f32 to vector<16x16x2xf32>
    %118 = arith.select %116, %114, %117 : vector<16x16x2xi1>, vector<16x16x2xf32>
    %c1_i32_45 = arith.constant 1 : i32
    %119 = tpu.dynamic_rotate %112 by %c1_i32_45 dim 1 : vector<16x16x2xf32>, i32 -> vector<16x16x2xf32>
    %c1_i32_46 = arith.constant 1 : i32
    %120 = vector.broadcast %c1_i32_46 : i32 to vector<16x16x2xi32>
    %121 = arith.cmpi sge, %113, %120 : vector<16x16x2xi32>
    %cst_47 = arith.constant -3.40282347E+38 : f32
    %122 = vector.broadcast %cst_47 : f32 to vector<16x16x2xf32>
    %123 = arith.select %121, %119, %122 : vector<16x16x2xi1>, vector<16x16x2xf32>
    %124 = arith.maximumf %118, %123 : vector<16x16x2xf32>
    %125 = arith.maximumf %112, %124 : vector<16x16x2xf32>
    %c14_i32_48 = arith.constant 14 : i32
    %126 = tpu.dynamic_rotate %112 by %c14_i32_48 dim 1 : vector<16x16x2xf32>, i32 -> vector<16x16x2xf32>
    %c14_i32_49 = arith.constant 14 : i32
    %127 = vector.broadcast %c14_i32_49 : i32 to vector<16x16x2xi32>
    %128 = arith.cmpi slt, %113, %127 : vector<16x16x2xi32>
    %cst_50 = arith.constant -3.40282347E+38 : f32
    %129 = vector.broadcast %cst_50 : f32 to vector<16x16x2xf32>
    %130 = arith.select %128, %126, %129 : vector<16x16x2xi1>, vector<16x16x2xf32>
    %c2_i32_51 = arith.constant 2 : i32
    %131 = tpu.dynamic_rotate %112 by %c2_i32_51 dim 1 : vector<16x16x2xf32>, i32 -> vector<16x16x2xf32>
    %c2_i32_52 = arith.constant 2 : i32
    %132 = vector.broadcast %c2_i32_52 : i32 to vector<16x16x2xi32>
    %133 = arith.cmpi sge, %113, %132 : vector<16x16x2xi32>
    %cst_53 = arith.constant -3.40282347E+38 : f32
    %134 = vector.broadcast %cst_53 : f32 to vector<16x16x2xf32>
    %135 = arith.select %133, %131, %134 : vector<16x16x2xi1>, vector<16x16x2xf32>
    %136 = arith.maximumf %130, %135 : vector<16x16x2xf32>
    %137 = arith.maximumf %125, %136 : vector<16x16x2xf32>
    %138 = vector.shape_cast %137 : vector<16x16x2xf32> to vector<256x2xf32>
    %c3 = arith.constant 3 : index
    %c0_54 = arith.constant 0 : index
    %c0_55 = arith.constant 0 : index
    %139 = vector.load %arg4[%c3, %c0_54, %c0_55] : memref<4x2x4xf32, #tpu.memory_space<vmem>>, vector<1x2x4xf32>
    %140 = vector.shape_cast %139 : vector<1x2x4xf32> to vector<2x4xf32>
    %cst_56 = arith.constant dense<0.000000e+00> : vector<256x4xf32>
    %141 = tpu.matmul %138, %140, %cst_56 {dimension_numbers = #tpu.dot_dimension_numbers<[1], [0], [0], [1], [0, 0, 1, 1], [], []>} : vector<256x2xf32>, vector<2x4xf32>, vector<256x4xf32> -> vector<256x4xf32>
    %142 = arith.addf %101, %141 : vector<256x4xf32>
    %c0_57 = arith.constant 0 : index
    %c0_58 = arith.constant 0 : index
    %143 = vector.load %arg5[%c0_57, %c0_58] : memref<1x4xf32, #tpu.memory_space<vmem>>, vector<1x4xf32>
    %144 = vector.broadcast %143 : vector<1x4xf32> to vector<256x4xf32>
    %145 = arith.addf %142, %144 : vector<256x4xf32>
    %cst_59 = arith.constant 0.000000e+00 : f32
    %146 = vector.broadcast %cst_59 : f32 to vector<256x4xf32>
    %147 = arith.subf %146, %145 : vector<256x4xf32>
    %148 = math.exp %147 : vector<256x4xf32>
    %cst_60 = arith.constant 1.000000e+00 : f32
    %149 = vector.broadcast %cst_60 : f32 to vector<256x4xf32>
    %150 = arith.addf %149, %148 : vector<256x4xf32>
    %151 = tpu.reciprocal %150 {approx = true} : vector<256x4xf32> -> vector<256x4xf32>
    %152 = arith.mulf %145, %151 : vector<256x4xf32>
    %153 = vector.shape_cast %152 : vector<256x4xf32> to vector<1x16x16x4xf32>
    %c0_61 = arith.constant 0 : index
    %c0_62 = arith.constant 0 : index
    %c0_63 = arith.constant 0 : index
    %c0_64 = arith.constant 0 : index
    %154 = vector.load %arg6[%c0_61, %c0_62, %c0_63, %c0_64] : memref<1x16x16x4xf32, #tpu.memory_space<vmem>>, vector<1x16x16x4xf32>
    tpu.vector_store %arg6[%c0_61, %c0_62, %c0_63, %c0_64], %153 {strides = array<i32>} : memref<1x16x16x4xf32, #tpu.memory_space<vmem>>, vector<1x16x16x4xf32>,
    return
  }
  func.func @transform_0(%arg0: i32) -> (i32, i32, i32, i32) {
    %c0_i32 = arith.constant 0 : i32
    %c0_i32_0 = arith.constant 0 : i32
    %c0_i32_1 = arith.constant 0 : i32
    %c0_i32_2 = arith.constant 0 : i32
    return %arg0, %c0_i32, %c0_i32_0, %c0_i32_1 : i32, i32, i32, i32
  }
  func.func @transform_1(%arg0: i32) -> (i32, i32) {
    %c0_i32 = arith.constant 0 : i32
    %c0_i32_0 = arith.constant 0 : i32
    %c0_i32_1 = arith.constant 0 : i32
    return %c0_i32, %c0_i32_0 : i32, i32
  }
  func.func @transform_2(%arg0: i32) -> (i32, i32) {
    %c0_i32 = arith.constant 0 : i32
    %c0_i32_0 = arith.constant 0 : i32
    %c0_i32_1 = arith.constant 0 : i32
    return %c0_i32, %c0_i32_0 : i32, i32
  }
  func.func @transform_3(%arg0: i32) -> (i32, i32, i32) {
    %c0_i32 = arith.constant 0 : i32
    %c0_i32_0 = arith.constant 0 : i32
    %c0_i32_1 = arith.constant 0 : i32
    %c0_i32_2 = arith.constant 0 : i32
    return %c0_i32, %c0_i32_0, %c0_i32_1 : i32, i32, i32
  }
  func.func @transform_4(%arg0: i32) -> (i32, i32) {
    %c0_i32 = arith.constant 0 : i32
    %c0_i32_0 = arith.constant 0 : i32
    %c0_i32_1 = arith.constant 0 : i32
    return %c0_i32, %c0_i32_0 : i32, i32
  }
  func.func @transform_5(%arg0: i32) -> (i32, i32, i32, i32) {
    %c0_i32 = arith.constant 0 : i32
    %c0_i32_0 = arith.constant 0 : i32
    %c0_i32_1 = arith.constant 0 : i32
    %c0_i32_2 = arith.constant 0 : i32
    return %arg0, %c0_i32, %c0_i32_0, %c0_i32_1 : i32, i32, i32, i32
  }
}

</mosaic_0001>

<llo_original>
// kernel: sppf_forward_nhwc.1
$region0: #{sppf_forward_nhwc.1}
  #allocation0 [shape = 'u32[]', space=smem, size = 0x4, offset = 0x4, fixed_abs, tag = 'smem constant byte address 0x4 - core index']
  #allocation1 [shape = 'u32[144,128]{1,0:T(1,128)}', space=vmem, size = 0x12000, scoped, tag = 'internal scratch']
  %s0 = inlined_call_operand.vmem [shape: f32[2,16,16,4], index: 0, kind: input, shape index: {}]
  %s1 = inlined_call_operand.vmem [shape: f32[4,2], index: 1, kind: input, shape index: {}]
  %s2 = inlined_call_operand.vmem [shape: f32[1,2], index: 2, kind: input, shape index: {}]
  %s3 = inlined_call_operand.vmem [shape: f32[4,2,4], index: 3, kind: input, shape index: {}]
  %s4 = inlined_call_operand.vmem [shape: f32[1,4], index: 4, kind: input, shape index: {}]
  %s5 = inlined_call_operand.vmem [shape: f32[2,16,16,4], index: 5, kind: output, shape index: {}]
  %s6 = sld [smem:[#allocation0]]
  $region53: #{sppf_forward_nhwc.1} parent=0
    _
  %s8 = ssub.s32 1, %s6
  %s9 = scalar_select 0, %s8, %s6
  loop: start=0, step=1, limit=4
  $region2: #{sppf_forward_nhwc.1} parent=0 // loop_pre_header
    _
  $region3: #{sppf_forward_nhwc.1} parent=0 // loop_header
    %s11 = sphi 0, %s15
    %p12 = scmp.ge.s32.totalorder %s11, 4
    %s21 = sphi 0, %s23
    %s24 = sphi 0, %s21
    %s25 = sphi 0, %s24
    %s41 = sphi 0, %s25
    %s45 = sphi 0, %s45
    %s47 = sphi 0, %s45
    %s48 = sphi 0, %s47
    %s62 = sphi 0, %s48
    %s66 = sphi 0, %s66
    %s68 = sphi 0, %s66
    %s69 = sphi 0, %s68
    %s83 = sphi 0, %s69
    %s87 = sphi 0, %s87
    %s89 = sphi 0, %s87
    %s90 = sphi 0, %s89
    %s104 = sphi 0, %s90
    %s108 = sphi 0, %s108
    %s110 = sphi 0, %s108
    %s111 = sphi 0, %s110
    %s125 = sphi 0, %s111
    %s131 = sphi 0, %s133
    %s134 = sphi 0, %s131
    %s135 = sphi 0, %s134
    %s151 = sphi 0, %s135
  $region4: #{sppf_forward_nhwc.1} parent=0 // loop_header_branch
    %14 = sbr.rel (%p12) target = $region8
  $region5: #{sppf_forward_nhwc.1} parent=0 // loop_body
    %s16 = ssub.s32 %s11, 1
    %s17 = ssub.s32 %s11, 2
    %s18 = sadd.s32 %s11, 1
    %s19 = ssub.s32 %s11, %s18
    %p20 = scmp.eq.s32.totalorder %s19, 0
    %s22 = sadd.s32 %s21, 1
    %s23 = scalar_select %p20, %s21, %s22
    %p26 = pneg %p20
    %p27 = scmp.eq.s32.totalorder %s11, 1
    %p28 = por %p26, %p27
    %p29 = scmp.ne.s32.totalorder %s21, %s24
    %p30 = scmp.eq.s32.totalorder %s11, 0
    %p31 = por %p29, %p30
    %p32 = scmp.ne.s32.totalorder %s21, %s24
    %p33 = scmp.eq.s32.totalorder %s16, 1
    %p34 = por %p32, %p33
    %p35 = scmp.ne.s32.totalorder %s24, %s25
    %p36 = scmp.eq.s32.totalorder %s16, 0
    %p37 = por %p35, %p36
    %p38 = scmp.ne.s32.totalorder %s24, %s25
    %p39 = scmp.eq.s32.totalorder %s17, 1
    %p40 = por %p38, %p39
    %p42 = scmp.ne.s32.totalorder %s25, %s41
    %p43 = scmp.eq.s32.totalorder %s17, 0
    %p44 = por %p42, %p43
    %s46 = sadd.s32 %s45, 1
    %p49 = scmp.eq.s32.totalorder %s11, 1
    %p50 = scmp.ne.s32.totalorder %s45, %s47
    %p51 = scmp.eq.s32.totalorder %s11, 0
    %p52 = por %p50, %p51
    %p53 = scmp.ne.s32.totalorder %s45, %s47
    %p54 = scmp.eq.s32.totalorder %s16, 1
    %p55 = por %p53, %p54
    %p56 = scmp.ne.s32.totalorder %s47, %s48
    %p57 = scmp.eq.s32.totalorder %s16, 0
    %p58 = por %p56, %p57
    %p59 = scmp.ne.s32.totalorder %s47, %s48
    %p60 = scmp.eq.s32.totalorder %s17, 1
    %p61 = por %p59, %p60
    %p63 = scmp.ne.s32.totalorder %s48, %s62
    %p64 = scmp.eq.s32.totalorder %s17, 0
    %p65 = por %p63, %p64
    %s67 = sadd.s32 %s66, 1
    %p70 = scmp.eq.s32.totalorder %s11, 1
    %p71 = scmp.ne.s32.totalorder %s66, %s68
    %p72 = scmp.eq.s32.totalorder %s11, 0
    %p73 = por %p71, %p72
    %p74 = scmp.ne.s32.totalorder %s66, %s68
    %p75 = scmp.eq.s32.totalorder %s16, 1
    %p76 = por %p74, %p75
    %p77 = scmp.ne.s32.totalorder %s68, %s69
    %p78 = scmp.eq.s32.totalorder %s16, 0
    %p79 = por %p77, %p78
    %p80 = scmp.ne.s32.totalorder %s68, %s69
    %p81 = scmp.eq.s32.totalorder %s17, 1
    %p82 = por %p80, %p81
    %p84 = scmp.ne.s32.totalorder %s69, %s83
    %p85 = scmp.eq.s32.totalorder %s17, 0
    %p86 = por %p84, %p85
    %s88 = sadd.s32 %s87, 1
    %p91 = scmp.eq.s32.totalorder %s11, 1
    %p92 = scmp.ne.s32.totalorder %s87, %s89
    %p93 = scmp.eq.s32.totalorder %s11, 0
    %p94 = por %p92, %p93
    %p95 = scmp.ne.s32.totalorder %s87, %s89
    %p96 = scmp.eq.s32.totalorder %s16, 1
    %p97 = por %p95, %p96
    %p98 = scmp.ne.s32.totalorder %s89, %s90
    %p99 = scmp.eq.s32.totalorder %s16, 0
    %p100 = por %p98, %p99
    %p101 = scmp.ne.s32.totalorder %s89, %s90
    %p102 = scmp.eq.s32.totalorder %s17, 1
    %p103 = por %p101, %p102
    %p105 = scmp.ne.s32.totalorder %s90, %s104
    %p106 = scmp.eq.s32.totalorder %s17, 0
    %p107 = por %p105, %p106
    %s109 = sadd.s32 %s108, 1
    %p112 = scmp.eq.s32.totalorder %s11, 1
    %p113 = scmp.ne.s32.totalorder %s108, %s110
    %p114 = scmp.eq.s32.totalorder %s11, 0
    %p115 = por %p113, %p114
    %p116 = scmp.ne.s32.totalorder %s108, %s110
    %p117 = scmp.eq.s32.totalorder %s16, 1
    %p118 = por %p116, %p117
    %p119 = scmp.ne.s32.totalorder %s110, %s111
    %p120 = scmp.eq.s32.totalorder %s16, 0
    %p121 = por %p119, %p120
    %p122 = scmp.ne.s32.totalorder %s110, %s111
    %p123 = scmp.eq.s32.totalorder %s17, 1
    %p124 = por %p122, %p123
    %p126 = scmp.ne.s32.totalorder %s111, %s125
    %p127 = scmp.eq.s32.totalorder %s17, 0
    %p128 = por %p126, %p127
    %s129 = ssub.s32 %s11, %s18
    %p130 = scmp.eq.s32.totalorder %s129, 0
    %s132 = sadd.s32 %s131, 1
    %s133 = scalar_select %p130, %s131, %s132
    %p136 = pneg %p130
    %p137 = scmp.eq.s32.totalorder %s11, 1
    %p138 = por %p136, %p137
    %p139 = scmp.ne.s32.totalorder %s131, %s134
    %p140 = scmp.eq.s32.totalorder %s11, 0
    %p141 = por %p139, %p140
    %p142 = scmp.ne.s32.totalorder %s131, %s134
    %p143 = scmp.eq.s32.totalorder %s16, 1
    %p144 = por %p142, %p143
    %p145 = scmp.ne.s32.totalorder %s134, %s135
    %p146 = scmp.eq.s32.totalorder %s16, 0
    %p147 = por %p145, %p146
    %p148 = scmp.ne.s32.totalorder %s134, %s135
    %p149 = scmp.eq.s32.totalorder %s17, 1
    %p150 = por %p148, %p149
    %p152 = scmp.ne.s32.totalorder %s135, %s151
    %p153 = scmp.eq.s32.totalorder %s17, 0
    %p154 = por %p152, %p153
    %p155 = scmp.le.s32.totalorder 1, %s11
    %p156 = scmp.lt.s32.totalorder %s11, 3
    %p157 = pnand %p155, %p156
    %p158 = pneg %p157
    // Predicated region
    $region9: #{sppf_forward_nhwc.1} parent=5 // pred_check
      _
    $region10: #{sppf_forward_nhwc.1} parent=5 // pred_check_branch
      %160 = sbr.rel (%p157) target = $region12
    $region11: #{sppf_forward_nhwc.1} parent=5 // pred_region
      %s161 = ssub.s32 %s11, 1
      // Predicated region
      $region13: #{sppf_forward_nhwc.1} parent=11 // pred_check
        %p162 = pneg %p58
      $region14: #{sppf_forward_nhwc.1} parent=11 // pred_check_branch
        %164 = sbr.rel (%p162) target = $region16
      $region15: #{sppf_forward_nhwc.1} parent=11 // pred_region
        _
      $region16: #{sppf_forward_nhwc.1} parent=11 // pred_fallthru
        _
      // Predicated region
      $region17: #{sppf_forward_nhwc.1} parent=11 // pred_check
        %p165 = pneg %p79
      $region18: #{sppf_forward_nhwc.1} parent=11 // pred_check_branch
        %167 = sbr.rel (%p165) target = $region20
      $region19: #{sppf_forward_nhwc.1} parent=11 // pred_region
        _
      $region20: #{sppf_forward_nhwc.1} parent=11 // pred_fallthru
        _
      // Predicated region
      $region21: #{sppf_forward_nhwc.1} parent=11 // pred_check
        %p168 = pneg %p100
      $region22: #{sppf_forward_nhwc.1} parent=11 // pred_check_branch
        %170 = sbr.rel (%p168) target = $region24
      $region23: #{sppf_forward_nhwc.1} parent=11 // pred_region
        _
      $region24: #{sppf_forward_nhwc.1} parent=11 // pred_fallthru
        _
      // Predicated region
      $region25: #{sppf_forward_nhwc.1} parent=11 // pred_check
        %p171 = pneg %p121
      $region26: #{sppf_forward_nhwc.1} parent=11 // pred_check_branch
        %173 = sbr.rel (%p171) target = $region28
      $region27: #{sppf_forward_nhwc.1} parent=11 // pred_region
        _
      $region28: #{sppf_forward_nhwc.1} parent=11 // pred_fallthru
        _
    $region12: #{sppf_forward_nhwc.1} parent=5 // pred_fallthru
      _
    %p174 = scmp.lt.s32.totalorder %s11, 2
    // Predicated region
    $region29: #{sppf_forward_nhwc.1} parent=5 // pred_check
      %p175 = pneg %p174
    $region30: #{sppf_forward_nhwc.1} parent=5 // pred_check_branch
      %177 = sbr.rel (%p175) target = $region32
    $region31: #{sppf_forward_nhwc.1} parent=5 // pred_region
      // Predicated region
      $region33: #{sppf_forward_nhwc.1} parent=31 // pred_check
        %p178 = pneg %p31
      $region34: #{sppf_forward_nhwc.1} parent=31 // pred_check_branch
        %180 = sbr.rel (%p178) target = $region36
      $region35: #{sppf_forward_nhwc.1} parent=31 // pred_region
        %p181 = scmp.lt.s32.totalorder %s11, 1
        %s182 = scalar_select %p181, %s11, 1
        %s183 = smul.addr %s182, 32
        %s184 = smul.addr %s183, 8
        %s185 = scalar_lea.vmem %s0, %s184
      $region36: #{sppf_forward_nhwc.1} parent=31 // pred_fallthru
        _
    $region32: #{sppf_forward_nhwc.1} parent=5 // pred_fallthru
      _
    %p186 = scmp.le.s32.totalorder 1, %s11
    %p187 = scmp.lt.s32.totalorder %s11, 3
    %p188 = pnand %p186, %p187
    %p189 = pneg %p188
    // Predicated region
    $region37: #{sppf_forward_nhwc.1} parent=5 // pred_check
      _
    $region38: #{sppf_forward_nhwc.1} parent=5 // pred_check_branch
      %191 = sbr.rel (%p188) target = $region40
    $region39: #{sppf_forward_nhwc.1} parent=5 // pred_region
      %s192 = ssub.s32 %s11, 1
      %p193 = scmp.lt.s32.totalorder %s16, 1
      %s194 = scalar_select %p193, %s16, 1
      %s195 = smul.addr %s194, 32
      %s196 = smul.addr %s195, 8
      %s197 = scalar_lea.vmem %s0, %s196
      %p198 = pneg %p37
      %p199 = pneg %p34
      %p200 = pneg %p58
      %p201 = pneg %p55
      %p202 = pneg %p79
      %p203 = pneg %p76
      %p204 = pneg %p100
      %p205 = pneg %p97
      %p206 = pneg %p121
      %p207 = pneg %p118
      %p208 = pneg %p147
      %p209 = pneg %p144
      %p210 = scmp.lt.s32.totalorder %s16, 1
      %s211 = scalar_select %p210, %s16, 1
      %s212 = smul.addr %s211, 32
      %s213 = smul.addr %s212, 8
      %s214 = scalar_lea.vmem %s5, %s213
      %p215 = scmp.lt.s32.totalorder %s16, 1
      %s216 = scalar_select %p215, %s16, 1
      %s217 = smul.addr %s216, 32
      %s218 = smul.addr %s217, 8
      %s219 = scalar_lea.vmem %s0, %s218
      %p220 = scmp.lt.s32.totalorder %s16, 1
      %s221 = scalar_select %p220, %s16, 1
      %s222 = smul.addr %s221, 32
      %s223 = smul.addr %s222, 8
      %s224 = scalar_lea.vmem %s5, %s223
      %v225 = vld [vmem:[%s219] sm:$0xff]
      %v226 = vld [vmem:[%s219 + $0x8] sm:$0xff]
      %v227 = vld [vmem:[%s219 + $0x10] sm:$0xff]
      %v228 = vld [vmem:[%s219 + $0x18] sm:$0xff]
      %v229 = vld [vmem:[%s219 + $0x20] sm:$0xff]
      %v230 = vld [vmem:[%s219 + $0x28] sm:$0xff]
      %v231 = vld [vmem:[%s219 + $0x30] sm:$0xff]
      %v232 = vld [vmem:[%s219 + $0x38] sm:$0xff]
      %v233 = vld [vmem:[%s219 + $0x40] sm:$0xff]
      %v234 = vld [vmem:[%s219 + $0x48] sm:$0xff]
      %v235 = vld [vmem:[%s219 + $0x50] sm:$0xff]
      %v236 = vld [vmem:[%s219 + $0x58] sm:$0xff]
      %v237 = vld [vmem:[%s219 + $0x60] sm:$0xff]
      %v238 = vld [vmem:[%s219 + $0x68] sm:$0xff]
      %v239 = vld [vmem:[%s219 + $0x70] sm:$0xff]
      %v240 = vld [vmem:[%s219 + $0x78] sm:$0xff]
      %v241 = vld [vmem:[%s219 + $0x80] sm:$0xff]
      %v242 = vld [vmem:[%s219 + $0x88] sm:$0xff]
      %v243 = vld [vmem:[%s219 + $0x90] sm:$0xff]
      %v244 = vld [vmem:[%s219 + $0x98] sm:$0xff]
      %v245 = vld [vmem:[%s219 + $0xa0] sm:$0xff]
      %v246 = vld [vmem:[%s219 + $0xa8] sm:$0xff]
      %v247 = vld [vmem:[%s219 + $0xb0] sm:$0xff]
      %v248 = vld [vmem:[%s219 + $0xb8] sm:$0xff]
      %v249 = vld [vmem:[%s219 + $0xc0] sm:$0xff]
      %v250 = vld [vmem:[%s219 + $0xc8] sm:$0xff]
      %v251 = vld [vmem:[%s219 + $0xd0] sm:$0xff]
      %v252 = vld [vmem:[%s219 + $0xd8] sm:$0xff]
      %v253 = vld [vmem:[%s219 + $0xe0] sm:$0xff]
      %v254 = vld [vmem:[%s219 + $0xe8] sm:$0xff]
      %v255 = vld [vmem:[%s219 + $0xf0] sm:$0xff]
      %v256 = vld [vmem:[%s219 + $0xf8] sm:$0xff]
      %v257 = vld [vmem:[%s1] sm:$0xf]
      %v258 = vld [vmem:[%s2] sm:$0x1]
      %v260 = vlaneseq
      %v261 = vshrl.u32 %v260, 7
      %v262 = vsub.s32 0, %v261
      %v263 = vrot.slane %v258, %v262
      %vm265 = vcmask 31744
      %v267 = vsel %vm265, %v225, 0
      %v270 = vsel %vm265, %v226, 0
      %v273 = vsel %vm265, %v227, 0
      %v276 = vsel %vm265, %v228, 0
      %v279 = vsel %vm265, %v229, 0
      %v282 = vsel %vm265, %v230, 0
      %v285 = vsel %vm265, %v231, 0
      %v288 = vsel %vm265, %v232, 0
      %v291 = vsel %vm265, %v233, 0
      %v294 = vsel %vm265, %v234, 0
      %v297 = vsel %vm265, %v235, 0
      %v300 = vsel %vm265, %v236, 0
      %v303 = vsel %vm265, %v237, 0
      %v306 = vsel %vm265, %v238, 0
      %v309 = vsel %vm265, %v239, 0
      %v312 = vsel %vm265, %v240, 0
      %v315 = vsel %vm265, %v241, 0
      %v318 = vsel %vm265, %v242, 0
      %v321 = vsel %vm265, %v243, 0
      %v324 = vsel %vm265, %v244, 0
      %v327 = vsel %vm265, %v245, 0
      %v330 = vsel %vm265, %v246, 0
      %v333 = vsel %vm265, %v247, 0
      %v336 = vsel %vm265, %v248, 0
      %v339 = vsel %vm265, %v249, 0
      %v342 = vsel %vm265, %v250, 0
      %v345 = vsel %vm265, %v251, 0
      %v348 = vsel %vm265, %v252, 0
      %v351 = vsel %vm265, %v253, 0
      %v354 = vsel %vm265, %v254, 0
      %v357 = vsel %vm265, %v255, 0
      %v360 = vsel %vm265, %v256, 0
      %vm362 = vcmask 1043456
      %v364 = vsel %vm362, %v257, 0
      %366 = vmatprep.subr.mxu0 0.0
      %367 = vmatpush1.msra.mxu0 %v364
      %368 = vmatprep.subr.mxu0 0.0
      %369 = vmatpush1.msra.mxu0 0.0
      %370 = vmatprep.subr.mxu0 0.0
      %371 = vmatpush1.msra.mxu0 0.0
      %372 = vmatprep.subr.mxu0 0.0
      %373 = vmatpush1.msra.mxu0 0.0
      %374 = vmatprep.subr.mxu0 0.0
      %375 = vmatpush1.msra.mxu0 0.0
      %376 = vmatprep.subr.mxu0 0.0
      %377 = vmatpush1.msra.mxu0 0.0
      %378 = vmatprep.subr.mxu0 0.0
      %379 = vmatpush1.msra.mxu0 0.0
      %380 = vmatprep.subr.mxu0 0.0
      %381 = vmatpush1.msra.mxu0 0.0
      %382 = vmatprep.subr.mxu0 0.0
      %383 = vmatpush1.msra.mxu0 0.0
      %384 = vmatprep.subr.mxu0 0.0
      %385 = vmatpush1.msra.mxu0 0.0
      %386 = vmatprep.subr.mxu0 0.0
      %387 = vmatpush1.msra.mxu0 0.0
      %388 = vmatprep.subr.mxu0 0.0
      %389 = vmatpush1.msra.mxu0 0.0
      %390 = vmatprep.subr.mxu0 0.0
      %391 = vmatpush1.msra.mxu0 0.0
      %392 = vmatprep.subr.mxu0 0.0
      %393 = vmatpush1.msra.mxu0 0.0
      %394 = vmatprep.subr.mxu0 0.0
      %395 = vmatpush1.msra.mxu0 0.0
      %396 = vmatprep.subr.mxu0 0.0
      %397 = vmatpush1.msra.mxu0 0.0
      %398 = vmatprep.subr.mxu0 0.0
      %399 = vmatpush1.msra.mxu0 0.0
      %400 = vmatprep.subr.mxu0 0.0
      %401 = vmatpush1.msra.mxu0 0.0
      %402 = vmatprep.subr.mxu0 0.0
      %403 = vmatpush1.msra.mxu0 0.0
      %404 = vmatprep.subr.mxu0 0.0
      %405 = vmatpush1.msra.mxu0 0.0
      %406 = vmatprep.subr.mxu0 0.0
      %407 = vmatpush1.msra.mxu0 0.0
      %408 = vmatprep.subr.mxu0 0.0
      %409 = vmatpush1.msra.mxu0 0.0
      %410 = vmatprep.subr.mxu0 0.0
      %411 = vmatpush1.msra.mxu0 0.0
      %412 = vmatprep.subr.mxu0 0.0
      %413 = vmatpush1.msra.mxu0 0.0
      %414 = vmatprep.subr.mxu0 0.0
      %415 = vmatpush1.msra.mxu0 0.0
      %416 = vmatprep.subr.mxu0 0.0
      %417 = vmatpush1.msra.mxu0 0.0
      %418 = vmatprep.subr.mxu0 0.0
      %419 = vmatpush1.msra.mxu0 0.0
      %420 = vmatprep.subr.mxu0 0.0
      %421 = vmatpush1.msra.mxu0 0.0
      %422 = vmatprep.subr.mxu0 0.0
      %423 = vmatpush1.msra.mxu0 0.0
      %424 = vmatprep.subr.mxu0 0.0
      %425 = vmatpush1.msra.mxu0 0.0
      %426 = vmatprep.subr.mxu0 0.0
      %427 = vmatpush1.msra.mxu0 0.0
      %428 = vmatprep.subr.mxu0 0.0
      %429 = vmatpush1.msra.mxu0 0.0
      %430 = vmatprep.mubr.f32.mxu0 0.0
      %431 = vmatmul.mubr.f32.gmra.mrb[0].mxu0 %v267
      %v432 = vpop.f32.mrb[0].mxu0
      %v433 = vadd.f32 %v263, %v432
      %v434 = vpop.f32.mrb[0].mxu0
      %435 = vmatprep.mubr.f32.mxu0 0.0
      %436 = vmatmul.mubr.f32.gmra.mrb[0].mxu0 %v270
      %v437 = vpop.f32.mrb[0].mxu0
      %v438 = vadd.f32 %v263, %v437
      %v439 = vpop.f32.mrb[0].mxu0
      %440 = vmatprep.mubr.f32.mxu0 0.0
      %441 = vmatmul.mubr.f32.gmra.mrb[0].mxu0 %v273
      %v442 = vpop.f32.mrb[0].mxu0
      %v443 = vadd.f32 %v263, %v442
      %v444 = vpop.f32.mrb[0].mxu0
      %445 = vmatprep.mubr.f32.mxu0 0.0
      %446 = vmatmul.mubr.f32.gmra.mrb[0].mxu0 %v276
      %v447 = vpop.f32.mrb[0].mxu0
      %v448 = vadd.f32 %v263, %v447
      %v449 = vpop.f32.mrb[0].mxu0
      %450 = vmatprep.mubr.f32.mxu0 0.0
      %451 = vmatmul.mubr.f32.gmra.mrb[0].mxu0 %v279
      %v452 = vpop.f32.mrb[0].mxu0
      %v453 = vadd.f32 %v263, %v452
      %v454 = vpop.f32.mrb[0].mxu0
      %455 = vmatprep.mubr.f32.mxu0 0.0
      %456 = vmatmul.mubr.f32.gmra.mrb[0].mxu0 %v282
      %v457 = vpop.f32.mrb[0].mxu0
      %v458 = vadd.f32 %v263, %v457
      %v459 = vpop.f32.mrb[0].mxu0
      %460 = vmatprep.mubr.f32.mxu0 0.0
      %461 = vmatmul.mubr.f32.gmra.mrb[0].mxu0 %v285
      %v462 = vpop.f32.mrb[0].mxu0
      %v463 = vadd.f32 %v263, %v462
      %v464 = vpop.f32.mrb[0].mxu0
      %465 = vmatprep.mubr.f32.mxu0 0.0
      %466 = vmatmul.mubr.f32.gmra.mrb[0].mxu0 %v288
      %v467 = vpop.f32.mrb[0].mxu0
      %v468 = vadd.f32 %v263, %v467
      %v469 = vpop.f32.mrb[0].mxu0
      %470 = vmatprep.mubr.f32.mxu0 0.0
      %471 = vmatmul.mubr.f32.gmra.mrb[0].mxu0 %v291
      %v472 = vpop.f32.mrb[0].mxu0
      %v473 = vadd.f32 %v263, %v472
      %v474 = vpop.f32.mrb[0].mxu0
      %475 = vmatprep.mubr.f32.mxu0 0.0
      %476 = vmatmul.mubr.f32.gmra.mrb[0].mxu0 %v294
      %v477 = vpop.f32.mrb[0].mxu0
      %v478 = vadd.f32 %v263, %v477
      %v479 = vpop.f32.mrb[0].mxu0
      %480 = vmatprep.mubr.f32.mxu0 0.0
      %481 = vmatmul.mubr.f32.gmra.mrb[0].mxu0 %v297
      %v482 = vpop.f32.mrb[0].mxu0
      %v483 = vadd.f32 %v263, %v482
      %v484 = vpop.f32.mrb[0].mxu0
      %485 = vmatprep.mubr.f32.mxu0 0.0
      %486 = vmatmul.mubr.f32.gmra.mrb[0].mxu0 %v300
      %v487 = vpop.f32.mrb[0].mxu0
      %v488 = vadd.f32 %v263, %v487
      %v489 = vpop.f32.mrb[0].mxu0
      %490 = vmatprep.mubr.f32.mxu0 0.0
      %491 = vmatmul.mubr.f32.gmra.mrb[0].mxu0 %v303
      %v492 = vpop.f32.mrb[0].mxu0
      %v493 = vadd.f32 %v263, %v492
      %v494 = vpop.f32.mrb[0].mxu0
      %495 = vmatprep.mubr.f32.mxu0 0.0
      %496 = vmatmul.mubr.f32.gmra.mrb[0].mxu0 %v306
      %v497 = vpop.f32.mrb[0].mxu0
      %v498 = vadd.f32 %v263, %v497
      %v499 = vpop.f32.mrb[0].mxu0
      %500 = vmatprep.mubr.f32.mxu0 0.0
      %501 = vmatmul.mubr.f32.gmra.mrb[0].mxu0 %v309
      %v502 = vpop.f32.mrb[0].mxu0
      %v503 = vadd.f32 %v263, %v502
      %v504 = vpop.f32.mrb[0].mxu0
      %505 = vmatprep.mubr.f32.mxu0 0.0
      %506 = vmatmul.mubr.f32.gmra.mrb[0].mxu0 %v312
      %v507 = vpop.f32.mrb[0].mxu0
      %v508 = vadd.f32 %v263, %v507
      %v509 = vpop.f32.mrb[0].mxu0
      %510 = vmatprep.mubr.f32.mxu0 0.0
      %511 = vmatmul.mubr.f32.gmra.mrb[0].mxu0 %v315
      %v512 = vpop.f32.mrb[0].mxu0
      %v513 = vadd.f32 %v263, %v512
      %v514 = vpop.f32.mrb[0].mxu0
      %515 = vmatprep.mubr.f32.mxu0 0.0
      %516 = vmatmul.mubr.f32.gmra.mrb[0].mxu0 %v318
      %v517 = vpop.f32.mrb[0].mxu0
      %v518 = vadd.f32 %v263, %v517
      %v519 = vpop.f32.mrb[0].mxu0
      %520 = vmatprep.mubr.f32.mxu0 0.0
      %521 = vmatmul.mubr.f32.gmra.mrb[0].mxu0 %v321
      %v522 = vpop.f32.mrb[0].mxu0
      %v523 = vadd.f32 %v263, %v522
      %v524 = vpop.f32.mrb[0].mxu0
      %525 = vmatprep.mubr.f32.mxu0 0.0
      %526 = vmatmul.mubr.f32.gmra.mrb[0].mxu0 %v324
      %v527 = vpop.f32.mrb[0].mxu0
      %v528 = vadd.f32 %v263, %v527
      %v529 = vpop.f32.mrb[0].mxu0
      %530 = vmatprep.mubr.f32.mxu0 0.0
      %531 = vmatmul.mubr.f32.gmra.mrb[0].mxu0 %v327
      %v532 = vpop.f32.mrb[0].mxu0
      %v533 = vadd.f32 %v263, %v532
      %v534 = vpop.f32.mrb[0].mxu0
      %535 = vmatprep.mubr.f32.mxu0 0.0
      %536 = vmatmul.mubr.f32.gmra.mrb[0].mxu0 %v330
      %v537 = vpop.f32.mrb[0].mxu0
      %v538 = vadd.f32 %v263, %v537
      %v539 = vpop.f32.mrb[0].mxu0
      %540 = vmatprep.mubr.f32.mxu0 0.0
      %541 = vmatmul.mubr.f32.gmra.mrb[0].mxu0 %v333
      %v542 = vpop.f32.mrb[0].mxu0
      %v543 = vadd.f32 %v263, %v542
      %v544 = vpop.f32.mrb[0].mxu0
      %545 = vmatprep.mubr.f32.mxu0 0.0
      %546 = vmatmul.mubr.f32.gmra.mrb[0].mxu0 %v336
      %v547 = vpop.f32.mrb[0].mxu0
      %v548 = vadd.f32 %v263, %v547
      %v549 = vpop.f32.mrb[0].mxu0
      %550 = vmatprep.mubr.f32.mxu0 0.0
      %551 = vmatmul.mubr.f32.gmra.mrb[0].mxu0 %v339
      %v552 = vpop.f32.mrb[0].mxu0
      %v553 = vadd.f32 %v263, %v552
      %v554 = vpop.f32.mrb[0].mxu0
      %555 = vmatprep.mubr.f32.mxu0 0.0
      %556 = vmatmul.mubr.f32.gmra.mrb[0].mxu0 %v342
      %v557 = vpop.f32.mrb[0].mxu0
      %v558 = vadd.f32 %v263, %v557
      %v559 = vpop.f32.mrb[0].mxu0
      %560 = vmatprep.mubr.f32.mxu0 0.0
      %561 = vmatmul.mubr.f32.gmra.mrb[0].mxu0 %v345
      %v562 = vpop.f32.mrb[0].mxu0
      %v563 = vadd.f32 %v263, %v562
      %v564 = vpop.f32.mrb[0].mxu0
      %565 = vmatprep.mubr.f32.mxu0 0.0
      %566 = vmatmul.mubr.f32.gmra.mrb[0].mxu0 %v348
      %v567 = vpop.f32.mrb[0].mxu0
      %v568 = vadd.f32 %v263, %v567
      %v569 = vpop.f32.mrb[0].mxu0
      %570 = vmatprep.mubr.f32.mxu0 0.0
      %571 = vmatmul.mubr.f32.gmra.mrb[0].mxu0 %v351
      %v572 = vpop.f32.mrb[0].mxu0
      %v573 = vadd.f32 %v263, %v572
      %v574 = vpop.f32.mrb[0].mxu0
      %575 = vmatprep.mubr.f32.mxu0 0.0
      %576 = vmatmul.mubr.f32.gmra.mrb[0].mxu0 %v354
      %v577 = vpop.f32.mrb[0].mxu0
      %v578 = vadd.f32 %v263, %v577
      %v579 = vpop.f32.mrb[0].mxu0
      %580 = vmatprep.mubr.f32.mxu0 0.0
      %581 = vmatmul.mubr.f32.gmra.mrb[0].mxu0 %v357
      %v582 = vpop.f32.mrb[0].mxu0
      %v583 = vadd.f32 %v263, %v582
      %v584 = vpop.f32.mrb[0].mxu0
      %585 = vmatprep.mubr.f32.mxu0 0.0
      %586 = vmatmul.mubr.f32.gmra.mrb[0].mxu0 %v360
      %v587 = vpop.f32.mrb[0].mxu0
      %v588 = vadd.f32 %v263, %v587
      %v589 = vpop.f32.mrb[0].mxu0
      %590 = vdwg.mxu0
      %v591 = vsub.f32 0.0, %v433
      %v592 = vsub.f32 0.0, %v438
      %v593 = vsub.f32 0.0, %v443
      %v594 = vsub.f32 0.0, %v448
      %v595 = vsub.f32 0.0, %v453
      %v596 = vsub.f32 0.0, %v458
      %v597 = vsub.f32 0.0, %v463
      %v598 = vsub.f32 0.0, %v468
      %v599 = vsub.f32 0.0, %v473
      %v600 = vsub.f32 0.0, %v478
      %v601 = vsub.f32 0.0, %v483
      %v602 = vsub.f32 0.0, %v488
      %v603 = vsub.f32 0.0, %v493
      %v604 = vsub.f32 0.0, %v498
      %v605 = vsub.f32 0.0, %v503
      %v606 = vsub.f32 0.0, %v508
      %v607 = vsub.f32 0.0, %v513
      %v608 = vsub.f32 0.0, %v518
      %v609 = vsub.f32 0.0, %v523
      %v610 = vsub.f32 0.0, %v528
      %v611 = vsub.f32 0.0, %v533
      %v612 = vsub.f32 0.0, %v538
      %v613 = vsub.f32 0.0, %v543
      %v614 = vsub.f32 0.0, %v548
      %v615 = vsub.f32 0.0, %v553
      %v616 = vsub.f32 0.0, %v558
      %v617 = vsub.f32 0.0, %v563
      %v618 = vsub.f32 0.0, %v568
      %v619 = vsub.f32 0.0, %v573
      %v620 = vsub.f32 0.0, %v578
      %v621 = vsub.f32 0.0, %v583
      %v622 = vsub.f32 0.0, %v588
      %v623 = vmul.f32 %v591, 1.442695
      %v624 = vpow.pop %v623
      %v625 = vmul.f32 %v592, 1.442695
      %v626 = vpow.pop %v625
      %v627 = vmul.f32 %v593, 1.442695
      %v628 = vpow.pop %v627
      %v629 = vmul.f32 %v594, 1.442695
      %v630 = vpow.pop %v629
      %v631 = vmul.f32 %v595, 1.442695
      %v632 = vpow.pop %v631
      %v633 = vmul.f32 %v596, 1.442695
      %v634 = vpow.pop %v633
      %v635 = vmul.f32 %v597, 1.442695
      %v636 = vpow.pop %v635
      %v637 = vmul.f32 %v598, 1.442695
      %v638 = vpow.pop %v637
      %v639 = vmul.f32 %v599, 1.442695
      %v640 = vpow.pop %v639
      %v641 = vmul.f32 %v600, 1.442695
      %v642 = vpow.pop %v641
      %v643 = vmul.f32 %v601, 1.442695
      %v644 = vpow.pop %v643
      %v645 = vmul.f32 %v602, 1.442695
      %v646 = vpow.pop %v645
      %v647 = vmul.f32 %v603, 1.442695
      %v648 = vpow.pop %v647
      %v649 = vmul.f32 %v604, 1.442695
      %v650 = vpow.pop %v649
      %v651 = vmul.f32 %v605, 1.442695
      %v652 = vpow.pop %v651
      %v653 = vmul.f32 %v606, 1.442695
      %v654 = vpow.pop %v653
      %v655 = vmul.f32 %v607, 1.442695
      %v656 = vpow.pop %v655
      %v657 = vmul.f32 %v608, 1.442695
      %v658 = vpow.pop %v657
      %v659 = vmul.f32 %v609, 1.442695
      %v660 = vpow.pop %v659
      %v661 = vmul.f32 %v610, 1.442695
      %v662 = vpow.pop %v661
      %v663 = vmul.f32 %v611, 1.442695
      %v664 = vpow.pop %v663
      %v665 = vmul.f32 %v612, 1.442695
      %v666 = vpow.pop %v665
      %v667 = vmul.f32 %v613, 1.442695
      %v668 = vpow.pop %v667
      %v669 = vmul.f32 %v614, 1.442695
      %v670 = vpow.pop %v669
      %v671 = vmul.f32 %v615, 1.442695
      %v672 = vpow.pop %v671
      %v673 = vmul.f32 %v616, 1.442695
      %v674 = vpow.pop %v673
      %v675 = vmul.f32 %v617, 1.442695
      %v676 = vpow.pop %v675
      %v677 = vmul.f32 %v618, 1.442695
      %v678 = vpow.pop %v677
      %v679 = vmul.f32 %v619, 1.442695
      %v680 = vpow.pop %v679
      %v681 = vmul.f32 %v620, 1.442695
      %v682 = vpow.pop %v681
      %v683 = vmul.f32 %v621, 1.442695
      %v684 = vpow.pop %v683
      %v685 = vmul.f32 %v622, 1.442695
      %v686 = vpow.pop %v685
      %v687 = vadd.f32 %v624, 1.0
      %v688 = vadd.f32 %v626, 1.0
      %v689 = vadd.f32 %v628, 1.0
      %v690 = vadd.f32 %v630, 1.0
      %v691 = vadd.f32 %v632, 1.0
      %v692 = vadd.f32 %v634, 1.0
      %v693 = vadd.f32 %v636, 1.0
      %v694 = vadd.f32 %v638, 1.0
      %v695 = vadd.f32 %v640, 1.0
      %v696 = vadd.f32 %v642, 1.0
      %v697 = vadd.f32 %v644, 1.0
      %v698 = vadd.f32 %v646, 1.0
      %v699 = vadd.f32 %v648, 1.0
      %v700 = vadd.f32 %v650, 1.0
      %v701 = vadd.f32 %v652, 1.0
      %v702 = vadd.f32 %v654, 1.0
      %v703 = vadd.f32 %v656, 1.0
      %v704 = vadd.f32 %v658, 1.0
      %v705 = vadd.f32 %v660, 1.0
      %v706 = vadd.f32 %v662, 1.0
      %v707 = vadd.f32 %v664, 1.0
      %v708 = vadd.f32 %v666, 1.0
      %v709 = vadd.f32 %v668, 1.0
      %v710 = vadd.f32 %v670, 1.0
      %v711 = vadd.f32 %v672, 1.0
      %v712 = vadd.f32 %v674, 1.0
      %v713 = vadd.f32 %v676, 1.0
      %v714 = vadd.f32 %v678, 1.0
      %v715 = vadd.f32 %v680, 1.0
      %v716 = vadd.f32 %v682, 1.0
      %v717 = vadd.f32 %v684, 1.0
      %v718 = vadd.f32 %v686, 1.0
      %v719 = vrcp.pop %v687
      %v720 = vrcp.pop %v688
      %v721 = vrcp.pop %v689
      %v722 = vrcp.pop %v690
      %v723 = vrcp.pop %v691
      %v724 = vrcp.pop %v692
      %v725 = vrcp.pop %v693
      %v726 = vrcp.pop %v694
      %v727 = vrcp.pop %v695
      %v728 = vrcp.pop %v696
      %v729 = vrcp.pop %v697
      %v730 = vrcp.pop %v698
      %v731 = vrcp.pop %v699
      %v732 = vrcp.pop %v700
      %v733 = vrcp.pop %v701
      %v734 = vrcp.pop %v702
      %v735 = vrcp.pop %v703
      %v736 = vrcp.pop %v704
      %v737 = vrcp.pop %v705
      %v738 = vrcp.pop %v706
      %v739 = vrcp.pop %v707
      %v740 = vrcp.pop %v708
      %v741 = vrcp.pop %v709
      %v742 = vrcp.pop %v710
      %v743 = vrcp.pop %v711
      %v744 = vrcp.pop %v712
      %v745 = vrcp.pop %v713
      %v746 = vrcp.pop %v714
      %v747 = vrcp.pop %v715
      %v748 = vrcp.pop %v716
      %v749 = vrcp.pop %v717
      %v750 = vrcp.pop %v718
      %v751 = vmul.f32 %v433, %v719
      %v752 = vmul.f32 %v438, %v720
      %v753 = vmul.f32 %v443, %v721
      %v754 = vmul.f32 %v448, %v722
      %v755 = vmul.f32 %v453, %v723
      %v756 = vmul.f32 %v458, %v724
      %v757 = vmul.f32 %v463, %v725
      %v758 = vmul.f32 %v468, %v726
      %v759 = vmul.f32 %v473, %v727
      %v760 = vmul.f32 %v478, %v728
      %v761 = vmul.f32 %v483, %v729
      %v762 = vmul.f32 %v488, %v730
      %v763 = vmul.f32 %v493, %v731
      %v764 = vmul.f32 %v498, %v732
      %v765 = vmul.f32 %v503, %v733
      %v766 = vmul.f32 %v508, %v734
      %v767 = vmul.f32 %v513, %v735
      %v768 = vmul.f32 %v518, %v736
      %v769 = vmul.f32 %v523, %v737
      %v770 = vmul.f32 %v528, %v738
      %v771 = vmul.f32 %v533, %v739
      %v772 = vmul.f32 %v538, %v740
      %v773 = vmul.f32 %v543, %v741
      %v774 = vmul.f32 %v548, %v742
      %v775 = vmul.f32 %v553, %v743
      %v776 = vmul.f32 %v558, %v744
      %v777 = vmul.f32 %v563, %v745
      %v778 = vmul.f32 %v568, %v746
      %v779 = vmul.f32 %v573, %v747
      %v780 = vmul.f32 %v578, %v748
      %v781 = vmul.f32 %v583, %v749
      %v782 = vmul.f32 %v588, %v750
      %v783 = vld [vmem:[%s3] sm:$0x3]
      %v784 = vmax.f32 %v751, -3.4028235e+38
      %v785 = vmax.f32 %v752, -3.4028235e+38
      %v786 = vmax.f32 %v751, %v753
      %v787 = vmax.f32 %v752, %v754
      %v788 = vmax.f32 %v753, %v755
      %v789 = vmax.f32 %v754, %v756
      %v790 = vmax.f32 %v755, %v757
      %v791 = vmax.f32 %v756, %v758
      %v792 = vmax.f32 %v757, %v759
      %v793 = vmax.f32 %v758, %v760
      %v794 = vmax.f32 %v759, %v761
      %v795 = vmax.f32 %v760, %v762
      %v796 = vmax.f32 %v761, %v763
      %v797 = vmax.f32 %v762, %v764
      %v798 = vmax.f32 %v763, %v765
      %v799 = vmax.f32 %v764, %v766
      %v800 = vmax.f32 %v765, %v767
      %v801 = vmax.f32 %v766, %v768
      %v802 = vmax.f32 %v767, %v769
      %v803 = vmax.f32 %v768, %v770
      %v804 = vmax.f32 %v769, %v771
      %v805 = vmax.f32 %v770, %v772
      %v806 = vmax.f32 %v771, %v773
      %v807 = vmax.f32 %v772, %v774
      %v808 = vmax.f32 %v773, %v775
      %v809 = vmax.f32 %v774, %v776
      %v810 = vmax.f32 %v775, %v777
      %v811 = vmax.f32 %v776, %v778
      %v812 = vmax.f32 %v777, %v779
      %v813 = vmax.f32 %v778, %v780
      %v814 = vmax.f32 %v784, %v753
      %v815 = vmax.f32 %v785, %v754
      %v816 = vmax.f32 %v786, %v755
      %v817 = vmax.f32 %v787, %v756
      %v818 = vmax.f32 %v788, %v757
      %v819 = vmax.f32 %v789, %v758
      %v820 = vmax.f32 %v790, %v759
      %v821 = vmax.f32 %v791, %v760
      %v822 = vmax.f32 %v792, %v761
      %v823 = vmax.f32 %v793, %v762
      %v824 = vmax.f32 %v794, %v763
      %v825 = vmax.f32 %v795, %v764
      %v826 = vmax.f32 %v796, %v765
      %v827 = vmax.f32 %v797, %v766
      %v828 = vmax.f32 %v798, %v767
      %v829 = vmax.f32 %v799, %v768
      %v830 = vmax.f32 %v800, %v769
      %v831 = vmax.f32 %v801, %v770
      %v832 = vmax.f32 %v802, %v771
      %v833 = vmax.f32 %v803, %v772
      %v834 = vmax.f32 %v804, %v773
      %v835 = vmax.f32 %v805, %v774
      %v836 = vmax.f32 %v806, %v775
      %v837 = vmax.f32 %v807, %v776
      %v838 = vmax.f32 %v808, %v777
      %v839 = vmax.f32 %v809, %v778
      %v840 = vmax.f32 %v810, %v779
      %v841 = vmax.f32 %v811, %v780
      %v842 = vmax.f32 %v812, %v781
      %v843 = vmax.f32 %v813, %v782
      %v844 = vmax.f32 %v814, %v755
      %v845 = vmax.f32 %v815, %v756
      %v846 = vmax.f32 %v816, %v757
      %v847 = vmax.f32 %v817, %v758
      %v848 = vmax.f32 %v818, %v759
      %v849 = vmax.f32 %v819, %v760
      %v850 = vmax.f32 %v820, %v761
      %v851 = vmax.f32 %v821, %v762
      %v852 = vmax.f32 %v822, %v763
      %v853 = vmax.f32 %v823, %v764
      %v854 = vmax.f32 %v824, %v765
      %v855 = vmax.f32 %v825, %v766
      %v856 = vmax.f32 %v826, %v767
      %v857 = vmax.f32 %v827, %v768
      %v858 = vmax.f32 %v828, %v769
      %v859 = vmax.f32 %v829, %v770
      %v860 = vmax.f32 %v830, %v771
      %v861 = vmax.f32 %v831, %v772
      %v862 = vmax.f32 %v832, %v773
      %v863 = vmax.f32 %v833, %v774
      %v864 = vmax.f32 %v834, %v775
      %v865 = vmax.f32 %v835, %v776
      %v866 = vmax.f32 %v836, %v777
      %v867 = vmax.f32 %v837, %v778
      %v868 = vmax.f32 %v838, %v779
      %v869 = vmax.f32 %v839, %v780
      %v870 = vmax.f32 %v840, %v781
      %v871 = vmax.f32 %v841, %v782
      %v872 = vmax.f32 %v842, -3.4028235e+38
      %v873 = vmax.f32 %v843, -3.4028235e+38
      %v874 = vmax.f32 %v844, %v757
      %v875 = vmax.f32 %v845, %v758
      %v876 = vmax.f32 %v846, %v759
      %v877 = vmax.f32 %v847, %v760
      %v878 = vmax.f32 %v848, %v761
      %v879 = vmax.f32 %v849, %v762
      %v880 = vmax.f32 %v850, %v763
      %v881 = vmax.f32 %v851, %v764
      %v882 = vmax.f32 %v852, %v765
      %v883 = vmax.f32 %v853, %v766
      %v884 = vmax.f32 %v854, %v767
      %v885 = vmax.f32 %v855, %v768
      %v886 = vmax.f32 %v856, %v769
      %v887 = vmax.f32 %v857, %v770
      %v888 = vmax.f32 %v858, %v771
      %v889 = vmax.f32 %v859, %v772
      %v890 = vmax.f32 %v860, %v773
      %v891 = vmax.f32 %v861, %v774
      %v892 = vmax.f32 %v862, %v775
      %v893 = vmax.f32 %v863, %v776
      %v894 = vmax.f32 %v864, %v777
      %v895 = vmax.f32 %v865, %v778
      %v896 = vmax.f32 %v866, %v779
      %v897 = vmax.f32 %v867, %v780
      %v898 = vmax.f32 %v868, %v781
      %v899 = vmax.f32 %v869, %v782
      %v900 = vmax.f32 %v870, -3.4028235e+38
      %v901 = vmax.f32 %v871, -3.4028235e+38
      %v902 = vmax.f32 %v872, -3.4028235e+38
      %v903 = vmax.f32 %v873, -3.4028235e+38
      %v904 = vlaneseq
      %v905 = vshrl.u32 %v904, 7
      %v906 = vadd.s32 %v905, 8
      %v907 = vrot.slane %v844, 1
      %v908 = vrot.slane %v874, 1
      %v909 = vrot.slane %v876, 1
      %v910 = vrot.slane %v878, 1
      %v911 = vrot.slane %v880, 1
      %v912 = vrot.slane %v882, 1
      %v913 = vrot.slane %v884, 1
      %v914 = vrot.slane %v886, 1
      %v915 = vrot.slane %v888, 1
      %v916 = vrot.slane %v890, 1
      %v917 = vrot.slane %v892, 1
      %v918 = vrot.slane %v894, 1
      %v919 = vrot.slane %v896, 1
      %v920 = vrot.slane %v898, 1
      %v921 = vrot.slane %v900, 1
      %v922 = vrot.slane %v902, 1
      %v923 = vrot.slane %v845, 1
      %v924 = vrot.slane %v875, 1
      %v925 = vrot.slane %v877, 1
      %v926 = vrot.slane %v879, 1
      %v927 = vrot.slane %v881, 1
      %v928 = vrot.slane %v883, 1
      %v929 = vrot.slane %v885, 1
      %v930 = vrot.slane %v887, 1
      %v931 = vrot.slane %v889, 1
      %v932 = vrot.slane %v891, 1
      %v933 = vrot.slane %v893, 1
      %v934 = vrot.slane %v895, 1
      %v935 = vrot.slane %v897, 1
      %v936 = vrot.slane %v899, 1
      %v937 = vrot.slane %v901, 1
      %v938 = vrot.slane %v903, 1
      %vm939 = vcmp.lt.s32.totalorder %v905, 7
      %v940 = vsel %vm939, %v907, %v923
      %v941 = vsel %vm939, %v908, %v924
      %v942 = vsel %vm939, %v909, %v925
      %v943 = vsel %vm939, %v910, %v926
      %v944 = vsel %vm939, %v911, %v927
      %v945 = vsel %vm939, %v912, %v928
      %v946 = vsel %vm939, %v913, %v929
      %v947 = vsel %vm939, %v914, %v930
      %v948 = vsel %vm939, %v915, %v931
      %v949 = vsel %vm939, %v916, %v932
      %v950 = vsel %vm939, %v917, %v933
      %v951 = vsel %vm939, %v918, %v934
      %v952 = vsel %vm939, %v919, %v935
      %v953 = vsel %vm939, %v920, %v936
      %v954 = vsel %vm939, %v921, %v937
      %v955 = vsel %vm939, %v922, %v938
      %v956 = vsel %vm939, %v923, %v907
      %v957 = vsel %vm939, %v924, %v908
      %v958 = vsel %vm939, %v925, %v909
      %v959 = vsel %vm939, %v926, %v910
      %v960 = vsel %vm939, %v927, %v911
      %v961 = vsel %vm939, %v928, %v912
      %v962 = vsel %vm939, %v929, %v913
      %v963 = vsel %vm939, %v930, %v914
      %v964 = vsel %vm939, %v931, %v915
      %v965 = vsel %vm939, %v932, %v916
      %v966 = vsel %vm939, %v933, %v917
      %v967 = vsel %vm939, %v934, %v918
      %v968 = vsel %vm939, %v935, %v919
      %v969 = vsel %vm939, %v936, %v920
      %v970 = vsel %vm939, %v937, %v921
      %v971 = vsel %vm939, %v938, %v922
      %vm972 = vcmp.lt.s32.totalorder %v905, 15
      %vm973 = vcmp.lt.s32.totalorder %v906, 15
      %v974 = vsel %vm972, %v940, -3.4028235e+38
      %v975 = vsel %vm973, %v956, -3.4028235e+38
      %v976 = vsel %vm972, %v941, -3.4028235e+38
      %v977 = vsel %vm973, %v957, -3.4028235e+38
      %v978 = vsel %vm972, %v942, -3.4028235e+38
      %v979 = vsel %vm973, %v958, -3.4028235e+38
      %v980 = vsel %vm972, %v943, -3.4028235e+38
      %v981 = vsel %vm973, %v959, -3.4028235e+38
      %v982 = vsel %vm972, %v944, -3.4028235e+38
      %v983 = vsel %vm973, %v960, -3.4028235e+38
      %v984 = vsel %vm972, %v945, -3.4028235e+38
      %v985 = vsel %vm973, %v961, -3.4028235e+38
      %v986 = vsel %vm972, %v946, -3.4028235e+38
      %v987 = vsel %vm973, %v962, -3.4028235e+38
      %v988 = vsel %vm972, %v947, -3.4028235e+38
      %v989 = vsel %vm973, %v963, -3.4028235e+38
      %v990 = vsel %vm972, %v948, -3.4028235e+38
      %v991 = vsel %vm973, %v964, -3.4028235e+38
      %v992 = vsel %vm972, %v949, -3.4028235e+38
      %v993 = vsel %vm973, %v965, -3.4028235e+38
      %v994 = vsel %vm972, %v950, -3.4028235e+38
      %v995 = vsel %vm973, %v966, -3.4028235e+38
      %v996 = vsel %vm972, %v951, -3.4028235e+38
      %v997 = vsel %vm973, %v967, -3.4028235e+38
      %v998 = vsel %vm972, %v952, -3.4028235e+38
      %v999 = vsel %vm973, %v968, -3.4028235e+38
      %v1000 = vsel %vm972, %v953, -3.4028235e+38
      %v1001 = vsel %vm973, %v969, -3.4028235e+38
      %v1002 = vsel %vm972, %v954, -3.4028235e+38
      %v1003 = vsel %vm973, %v970, -3.4028235e+38
      %v1004 = vsel %vm972, %v955, -3.4028235e+38
      %v1005 = vsel %vm973, %v971, -3.4028235e+38
      %v1006 = vrot.slane %v844, 7
      %v1007 = vrot.slane %v874, 7
      %v1008 = vrot.slane %v876, 7
      %v1009 = vrot.slane %v878, 7
      %v1010 = vrot.slane %v880, 7
      %v1011 = vrot.slane %v882, 7
      %v1012 = vrot.slane %v884, 7
      %v1013 = vrot.slane %v886, 7
      %v1014 = vrot.slane %v888, 7
      %v1015 = vrot.slane %v890, 7
      %v1016 = vrot.slane %v892, 7
      %v1017 = vrot.slane %v894, 7
      %v1018 = vrot.slane %v896, 7
      %v1019 = vrot.slane %v898, 7
      %v1020 = vrot.slane %v900, 7
      %v1021 = vrot.slane %v902, 7
      %v1022 = vrot.slane %v845, 7
      %v1023 = vrot.slane %v875, 7
      %v1024 = vrot.slane %v877, 7
      %v1025 = vrot.slane %v879, 7
      %v1026 = vrot.slane %v881, 7
      %v1027 = vrot.slane %v883, 7
      %v1028 = vrot.slane %v885, 7
      %v1029 = vrot.slane %v887, 7
      %v1030 = vrot.slane %v889, 7
      %v1031 = vrot.slane %v891, 7
      %v1032 = vrot.slane %v893, 7
      %v1033 = vrot.slane %v895, 7
      %v1034 = vrot.slane %v897, 7
      %v1035 = vrot.slane %v899, 7
      %v1036 = vrot.slane %v901, 7
      %v1037 = vrot.slane %v903, 7
      %vm1038 = vcmp.lt.s32.totalorder %v905, 1
      %v1039 = vsel %vm1038, %v1006, %v1022
      %v1040 = vsel %vm1038, %v1007, %v1023
      %v1041 = vsel %vm1038, %v1008, %v1024
      %v1042 = vsel %vm1038, %v1009, %v1025
      %v1043 = vsel %vm1038, %v1010, %v1026
      %v1044 = vsel %vm1038, %v1011, %v1027
      %v1045 = vsel %vm1038, %v1012, %v1028
      %v1046 = vsel %vm1038, %v1013, %v1029
      %v1047 = vsel %vm1038, %v1014, %v1030
      %v1048 = vsel %vm1038, %v1015, %v1031
      %v1049 = vsel %vm1038, %v1016, %v1032
      %v1050 = vsel %vm1038, %v1017, %v1033
      %v1051 = vsel %vm1038, %v1018, %v1034
      %v1052 = vsel %vm1038, %v1019, %v1035
      %v1053 = vsel %vm1038, %v1020, %v1036
      %v1054 = vsel %vm1038, %v1021, %v1037
      %v1055 = vsel %vm1038, %v1022, %v1006
      %v1056 = vsel %vm1038, %v1023, %v1007
      %v1057 = vsel %vm1038, %v1024, %v1008
      %v1058 = vsel %vm1038, %v1025, %v1009
      %v1059 = vsel %vm1038, %v1026, %v1010
      %v1060 = vsel %vm1038, %v1027, %v1011
      %v1061 = vsel %vm1038, %v1028, %v1012
      %v1062 = vsel %vm1038, %v1029, %v1013
      %v1063 = vsel %vm1038, %v1030, %v1014
      %v1064 = vsel %vm1038, %v1031, %v1015
      %v1065 = vsel %vm1038, %v1032, %v1016
      %v1066 = vsel %vm1038, %v1033, %v1017
      %v1067 = vsel %vm1038, %v1034, %v1018
      %v1068 = vsel %vm1038, %v1035, %v1019
      %v1069 = vsel %vm1038, %v1036, %v1020
      %v1070 = vsel %vm1038, %v1037, %v1021
      %vm1071 = vcmp.ge.s32.totalorder %v905, 1
      %vm1072 = vcmp.ge.s32.totalorder %v906, 1
      %v1073 = vsel %vm1071, %v1055, -3.4028235e+38
      %v1074 = vsel %vm1072, %v1039, -3.4028235e+38
      %v1075 = vsel %vm1071, %v1056, -3.4028235e+38
      %v1076 = vsel %vm1072, %v1040, -3.4028235e+38
      %v1077 = vsel %vm1071, %v1057, -3.4028235e+38
      %v1078 = vsel %vm1072, %v1041, -3.4028235e+38
      %v1079 = vsel %vm1071, %v1058, -3.4028235e+38
      %v1080 = vsel %vm1072, %v1042, -3.4028235e+38
      %v1081 = vsel %vm1071, %v1059, -3.4028235e+38
      %v1082 = vsel %vm1072, %v1043, -3.4028235e+38
      %v1083 = vsel %vm1071, %v1060, -3.4028235e+38
      %v1084 = vsel %vm1072, %v1044, -3.4028235e+38
      %v1085 = vsel %vm1071, %v1061, -3.4028235e+38
      %v1086 = vsel %vm1072, %v1045, -3.4028235e+38
      %v1087 = vsel %vm1071, %v1062, -3.4028235e+38
      %v1088 = vsel %vm1072, %v1046, -3.4028235e+38
      %v1089 = vsel %vm1071, %v1063, -3.4028235e+38
      %v1090 = vsel %vm1072, %v1047, -3.4028235e+38
      %v1091 = vsel %vm1071, %v1064, -3.4028235e+38
      %v1092 = vsel %vm1072, %v1048, -3.4028235e+38
      %v1093 = vsel %vm1071, %v1065, -3.4028235e+38
      %v1094 = vsel %vm1072, %v1049, -3.4028235e+38
      %v1095 = vsel %vm1071, %v1066, -3.4028235e+38
      %v1096 = vsel %vm1072, %v1050, -3.4028235e+38
      %v1097 = vsel %vm1071, %v1067, -3.4028235e+38
      %v1098 = vsel %vm1072, %v1051, -3.4028235e+38
      %v1099 = vsel %vm1071, %v1068, -3.4028235e+38
      %v1100 = vsel %vm1072, %v1052, -3.4028235e+38
      %v1101 = vsel %vm1071, %v1069, -3.4028235e+38
      %v1102 = vsel %vm1072, %v1053, -3.4028235e+38
      %v1103 = vsel %vm1071, %v1070, -3.4028235e+38
      %v1104 = vsel %vm1072, %v1054, -3.4028235e+38
      %v1105 = vmax.f32 %v974, %v1073
      %v1106 = vmax.f32 %v975, %v1074
      %v1107 = vmax.f32 %v976, %v1075
      %v1108 = vmax.f32 %v977, %v1076
      %v1109 = vmax.f32 %v978, %v1077
      %v1110 = vmax.f32 %v979, %v1078
      %v1111 = vmax.f32 %v980, %v1079
      %v1112 = vmax.f32 %v981, %v1080
      %v1113 = vmax.f32 %v982, %v1081
      %v1114 = vmax.f32 %v983, %v1082
      %v1115 = vmax.f32 %v984, %v1083
      %v1116 = vmax.f32 %v985, %v1084
      %v1117 = vmax.f32 %v986, %v1085
      %v1118 = vmax.f32 %v987, %v1086
      %v1119 = vmax.f32 %v988, %v1087
      %v1120 = vmax.f32 %v989, %v1088
      %v1121 = vmax.f32 %v990, %v1089
      %v1122 = vmax.f32 %v991, %v1090
      %v1123 = vmax.f32 %v992, %v1091
      %v1124 = vmax.f32 %v993, %v1092
      %v1125 = vmax.f32 %v994, %v1093
      %v1126 = vmax.f32 %v995, %v1094
      %v1127 = vmax.f32 %v996, %v1095
      %v1128 = vmax.f32 %v997, %v1096
      %v1129 = vmax.f32 %v998, %v1097
      %v1130 = vmax.f32 %v999, %v1098
      %v1131 = vmax.f32 %v1000, %v1099
      %v1132 = vmax.f32 %v1001, %v1100
      %v1133 = vmax.f32 %v1002, %v1101
      %v1134 = vmax.f32 %v1003, %v1102
      %v1135 = vmax.f32 %v1004, %v1103
      %v1136 = vmax.f32 %v1005, %v1104
      %v1137 = vmax.f32 %v844, %v1105
      %v1138 = vmax.f32 %v845, %v1106
      %v1139 = vmax.f32 %v874, %v1107
      %v1140 = vmax.f32 %v875, %v1108
      %v1141 = vmax.f32 %v876, %v1109
      %v1142 = vmax.f32 %v877, %v1110
      %v1143 = vmax.f32 %v878, %v1111
      %v1144 = vmax.f32 %v879, %v1112
      %v1145 = vmax.f32 %v880, %v1113
      %v1146 = vmax.f32 %v881, %v1114
      %v1147 = vmax.f32 %v882, %v1115
      %v1148 = vmax.f32 %v883, %v1116
      %v1149 = vmax.f32 %v884, %v1117
      %v1150 = vmax.f32 %v885, %v1118
      %v1151 = vmax.f32 %v886, %v1119
      %v1152 = vmax.f32 %v887, %v1120
      %v1153 = vmax.f32 %v888, %v1121
      %v1154 = vmax.f32 %v889, %v1122
      %v1155 = vmax.f32 %v890, %v1123
      %v1156 = vmax.f32 %v891, %v1124
      %v1157 = vmax.f32 %v892, %v1125
      %v1158 = vmax.f32 %v893, %v1126
      %v1159 = vmax.f32 %v894, %v1127
      %v1160 = vmax.f32 %v895, %v1128
      %v1161 = vmax.f32 %v896, %v1129
      %v1162 = vmax.f32 %v897, %v1130
      %v1163 = vmax.f32 %v898, %v1131
      %v1164 = vmax.f32 %v899, %v1132
      %v1165 = vmax.f32 %v900, %v1133
      %v1166 = vmax.f32 %v901, %v1134
      %v1167 = vmax.f32 %v902, %v1135
      %v1168 = vmax.f32 %v903, %v1136
      %v1169 = vrot.slane %v844, 2
      %v1170 = vrot.slane %v874, 2
      %v1171 = vrot.slane %v876, 2
      %v1172 = vrot.slane %v878, 2
      %v1173 = vrot.slane %v880, 2
      %v1174 = vrot.slane %v882, 2
      %v1175 = vrot.slane %v884, 2
      %v1176 = vrot.slane %v886, 2
      %v1177 = vrot.slane %v888, 2
      %v1178 = vrot.slane %v890, 2
      %v1179 = vrot.slane %v892, 2
      %v1180 = vrot.slane %v894, 2
      %v1181 = vrot.slane %v896, 2
      %v1182 = vrot.slane %v898, 2
      %v1183 = vrot.slane %v900, 2
      %v1184 = vrot.slane %v902, 2
      %v1185 = vrot.slane %v845, 2
      %v1186 = vrot.slane %v875, 2
      %v1187 = vrot.slane %v877, 2
      %v1188 = vrot.slane %v879, 2
      %v1189 = vrot.slane %v881, 2
      %v1190 = vrot.slane %v883, 2
      %v1191 = vrot.slane %v885, 2
      %v1192 = vrot.slane %v887, 2
      %v1193 = vrot.slane %v889, 2
      %v1194 = vrot.slane %v891, 2
      %v1195 = vrot.slane %v893, 2
      %v1196 = vrot.slane %v895, 2
      %v1197 = vrot.slane %v897, 2
      %v1198 = vrot.slane %v899, 2
      %v1199 = vrot.slane %v901, 2
      %v1200 = vrot.slane %v903, 2
      %vm1201 = vcmp.lt.s32.totalorder %v905, 6
      %v1202 = vsel %vm1201, %v1169, %v1185
      %v1203 = vsel %vm1201, %v1170, %v1186
      %v1204 = vsel %vm1201, %v1171, %v1187
      %v1205 = vsel %vm1201, %v1172, %v1188
      %v1206 = vsel %vm1201, %v1173, %v1189
      %v1207 = vsel %vm1201, %v1174, %v1190
      %v1208 = vsel %vm1201, %v1175, %v1191
      %v1209 = vsel %vm1201, %v1176, %v1192
      %v1210 = vsel %vm1201, %v1177, %v1193
      %v1211 = vsel %vm1201, %v1178, %v1194
      %v1212 = vsel %vm1201, %v1179, %v1195
      %v1213 = vsel %vm1201, %v1180, %v1196
      %v1214 = vsel %vm1201, %v1181, %v1197
      %v1215 = vsel %vm1201, %v1182, %v1198
      %v1216 = vsel %vm1201, %v1183, %v1199
      %v1217 = vsel %vm1201, %v1184, %v1200
      %v1218 = vsel %vm1201, %v1185, %v1169
      %v1219 = vsel %vm1201, %v1186, %v1170
      %v1220 = vsel %vm1201, %v1187, %v1171
      %v1221 = vsel %vm1201, %v1188, %v1172
      %v1222 = vsel %vm1201, %v1189, %v1173
      %v1223 = vsel %vm1201, %v1190, %v1174
      %v1224 = vsel %vm1201, %v1191, %v1175
      %v1225 = vsel %vm1201, %v1192, %v1176
      %v1226 = vsel %vm1201, %v1193, %v1177
      %v1227 = vsel %vm1201, %v1194, %v1178
      %v1228 = vsel %vm1201, %v1195, %v1179
      %v1229 = vsel %vm1201, %v1196, %v1180
      %v1230 = vsel %vm1201, %v1197, %v1181
      %v1231 = vsel %vm1201, %v1198, %v1182
      %v1232 = vsel %vm1201, %v1199, %v1183
      %v1233 = vsel %vm1201, %v1200, %v1184
      %vm1234 = vcmp.lt.s32.totalorder %v905, 14
      %vm1235 = vcmp.lt.s32.totalorder %v906, 14
      %v1236 = vsel %vm1234, %v1202, -3.4028235e+38
      %v1237 = vsel %vm1235, %v1218, -3.4028235e+38
      %v1238 = vsel %vm1234, %v1203, -3.4028235e+38
      %v1239 = vsel %vm1235, %v1219, -3.4028235e+38
      %v1240 = vsel %vm1234, %v1204, -3.4028235e+38
      %v1241 = vsel %vm1235, %v1220, -3.4028235e+38
      %v1242 = vsel %vm1234, %v1205, -3.4028235e+38
      %v1243 = vsel %vm1235, %v1221, -3.4028235e+38
      %v1244 = vsel %vm1234, %v1206, -3.4028235e+38
      %v1245 = vsel %vm1235, %v1222, -3.4028235e+38
      %v1246 = vsel %vm1234, %v1207, -3.4028235e+38
      %v1247 = vsel %vm1235, %v1223, -3.4028235e+38
      %v1248 = vsel %vm1234, %v1208, -3.4028235e+38
      %v1249 = vsel %vm1235, %v1224, -3.4028235e+38
      %v1250 = vsel %vm1234, %v1209, -3.4028235e+38
      %v1251 = vsel %vm1235, %v1225, -3.4028235e+38
      %v1252 = vsel %vm1234, %v1210, -3.4028235e+38
      %v1253 = vsel %vm1235, %v1226, -3.4028235e+38
      %v1254 = vsel %vm1234, %v1211, -3.4028235e+38
      %v1255 = vsel %vm1235, %v1227, -3.4028235e+38
      %v1256 = vsel %vm1234, %v1212, -3.4028235e+38
      %v1257 = vsel %vm1235, %v1228, -3.4028235e+38
      %v1258 = vsel %vm1234, %v1213, -3.4028235e+38
      %v1259 = vsel %vm1235, %v1229, -3.4028235e+38
      %v1260 = vsel %vm1234, %v1214, -3.4028235e+38
      %v1261 = vsel %vm1235, %v1230, -3.4028235e+38
      %v1262 = vsel %vm1234, %v1215, -3.4028235e+38
      %v1263 = vsel %vm1235, %v1231, -3.4028235e+38
      %v1264 = vsel %vm1234, %v1216, -3.4028235e+38
      %v1265 = vsel %vm1235, %v1232, -3.4028235e+38
      %v1266 = vsel %vm1234, %v1217, -3.4028235e+38
      %v1267 = vsel %vm1235, %v1233, -3.4028235e+38
      %v1268 = vrot.slane %v844, 6
      %v1269 = vrot.slane %v874, 6
      %v1270 = vrot.slane %v876, 6
      %v1271 = vrot.slane %v878, 6
      %v1272 = vrot.slane %v880, 6
      %v1273 = vrot.slane %v882, 6
      %v1274 = vrot.slane %v884, 6
      %v1275 = vrot.slane %v886, 6
      %v1276 = vrot.slane %v888, 6
      %v1277 = vrot.slane %v890, 6
      %v1278 = vrot.slane %v892, 6
      %v1279 = vrot.slane %v894, 6
      %v1280 = vrot.slane %v896, 6
      %v1281 = vrot.slane %v898, 6
      %v1282 = vrot.slane %v900, 6
      %v1283 = vrot.slane %v902, 6
      %v1284 = vrot.slane %v845, 6
      %v1285 = vrot.slane %v875, 6
      %v1286 = vrot.slane %v877, 6
      %v1287 = vrot.slane %v879, 6
      %v1288 = vrot.slane %v881, 6
      %v1289 = vrot.slane %v883, 6
      %v1290 = vrot.slane %v885, 6
      %v1291 = vrot.slane %v887, 6
      %v1292 = vrot.slane %v889, 6
      %v1293 = vrot.slane %v891, 6
      %v1294 = vrot.slane %v893, 6
      %v1295 = vrot.slane %v895, 6
      %v1296 = vrot.slane %v897, 6
      %v1297 = vrot.slane %v899, 6
      %v1298 = vrot.slane %v901, 6
      %v1299 = vrot.slane %v903, 6
      %vm1300 = vcmp.lt.s32.totalorder %v905, 2
      %v1301 = vsel %vm1300, %v1268, %v1284
      %v1302 = vsel %vm1300, %v1269, %v1285
      %v1303 = vsel %vm1300, %v1270, %v1286
      %v1304 = vsel %vm1300, %v1271, %v1287
      %v1305 = vsel %vm1300, %v1272, %v1288
      %v1306 = vsel %vm1300, %v1273, %v1289
      %v1307 = vsel %vm1300, %v1274, %v1290
      %v1308 = vsel %vm1300, %v1275, %v1291
      %v1309 = vsel %vm1300, %v1276, %v1292
      %v1310 = vsel %vm1300, %v1277, %v1293
      %v1311 = vsel %vm1300, %v1278, %v1294
      %v1312 = vsel %vm1300, %v1279, %v1295
      %v1313 = vsel %vm1300, %v1280, %v1296
      %v1314 = vsel %vm1300, %v1281, %v1297
      %v1315 = vsel %vm1300, %v1282, %v1298
      %v1316 = vsel %vm1300, %v1283, %v1299
      %v1317 = vsel %vm1300, %v1284, %v1268
      %v1318 = vsel %vm1300, %v1285, %v1269
      %v1319 = vsel %vm1300, %v1286, %v1270
      %v1320 = vsel %vm1300, %v1287, %v1271
      %v1321 = vsel %vm1300, %v1288, %v1272
      %v1322 = vsel %vm1300, %v1289, %v1273
      %v1323 = vsel %vm1300, %v1290, %v1274
      %v1324 = vsel %vm1300, %v1291, %v1275
      %v1325 = vsel %vm1300, %v1292, %v1276
      %v1326 = vsel %vm1300, %v1293, %v1277
      %v1327 = vsel %vm1300, %v1294, %v1278
      %v1328 = vsel %vm1300, %v1295, %v1279
      %v1329 = vsel %vm1300, %v1296, %v1280
      %v1330 = vsel %vm1300, %v1297, %v1281
      %v1331 = vsel %vm1300, %v1298, %v1282
      %v1332 = vsel %vm1300, %v1299, %v1283
      %vm1333 = vcmp.ge.s32.totalorder %v905, 2
      %vm1334 = vcmp.ge.s32.totalorder %v906, 2
      %v1335 = vsel %vm1333, %v1317, -3.4028235e+38
      %v1336 = vsel %vm1334, %v1301, -3.4028235e+38
      %v1337 = vsel %vm1333, %v1318, -3.4028235e+38
      %v1338 = vsel %vm1334, %v1302, -3.4028235e+38
      %v1339 = vsel %vm1333, %v1319, -3.4028235e+38
      %v1340 = vsel %vm1334, %v1303, -3.4028235e+38
      %v1341 = vsel %vm1333, %v1320, -3.4028235e+38
      %v1342 = vsel %vm1334, %v1304, -3.4028235e+38
      %v1343 = vsel %vm1333, %v1321, -3.4028235e+38
      %v1344 = vsel %vm1334, %v1305, -3.4028235e+38
      %v1345 = vsel %vm1333, %v1322, -3.4028235e+38
      %v1346 = vsel %vm1334, %v1306, -3.4028235e+38
      %v1347 = vsel %vm1333, %v1323, -3.4028235e+38
      %v1348 = vsel %vm1334, %v1307, -3.4028235e+38
      %v1349 = vsel %vm1333, %v1324, -3.4028235e+38
      %v1350 = vsel %vm1334, %v1308, -3.4028235e+38
      %v1351 = vsel %vm1333, %v1325, -3.4028235e+38
      %v1352 = vsel %vm1334, %v1309, -3.4028235e+38
      %v1353 = vsel %vm1333, %v1326, -3.4028235e+38
      %v1354 = vsel %vm1334, %v1310, -3.4028235e+38
      %v1355 = vsel %vm1333, %v1327, -3.4028235e+38
      %v1356 = vsel %vm1334, %v1311, -3.4028235e+38
      %v1357 = vsel %vm1333, %v1328, -3.4028235e+38
      %v1358 = vsel %vm1334, %v1312, -3.4028235e+38
      %v1359 = vsel %vm1333, %v1329, -3.4028235e+38
      %v1360 = vsel %vm1334, %v1313, -3.4028235e+38
      %v1361 = vsel %vm1333, %v1330, -3.4028235e+38
      %v1362 = vsel %vm1334, %v1314, -3.4028235e+38
      %v1363 = vsel %vm1333, %v1331, -3.4028235e+38
      %v1364 = vsel %vm1334, %v1315, -3.4028235e+38
      %v1365 = vsel %vm1333, %v1332, -3.4028235e+38
      %v1366 = vsel %vm1334, %v1316, -3.4028235e+38
      %v1367 = vmax.f32 %v1236, %v1335
      %v1368 = vmax.f32 %v1237, %v1336
      %v1369 = vmax.f32 %v1238, %v1337
      %v1370 = vmax.f32 %v1239, %v1338
      %v1371 = vmax.f32 %v1240, %v1339
      %v1372 = vmax.f32 %v1241, %v1340
      %v1373 = vmax.f32 %v1242, %v1341
      %v1374 = vmax.f32 %v1243, %v1342
      %v1375 = vmax.f32 %v1244, %v1343
      %v1376 = vmax.f32 %v1245, %v1344
      %v1377 = vmax.f32 %v1246, %v1345
      %v1378 = vmax.f32 %v1247, %v1346
      %v1379 = vmax.f32 %v1248, %v1347
      %v1380 = vmax.f32 %v1249, %v1348
      %v1381 = vmax.f32 %v1250, %v1349
      %v1382 = vmax.f32 %v1251, %v1350
      %v1383 = vmax.f32 %v1252, %v1351
      %v1384 = vmax.f32 %v1253, %v1352
      %v1385 = vmax.f32 %v1254, %v1353
      %v1386 = vmax.f32 %v1255, %v1354
      %v1387 = vmax.f32 %v1256, %v1355
      %v1388 = vmax.f32 %v1257, %v1356
      %v1389 = vmax.f32 %v1258, %v1357
      %v1390 = vmax.f32 %v1259, %v1358
      %v1391 = vmax.f32 %v1260, %v1359
      %v1392 = vmax.f32 %v1261, %v1360
      %v1393 = vmax.f32 %v1262, %v1361
      %v1394 = vmax.f32 %v1263, %v1362
      %v1395 = vmax.f32 %v1264, %v1363
      %v1396 = vmax.f32 %v1265, %v1364
      %v1397 = vmax.f32 %v1266, %v1365
      %v1398 = vmax.f32 %v1267, %v1366
      %v1399 = vmax.f32 %v1137, %v1367
      %v1400 = vmax.f32 %v1138, %v1368
      %v1401 = vmax.f32 %v1139, %v1369
      %v1402 = vmax.f32 %v1140, %v1370
      %v1403 = vmax.f32 %v1141, %v1371
      %v1404 = vmax.f32 %v1142, %v1372
      %v1405 = vmax.f32 %v1143, %v1373
      %v1406 = vmax.f32 %v1144, %v1374
      %v1407 = vmax.f32 %v1145, %v1375
      %v1408 = vmax.f32 %v1146, %v1376
      %v1409 = vmax.f32 %v1147, %v1377
      %v1410 = vmax.f32 %v1148, %v1378
      %v1411 = vmax.f32 %v1149, %v1379
      %v1412 = vmax.f32 %v1150, %v1380
      %v1413 = vmax.f32 %v1151, %v1381
      %v1414 = vmax.f32 %v1152, %v1382
      %v1415 = vmax.f32 %v1153, %v1383
      %v1416 = vmax.f32 %v1154, %v1384
      %v1417 = vmax.f32 %v1155, %v1385
      %v1418 = vmax.f32 %v1156, %v1386
      %v1419 = vmax.f32 %v1157, %v1387
      %v1420 = vmax.f32 %v1158, %v1388
      %v1421 = vmax.f32 %v1159, %v1389
      %v1422 = vmax.f32 %v1160, %v1390
      %v1423 = vmax.f32 %v1161, %v1391
      %v1424 = vmax.f32 %v1162, %v1392
      %v1425 = vmax.f32 %v1163, %v1393
      %v1426 = vmax.f32 %v1164, %v1394
      %v1427 = vmax.f32 %v1165, %v1395
      %v1428 = vmax.f32 %v1166, %v1396
      %v1429 = vmax.f32 %v1167, %v1397
      %v1430 = vmax.f32 %v1168, %v1398
      %s1431 = scalar_lea.vmem %s3, 2
      %v1432 = vld [vmem:[%s1431] sm:$0x3]
      %vm1433 = vcmask 15360
      %v1435 = vsel %vm1433, %v1399, 0
      %v1438 = vsel %vm1433, %v1400, 0
      %v1441 = vsel %vm1433, %v1401, 0
      %v1444 = vsel %vm1433, %v1402, 0
      %v1447 = vsel %vm1433, %v1403, 0
      %v1450 = vsel %vm1433, %v1404, 0
      %v1453 = vsel %vm1433, %v1405, 0
      %v1456 = vsel %vm1433, %v1406, 0
      %v1459 = vsel %vm1433, %v1407, 0
      %v1462 = vsel %vm1433, %v1408, 0
      %v1465 = vsel %vm1433, %v1409, 0
      %v1468 = vsel %vm1433, %v1410, 0
      %v1471 = vsel %vm1433, %v1411, 0
      %v1474 = vsel %vm1433, %v1412, 0
      %v1477 = vsel %vm1433, %v1413, 0
      %v1480 = vsel %vm1433, %v1414, 0
      %v1483 = vsel %vm1433, %v1415, 0
      %v1486 = vsel %vm1433, %v1416, 0
      %v1489 = vsel %vm1433, %v1417, 0
      %v1492 = vsel %vm1433, %v1418, 0
      %v1495 = vsel %vm1433, %v1419, 0
      %v1498 = vsel %vm1433, %v1420, 0
      %v1501 = vsel %vm1433, %v1421, 0
      %v1504 = vsel %vm1433, %v1422, 0
      %v1507 = vsel %vm1433, %v1423, 0
      %v1510 = vsel %vm1433, %v1424, 0
      %v1513 = vsel %vm1433, %v1425, 0
      %v1516 = vsel %vm1433, %v1426, 0
      %v1519 = vsel %vm1433, %v1427, 0
      %v1522 = vsel %vm1433, %v1428, 0
      %v1525 = vsel %vm1433, %v1429, 0
      %v1528 = vsel %vm1433, %v1430, 0
      %vm1530 = vcmask 1041408
      %v1532 = vsel %vm1530, %v1432, 0
      %1534 = vmatprep.subr.mxu0 0.0
      %1535 = vmatpush1.msra.mxu0 %v1532
      %1536 = vmatprep.subr.mxu0 0.0
      %1537 = vmatpush1.msra.mxu0 0.0
      %1538 = vmatprep.subr.mxu0 0.0
      %1539 = vmatpush1.msra.mxu0 0.0
      %1540 = vmatprep.subr.mxu0 0.0
      %1541 = vmatpush1.msra.mxu0 0.0
      %1542 = vmatprep.subr.mxu0 0.0
      %1543 = vmatpush1.msra.mxu0 0.0
      %1544 = vmatprep.subr.mxu0 0.0
      %1545 = vmatpush1.msra.mxu0 0.0
      %1546 = vmatprep.subr.mxu0 0.0
      %1547 = vmatpush1.msra.mxu0 0.0
      %1548 = vmatprep.subr.mxu0 0.0
      %1549 = vmatpush1.msra.mxu0 0.0
      %1550 = vmatprep.subr.mxu0 0.0
      %1551 = vmatpush1.msra.mxu0 0.0
      %1552 = vmatprep.subr.mxu0 0.0
      %1553 = vmatpush1.msra.mxu0 0.0
      %1554 = vmatprep.subr.mxu0 0.0
      %1555 = vmatpush1.msra.mxu0 0.0
      %1556 = vmatprep.subr.mxu0 0.0
      %1557 = vmatpush1.msra.mxu0 0.0
      %1558 = vmatprep.subr.mxu0 0.0
      %1559 = vmatpush1.msra.mxu0 0.0
      %1560 = vmatprep.subr.mxu0 0.0
      %1561 = vmatpush1.msra.mxu0 0.0
      %1562 = vmatprep.subr.mxu0 0.0
      %1563 = vmatpush1.msra.mxu0 0.0
      %1564 = vmatprep.subr.mxu0 0.0
      %1565 = vmatpush1.msra.mxu0 0.0
      %1566 = vmatprep.subr.mxu0 0.0
      %1567 = vmatpush1.msra.mxu0 0.0
      %1568 = vmatprep.subr.mxu0 0.0
      %1569 = vmatpush1.msra.mxu0 0.0
      %1570 = vmatprep.subr.mxu0 0.0
      %1571 = vmatpush1.msra.mxu0 0.0
      %1572 = vmatprep.subr.mxu0 0.0
      %1573 = vmatpush1.msra.mxu0 0.0
      %1574 = vmatprep.subr.mxu0 0.0
      %1575 = vmatpush1.msra.mxu0 0.0
      %1576 = vmatprep.subr.mxu0 0.0
      %1577 = vmatpush1.msra.mxu0 0.0
      %1578 = vmatprep.subr.mxu0 0.0
      %1579 = vmatpush1.msra.mxu0 0.0
      %1580 = vmatprep.subr.mxu0 0.0
      %1581 = vmatpush1.msra.mxu0 0.0
      %1582 = vmatprep.subr.mxu0 0.0
      %1583 = vmatpush1.msra.mxu0 0.0
      %1584 = vmatprep.subr.mxu0 0.0
      %1585 = vmatpush1.msra.mxu0 0.0
      %1586 = vmatprep.subr.mxu0 0.0
      %1587 = vmatpush1.msra.mxu0 0.0
      %1588 = vmatprep.subr.mxu0 0.0
      %1589 = vmatpush1.msra.mxu0 0.0
      %1590 = vmatprep.subr.mxu0 0.0
      %1591 = vmatpush1.msra.mxu0 0.0
      %1592 = vmatprep.subr.mxu0 0.0
      %1593 = vmatpush1.msra.mxu0 0.0
      %1594 = vmatprep.subr.mxu0 0.0
      %1595 = vmatpush1.msra.mxu0 0.0
      %1596 = vmatprep.subr.mxu0 0.0
      %1597 = vmatpush1.msra.mxu0 0.0
      %1598 = vmatprep.mubr.f32.mxu0 0.0
      %1599 = vmatmul.mubr.f32.gmra.mrb[0].mxu0 %v1435
      %v1600 = vpop.f32.mrb[0].mxu0
      %v1601 = vadd.f32 0.0, %v1600
      %v1602 = vpop.f32.mrb[0].mxu0
      %1603 = vmatprep.mubr.f32.mxu0 0.0
      %1604 = vmatmul.mubr.f32.gmra.mrb[0].mxu0 %v1438
      %v1605 = vpop.f32.mrb[0].mxu0
      %v1606 = vadd.f32 0.0, %v1605
      %v1607 = vpop.f32.mrb[0].mxu0
      %1608 = vmatprep.mubr.f32.mxu0 0.0
      %1609 = vmatmul.mubr.f32.gmra.mrb[0].mxu0 %v1441
      %v1610 = vpop.f32.mrb[0].mxu0
      %v1611 = vadd.f32 0.0, %v1610
      %v1612 = vpop.f32.mrb[0].mxu0
      %1613 = vmatprep.mubr.f32.mxu0 0.0
      %1614 = vmatmul.mubr.f32.gmra.mrb[0].mxu0 %v1444
      %v1615 = vpop.f32.mrb[0].mxu0
      %v1616 = vadd.f32 0.0, %v1615
      %v1617 = vpop.f32.mrb[0].mxu0
      %1618 = vmatprep.mubr.f32.mxu0 0.0
      %1619 = vmatmul.mubr.f32.gmra.mrb[0].mxu0 %v1447
      %v1620 = vpop.f32.mrb[0].mxu0
      %v1621 = vadd.f32 0.0, %v1620
      %v1622 = vpop.f32.mrb[0].mxu0
      %1623 = vmatprep.mubr.f32.mxu0 0.0
      %1624 = vmatmul.mubr.f32.gmra.mrb[0].mxu0 %v1450
      %v1625 = vpop.f32.mrb[0].mxu0
      %v1626 = vadd.f32 0.0, %v1625
      %v1627 = vpop.f32.mrb[0].mxu0
      %1628 = vmatprep.mubr.f32.mxu0 0.0
      %1629 = vmatmul.mubr.f32.gmra.mrb[0].mxu0 %v1453
      %v1630 = vpop.f32.mrb[0].mxu0
      %v1631 = vadd.f32 0.0, %v1630
      %v1632 = vpop.f32.mrb[0].mxu0
      %1633 = vmatprep.mubr.f32.mxu0 0.0
      %1634 = vmatmul.mubr.f32.gmra.mrb[0].mxu0 %v1456
      %v1635 = vpop.f32.mrb[0].mxu0
      %v1636 = vadd.f32 0.0, %v1635
      %v1637 = vpop.f32.mrb[0].mxu0
      %1638 = vmatprep.mubr.f32.mxu0 0.0
      %1639 = vmatmul.mubr.f32.gmra.mrb[0].mxu0 %v1459
      %v1640 = vpop.f32.mrb[0].mxu0
      %v1641 = vadd.f32 0.0, %v1640
      %v1642 = vpop.f32.mrb[0].mxu0
      %1643 = vmatprep.mubr.f32.mxu0 0.0
      %1644 = vmatmul.mubr.f32.gmra.mrb[0].mxu0 %v1462
      %v1645 = vpop.f32.mrb[0].mxu0
      %v1646 = vadd.f32 0.0, %v1645
      %v1647 = vpop.f32.mrb[0].mxu0
      %1648 = vmatprep.mubr.f32.mxu0 0.0
      %1649 = vmatmul.mubr.f32.gmra.mrb[0].mxu0 %v1465
      %v1650 = vpop.f32.mrb[0].mxu0
      %v1651 = vadd.f32 0.0, %v1650
      %v1652 = vpop.f32.mrb[0].mxu0
      %1653 = vmatprep.mubr.f32.mxu0 0.0
      %1654 = vmatmul.mubr.f32.gmra.mrb[0].mxu0 %v1468
      %v1655 = vpop.f32.mrb[0].mxu0
      %v1656 = vadd.f32 0.0, %v1655
      %v1657 = vpop.f32.mrb[0].mxu0
      %1658 = vmatprep.mubr.f32.mxu0 0.0
      %1659 = vmatmul.mubr.f32.gmra.mrb[0].mxu0 %v1471
      %v1660 = vpop.f32.mrb[0].mxu0
      %v1661 = vadd.f32 0.0, %v1660
      %v1662 = vpop.f32.mrb[0].mxu0
      %1663 = vmatprep.mubr.f32.mxu0 0.0
      %1664 = vmatmul.mubr.f32.gmra.mrb[0].mxu0 %v1474
      %v1665 = vpop.f32.mrb[0].mxu0
      %v1666 = vadd.f32 0.0, %v1665
      %v1667 = vpop.f32.mrb[0].mxu0
      %1668 = vmatprep.mubr.f32.mxu0 0.0
      %1669 = vmatmul.mubr.f32.gmra.mrb[0].mxu0 %v1477
      %v1670 = vpop.f32.mrb[0].mxu0
      %v1671 = vadd.f32 0.0, %v1670
      %v1672 = vpop.f32.mrb[0].mxu0
      %1673 = vmatprep.mubr.f32.mxu0 0.0
      %1674 = vmatmul.mubr.f32.gmra.mrb[0].mxu0 %v1480
      %v1675 = vpop.f32.mrb[0].mxu0
      %v1676 = vadd.f32 0.0, %v1675
      %v1677 = vpop.f32.mrb[0].mxu0
      %1678 = vmatprep.mubr.f32.mxu0 0.0
      %1679 = vmatmul.mubr.f32.gmra.mrb[0].mxu0 %v1483
      %v1680 = vpop.f32.mrb[0].mxu0
      %v1681 = vadd.f32 0.0, %v1680
      %v1682 = vpop.f32.mrb[0].mxu0
      %1683 = vmatprep.mubr.f32.mxu0 0.0
      %1684 = vmatmul.mubr.f32.gmra.mrb[0].mxu0 %v1486
      %v1685 = vpop.f32.mrb[0].mxu0
      %v1686 = vadd.f32 0.0, %v1685
      %v1687 = vpop.f32.mrb[0].mxu0
      %1688 = vmatprep.mubr.f32.mxu0 0.0
      %1689 = vmatmul.mubr.f32.gmra.mrb[0].mxu0 %v1489
      %v1690 = vpop.f32.mrb[0].mxu0
      %v1691 = vadd.f32 0.0, %v1690
      %v1692 = vpop.f32.mrb[0].mxu0
      %1693 = vmatprep.mubr.f32.mxu0 0.0
      %1694 = vmatmul.mubr.f32.gmra.mrb[0].mxu0 %v1492
      %v1695 = vpop.f32.mrb[0].mxu0
      %v1696 = vadd.f32 0.0, %v1695
      %v1697 = vpop.f32.mrb[0].mxu0
      %1698 = vmatprep.mubr.f32.mxu0 0.0
      %1699 = vmatmul.mubr.f32.gmra.mrb[0].mxu0 %v1495
      %v1700 = vpop.f32.mrb[0].mxu0
      %v1701 = vadd.f32 0.0, %v1700
      %v1702 = vpop.f32.mrb[0].mxu0
      %1703 = vmatprep.mubr.f32.mxu0 0.0
      %1704 = vmatmul.mubr.f32.gmra.mrb[0].mxu0 %v1498
      %v1705 = vpop.f32.mrb[0].mxu0
      %v1706 = vadd.f32 0.0, %v1705
      %v1707 = vpop.f32.mrb[0].mxu0
      %1708 = vmatprep.mubr.f32.mxu0 0.0
      %1709 = vmatmul.mubr.f32.gmra.mrb[0].mxu0 %v1501
      %v1710 = vpop.f32.mrb[0].mxu0
      %v1711 = vadd.f32 0.0, %v1710
      %v1712 = vpop.f32.mrb[0].mxu0
      %1713 = vmatprep.mubr.f32.mxu0 0.0
      %1714 = vmatmul.mubr.f32.gmra.mrb[0].mxu0 %v1504
      %v1715 = vpop.f32.mrb[0].mxu0
      %v1716 = vadd.f32 0.0, %v1715
      %v1717 = vpop.f32.mrb[0].mxu0
      %1718 = vmatprep.mubr.f32.mxu0 0.0
      %1719 = vmatmul.mubr.f32.gmra.mrb[0].mxu0 %v1507
      %v1720 = vpop.f32.mrb[0].mxu0
      %v1721 = vadd.f32 0.0, %v1720
      %v1722 = vpop.f32.mrb[0].mxu0
      %1723 = vmatprep.mubr.f32.mxu0 0.0
      %1724 = vmatmul.mubr.f32.gmra.mrb[0].mxu0 %v1510
      %v1725 = vpop.f32.mrb[0].mxu0
      %v1726 = vadd.f32 0.0, %v1725
      %v1727 = vpop.f32.mrb[0].mxu0
      %1728 = vmatprep.mubr.f32.mxu0 0.0
      %1729 = vmatmul.mubr.f32.gmra.mrb[0].mxu0 %v1513
      %v1730 = vpop.f32.mrb[0].mxu0
      %v1731 = vadd.f32 0.0, %v1730
      %v1732 = vpop.f32.mrb[0].mxu0
      %1733 = vmatprep.mubr.f32.mxu0 0.0
      %1734 = vmatmul.mubr.f32.gmra.mrb[0].mxu0 %v1516
      %v1735 = vpop.f32.mrb[0].mxu0
      %v1736 = vadd.f32 0.0, %v1735
      %v1737 = vpop.f32.mrb[0].mxu0
      %1738 = vmatprep.mubr.f32.mxu0 0.0
      %1739 = vmatmul.mubr.f32.gmra.mrb[0].mxu0 %v1519
      %v1740 = vpop.f32.mrb[0].mxu0
      %v1741 = vadd.f32 0.0, %v1740
      %v1742 = vpop.f32.mrb[0].mxu0
      %1743 = vmatprep.mubr.f32.mxu0 0.0
      %1744 = vmatmul.mubr.f32.gmra.mrb[0].mxu0 %v1522
      %v1745 = vpop.f32.mrb[0].mxu0
      %v1746 = vadd.f32 0.0, %v1745
      %v1747 = vpop.f32.mrb[0].mxu0
      %1748 = vmatprep.mubr.f32.mxu0 0.0
      %1749 = vmatmul.mubr.f32.gmra.mrb[0].mxu0 %v1525
      %v1750 = vpop.f32.mrb[0].mxu0
      %v1751 = vadd.f32 0.0, %v1750
      %v1752 = vpop.f32.mrb[0].mxu0
      %1753 = vmatprep.mubr.f32.mxu0 0.0
      %1754 = vmatmul.mubr.f32.gmra.mrb[0].mxu0 %v1528
      %v1755 = vpop.f32.mrb[0].mxu0
      %v1756 = vadd.f32 0.0, %v1755
      %v1757 = vpop.f32.mrb[0].mxu0
      %1758 = vdwg.mxu0
      %v1760 = vsel %vm1433, %v751, 0
      %v1763 = vsel %vm1433, %v752, 0
      %v1766 = vsel %vm1433, %v753, 0
      %v1769 = vsel %vm1433, %v754, 0
      %v1772 = vsel %vm1433, %v755, 0
      %v1775 = vsel %vm1433, %v756, 0
      %v1778 = vsel %vm1433, %v757, 0
      %v1781 = vsel %vm1433, %v758, 0
      %v1784 = vsel %vm1433, %v759, 0
      %v1787 = vsel %vm1433, %v760, 0
      %v1790 = vsel %vm1433, %v761, 0
      %v1793 = vsel %vm1433, %v762, 0
      %v1796 = vsel %vm1433, %v763, 0
      %v1799 = vsel %vm1433, %v764, 0
      %v1802 = vsel %vm1433, %v765, 0
      %v1805 = vsel %vm1433, %v766, 0
      %v1808 = vsel %vm1433, %v767, 0
      %v1811 = vsel %vm1433, %v768, 0
      %v1814 = vsel %vm1433, %v769, 0
      %v1817 = vsel %vm1433, %v770, 0
      %v1820 = vsel %vm1433, %v771, 0
      %v1823 = vsel %vm1433, %v772, 0
      %v1826 = vsel %vm1433, %v773, 0
      %v1829 = vsel %vm1433, %v774, 0
      %v1832 = vsel %vm1433, %v775, 0
      %v1835 = vsel %vm1433, %v776, 0
      %v1838 = vsel %vm1433, %v777, 0
      %v1841 = vsel %vm1433, %v778, 0
      %v1844 = vsel %vm1433, %v779, 0
      %v1847 = vsel %vm1433, %v780, 0
      %v1850 = vsel %vm1433, %v781, 0
      %v1853 = vsel %vm1433, %v782, 0
      %v1856 = vsel %vm1530, %v783, 0
      %1858 = vmatprep.subr.mxu0 0.0
      %1859 = vmatpush1.msra.mxu0 %v1856
      %1860 = vmatprep.subr.mxu0 0.0
      %1861 = vmatpush1.msra.mxu0 0.0
      %1862 = vmatprep.subr.mxu0 0.0
      %1863 = vmatpush1.msra.mxu0 0.0
      %1864 = vmatprep.subr.mxu0 0.0
      %1865 = vmatpush1.msra.mxu0 0.0
      %1866 = vmatprep.subr.mxu0 0.0
      %1867 = vmatpush1.msra.mxu0 0.0
      %1868 = vmatprep.subr.mxu0 0.0
      %1869 = vmatpush1.msra.mxu0 0.0
      %1870 = vmatprep.subr.mxu0 0.0
      %1871 = vmatpush1.msra.mxu0 0.0
      %1872 = vmatprep.subr.mxu0 0.0
      %1873 = vmatpush1.msra.mxu0 0.0
      %1874 = vmatprep.subr.mxu0 0.0
      %1875 = vmatpush1.msra.mxu0 0.0
      %1876 = vmatprep.subr.mxu0 0.0
      %1877 = vmatpush1.msra.mxu0 0.0
      %1878 = vmatprep.subr.mxu0 0.0
      %1879 = vmatpush1.msra.mxu0 0.0
      %1880 = vmatprep.subr.mxu0 0.0
      %1881 = vmatpush1.msra.mxu0 0.0
      %1882 = vmatprep.subr.mxu0 0.0
      %1883 = vmatpush1.msra.mxu0 0.0
      %1884 = vmatprep.subr.mxu0 0.0
      %1885 = vmatpush1.msra.mxu0 0.0
      %1886 = vmatprep.subr.mxu0 0.0
      %1887 = vmatpush1.msra.mxu0 0.0
      %1888 = vmatprep.subr.mxu0 0.0
      %1889 = vmatpush1.msra.mxu0 0.0
      %1890 = vmatprep.subr.mxu0 0.0
      %1891 = vmatpush1.msra.mxu0 0.0
      %1892 = vmatprep.subr.mxu0 0.0
      %1893 = vmatpush1.msra.mxu0 0.0
      %1894 = vmatprep.subr.mxu0 0.0
      %1895 = vmatpush1.msra.mxu0 0.0
      %1896 = vmatprep.subr.mxu0 0.0
      %1897 = vmatpush1.msra.mxu0 0.0
      %1898 = vmatprep.subr.mxu0 0.0
      %1899 = vmatpush1.msra.mxu0 0.0
      %1900 = vmatprep.subr.mxu0 0.0
      %1901 = vmatpush1.msra.mxu0 0.0
      %1902 = vmatprep.subr.mxu0 0.0
      %1903 = vmatpush1.msra.mxu0 0.0
      %1904 = vmatprep.subr.mxu0 0.0
      %1905 = vmatpush1.msra.mxu0 0.0
      %1906 = vmatprep.subr.mxu0 0.0
      %1907 = vmatpush1.msra.mxu0 0.0
      %1908 = vmatprep.subr.mxu0 0.0
      %1909 = vmatpush1.msra.mxu0 0.0
      %1910 = vmatprep.subr.mxu0 0.0
      %1911 = vmatpush1.msra.mxu0 0.0
      %1912 = vmatprep.subr.mxu0 0.0
      %1913 = vmatpush1.msra.mxu0 0.0
      %1914 = vmatprep.subr.mxu0 0.0
      %1915 = vmatpush1.msra.mxu0 0.0
      %1916 = vmatprep.subr.mxu0 0.0
      %1917 = vmatpush1.msra.mxu0 0.0
      %1918 = vmatprep.subr.mxu0 0.0
      %1919 = vmatpush1.msra.mxu0 0.0
      %1920 = vmatprep.subr.mxu0 0.0
      %1921 = vmatpush1.msra.mxu0 0.0
      %1922 = vmatprep.mubr.f32.mxu0 0.0
      %1923 = vmatmul.mubr.f32.gmra.mrb[0].mxu0 %v1760
      %v1924 = vpop.f32.mrb[0].mxu0
      %v1925 = vadd.f32 %v1601, %v1924
      %v1926 = vpop.f32.mrb[0].mxu0
      %1927 = vmatprep.mubr.f32.mxu0 0.0
      %1928 = vmatmul.mubr.f32.gmra.mrb[0].mxu0 %v1763
      %v1929 = vpop.f32.mrb[0].mxu0
      %v1930 = vadd.f32 %v1606, %v1929
      %v1931 = vpop.f32.mrb[0].mxu0
      %1932 = vmatprep.mubr.f32.mxu0 0.0
      %1933 = vmatmul.mubr.f32.gmra.mrb[0].mxu0 %v1766
      %v1934 = vpop.f32.mrb[0].mxu0
      %v1935 = vadd.f32 %v1611, %v1934
      %v1936 = vpop.f32.mrb[0].mxu0
      %1937 = vmatprep.mubr.f32.mxu0 0.0
      %1938 = vmatmul.mubr.f32.gmra.mrb[0].mxu0 %v1769
      %v1939 = vpop.f32.mrb[0].mxu0
      %v1940 = vadd.f32 %v1616, %v1939
      %v1941 = vpop.f32.mrb[0].mxu0
      %1942 = vmatprep.mubr.f32.mxu0 0.0
      %1943 = vmatmul.mubr.f32.gmra.mrb[0].mxu0 %v1772
      %v1944 = vpop.f32.mrb[0].mxu0
      %v1945 = vadd.f32 %v1621, %v1944
      %v1946 = vpop.f32.mrb[0].mxu0
      %1947 = vmatprep.mubr.f32.mxu0 0.0
      %1948 = vmatmul.mubr.f32.gmra.mrb[0].mxu0 %v1775
      %v1949 = vpop.f32.mrb[0].mxu0
      %v1950 = vadd.f32 %v1626, %v1949
      %v1951 = vpop.f32.mrb[0].mxu0
      %1952 = vmatprep.mubr.f32.mxu0 0.0
      %1953 = vmatmul.mubr.f32.gmra.mrb[0].mxu0 %v1778
      %v1954 = vpop.f32.mrb[0].mxu0
      %v1955 = vadd.f32 %v1631, %v1954
      %v1956 = vpop.f32.mrb[0].mxu0
      %1957 = vmatprep.mubr.f32.mxu0 0.0
      %1958 = vmatmul.mubr.f32.gmra.mrb[0].mxu0 %v1781
      %v1959 = vpop.f32.mrb[0].mxu0
      %v1960 = vadd.f32 %v1636, %v1959
      %v1961 = vpop.f32.mrb[0].mxu0
      %1962 = vmatprep.mubr.f32.mxu0 0.0
      %1963 = vmatmul.mubr.f32.gmra.mrb[0].mxu0 %v1784
      %v1964 = vpop.f32.mrb[0].mxu0
      %v1965 = vadd.f32 %v1641, %v1964
      %v1966 = vpop.f32.mrb[0].mxu0
      %1967 = vmatprep.mubr.f32.mxu0 0.0
      %1968 = vmatmul.mubr.f32.gmra.mrb[0].mxu0 %v1787
      %v1969 = vpop.f32.mrb[0].mxu0
      %v1970 = vadd.f32 %v1646, %v1969
      %v1971 = vpop.f32.mrb[0].mxu0
      %1972 = vmatprep.mubr.f32.mxu0 0.0
      %1973 = vmatmul.mubr.f32.gmra.mrb[0].mxu0 %v1790
      %v1974 = vpop.f32.mrb[0].mxu0
      %v1975 = vadd.f32 %v1651, %v1974
      %v1976 = vpop.f32.mrb[0].mxu0
      %1977 = vmatprep.mubr.f32.mxu0 0.0
      %1978 = vmatmul.mubr.f32.gmra.mrb[0].mxu0 %v1793
      %v1979 = vpop.f32.mrb[0].mxu0
      %v1980 = vadd.f32 %v1656, %v1979
      %v1981 = vpop.f32.mrb[0].mxu0
      %1982 = vmatprep.mubr.f32.mxu0 0.0
      %1983 = vmatmul.mubr.f32.gmra.mrb[0].mxu0 %v1796
      %v1984 = vpop.f32.mrb[0].mxu0
      %v1985 = vadd.f32 %v1661, %v1984
      %v1986 = vpop.f32.mrb[0].mxu0
      %1987 = vmatprep.mubr.f32.mxu0 0.0
      %1988 = vmatmul.mubr.f32.gmra.mrb[0].mxu0 %v1799
      %v1989 = vpop.f32.mrb[0].mxu0
      %v1990 = vadd.f32 %v1666, %v1989
      %v1991 = vpop.f32.mrb[0].mxu0
      %1992 = vmatprep.mubr.f32.mxu0 0.0
      %1993 = vmatmul.mubr.f32.gmra.mrb[0].mxu0 %v1802
      %v1994 = vpop.f32.mrb[0].mxu0
      %v1995 = vadd.f32 %v1671, %v1994
      %v1996 = vpop.f32.mrb[0].mxu0
      %1997 = vmatprep.mubr.f32.mxu0 0.0
      %1998 = vmatmul.mubr.f32.gmra.mrb[0].mxu0 %v1805
      %v1999 = vpop.f32.mrb[0].mxu0
      %v2000 = vadd.f32 %v1676, %v1999
      %v2001 = vpop.f32.mrb[0].mxu0
      %2002 = vmatprep.mubr.f32.mxu0 0.0
      %2003 = vmatmul.mubr.f32.gmra.mrb[0].mxu0 %v1808
      %v2004 = vpop.f32.mrb[0].mxu0
      %v2005 = vadd.f32 %v1681, %v2004
      %v2006 = vpop.f32.mrb[0].mxu0
      %2007 = vmatprep.mubr.f32.mxu0 0.0
      %2008 = vmatmul.mubr.f32.gmra.mrb[0].mxu0 %v1811
      %v2009 = vpop.f32.mrb[0].mxu0
      %v2010 = vadd.f32 %v1686, %v2009
      %v2011 = vpop.f32.mrb[0].mxu0
      %2012 = vmatprep.mubr.f32.mxu0 0.0
      %2013 = vmatmul.mubr.f32.gmra.mrb[0].mxu0 %v1814
      %v2014 = vpop.f32.mrb[0].mxu0
      %v2015 = vadd.f32 %v1691, %v2014
      %v2016 = vpop.f32.mrb[0].mxu0
      %2017 = vmatprep.mubr.f32.mxu0 0.0
      %2018 = vmatmul.mubr.f32.gmra.mrb[0].mxu0 %v1817
      %v2019 = vpop.f32.mrb[0].mxu0
      %v2020 = vadd.f32 %v1696, %v2019
      %v2021 = vpop.f32.mrb[0].mxu0
      %2022 = vmatprep.mubr.f32.mxu0 0.0
      %2023 = vmatmul.mubr.f32.gmra.mrb[0].mxu0 %v1820
      %v2024 = vpop.f32.mrb[0].mxu0
      %v2025 = vadd.f32 %v1701, %v2024
      %v2026 = vpop.f32.mrb[0].mxu0
      %2027 = vmatprep.mubr.f32.mxu0 0.0
      %2028 = vmatmul.mubr.f32.gmra.mrb[0].mxu0 %v1823
      %v2029 = vpop.f32.mrb[0].mxu0
      %v2030 = vadd.f32 %v1706, %v2029
      %v2031 = vpop.f32.mrb[0].mxu0
      %2032 = vmatprep.mubr.f32.mxu0 0.0
      %2033 = vmatmul.mubr.f32.gmra.mrb[0].mxu0 %v1826
      %v2034 = vpop.f32.mrb[0].mxu0
      %v2035 = vadd.f32 %v1711, %v2034
      %v2036 = vpop.f32.mrb[0].mxu0
      %2037 = vmatprep.mubr.f32.mxu0 0.0
      %2038 = vmatmul.mubr.f32.gmra.mrb[0].mxu0 %v1829
      %v2039 = vpop.f32.mrb[0].mxu0
      %v2040 = vadd.f32 %v1716, %v2039
      %v2041 = vpop.f32.mrb[0].mxu0
      %2042 = vmatprep.mubr.f32.mxu0 0.0
      %2043 = vmatmul.mubr.f32.gmra.mrb[0].mxu0 %v1832
      %v2044 = vpop.f32.mrb[0].mxu0
      %v2045 = vadd.f32 %v1721, %v2044
      %v2046 = vpop.f32.mrb[0].mxu0
      %2047 = vmatprep.mubr.f32.mxu0 0.0
      %2048 = vmatmul.mubr.f32.gmra.mrb[0].mxu0 %v1835
      %v2049 = vpop.f32.mrb[0].mxu0
      %v2050 = vadd.f32 %v1726, %v2049
      %v2051 = vpop.f32.mrb[0].mxu0
      %2052 = vmatprep.mubr.f32.mxu0 0.0
      %2053 = vmatmul.mubr.f32.gmra.mrb[0].mxu0 %v1838
      %v2054 = vpop.f32.mrb[0].mxu0
      %v2055 = vadd.f32 %v1731, %v2054
      %v2056 = vpop.f32.mrb[0].mxu0
      %2057 = vmatprep.mubr.f32.mxu0 0.0
      %2058 = vmatmul.mubr.f32.gmra.mrb[0].mxu0 %v1841
      %v2059 = vpop.f32.mrb[0].mxu0
      %v2060 = vadd.f32 %v1736, %v2059
      %v2061 = vpop.f32.mrb[0].mxu0
      %2062 = vmatprep.mubr.f32.mxu0 0.0
      %2063 = vmatmul.mubr.f32.gmra.mrb[0].mxu0 %v1844
      %v2064 = vpop.f32.mrb[0].mxu0
      %v2065 = vadd.f32 %v1741, %v2064
      %v2066 = vpop.f32.mrb[0].mxu0
      %2067 = vmatprep.mubr.f32.mxu0 0.0
      %2068 = vmatmul.mubr.f32.gmra.mrb[0].mxu0 %v1847
      %v2069 = vpop.f32.mrb[0].mxu0
      %v2070 = vadd.f32 %v1746, %v2069
      %v2071 = vpop.f32.mrb[0].mxu0
      %2072 = vmatprep.mubr.f32.mxu0 0.0
      %2073 = vmatmul.mubr.f32.gmra.mrb[0].mxu0 %v1850
      %v2074 = vpop.f32.mrb[0].mxu0
      %v2075 = vadd.f32 %v1751, %v2074
      %v2076 = vpop.f32.mrb[0].mxu0
      %2077 = vmatprep.mubr.f32.mxu0 0.0
      %2078 = vmatmul.mubr.f32.gmra.mrb[0].mxu0 %v1853
      %v2079 = vpop.f32.mrb[0].mxu0
      %v2080 = vadd.f32 %v1756, %v2079
      %v2081 = vpop.f32.mrb[0].mxu0
      %2082 = vdwg.mxu0
      %v2083 = vmax.f32 %v1399, -3.4028235e+38
      %v2084 = vmax.f32 %v1400, -3.4028235e+38
      %v2085 = vmax.f32 %v1399, %v1401
      %v2086 = vmax.f32 %v1400, %v1402
      %v2087 = vmax.f32 %v1401, %v1403
      %v2088 = vmax.f32 %v1402, %v1404
      %v2089 = vmax.f32 %v1403, %v1405
      %v2090 = vmax.f32 %v1404, %v1406
      %v2091 = vmax.f32 %v1405, %v1407
      %v2092 = vmax.f32 %v1406, %v1408
      %v2093 = vmax.f32 %v1407, %v1409
      %v2094 = vmax.f32 %v1408, %v1410
      %v2095 = vmax.f32 %v1409, %v1411
      %v2096 = vmax.f32 %v1410, %v1412
      %v2097 = vmax.f32 %v1411, %v1413
      %v2098 = vmax.f32 %v1412, %v1414
      %v2099 = vmax.f32 %v1413, %v1415
      %v2100 = vmax.f32 %v1414, %v1416
      %v2101 = vmax.f32 %v1415, %v1417
      %v2102 = vmax.f32 %v1416, %v1418
      %v2103 = vmax.f32 %v1417, %v1419
      %v2104 = vmax.f32 %v1418, %v1420
      %v2105 = vmax.f32 %v1419, %v1421
      %v2106 = vmax.f32 %v1420, %v1422
      %v2107 = vmax.f32 %v1421, %v1423
      %v2108 = vmax.f32 %v1422, %v1424
      %v2109 = vmax.f32 %v1423, %v1425
      %v2110 = vmax.f32 %v1424, %v1426
      %v2111 = vmax.f32 %v1425, %v1427
      %v2112 = vmax.f32 %v1426, %v1428
      %v2113 = vmax.f32 %v2083, %v1401
      %v2114 = vmax.f32 %v2084, %v1402
      %v2115 = vmax.f32 %v2085, %v1403
      %v2116 = vmax.f32 %v2086, %v1404
      %v2117 = vmax.f32 %v2087, %v1405
      %v2118 = vmax.f32 %v2088, %v1406
      %v2119 = vmax.f32 %v2089, %v1407
      %v2120 = vmax.f32 %v2090, %v1408
      %v2121 = vmax.f32 %v2091, %v1409
      %v2122 = vmax.f32 %v2092, %v1410
      %v2123 = vmax.f32 %v2093, %v1411
      %v2124 = vmax.f32 %v2094, %v1412
      %v2125 = vmax.f32 %v2095, %v1413
      %v2126 = vmax.f32 %v2096, %v1414
      %v2127 = vmax.f32 %v2097, %v1415
      %v2128 = vmax.f32 %v2098, %v1416
      %v2129 = vmax.f32 %v2099, %v1417
      %v2130 = vmax.f32 %v2100, %v1418
      %v2131 = vmax.f32 %v2101, %v1419
      %v2132 = vmax.f32 %v2102, %v1420
      %v2133 = vmax.f32 %v2103, %v1421
      %v2134 = vmax.f32 %v2104, %v1422
      %v2135 = vmax.f32 %v2105, %v1423
      %v2136 = vmax.f32 %v2106, %v1424
      %v2137 = vmax.f32 %v2107, %v1425
      %v2138 = vmax.f32 %v2108, %v1426
      %v2139 = vmax.f32 %v2109, %v1427
      %v2140 = vmax.f32 %v2110, %v1428
      %v2141 = vmax.f32 %v2111, %v1429
      %v2142 = vmax.f32 %v2112, %v1430
      %v2143 = vmax.f32 %v2113, %v1403
      %v2144 = vmax.f32 %v2114, %v1404
      %v2145 = vmax.f32 %v2115, %v1405
      %v2146 = vmax.f32 %v2116, %v1406
      %v2147 = vmax.f32 %v2117, %v1407
      %v2148 = vmax.f32 %v2118, %v1408
      %v2149 = vmax.f32 %v2119, %v1409
      %v2150 = vmax.f32 %v2120, %v1410
      %v2151 = vmax.f32 %v2121, %v1411
      %v2152 = vmax.f32 %v2122, %v1412
      %v2153 = vmax.f32 %v2123, %v1413
      %v2154 = vmax.f32 %v2124, %v1414
      %v2155 = vmax.f32 %v2125, %v1415
      %v2156 = vmax.f32 %v2126, %v1416
      %v2157 = vmax.f32 %v2127, %v1417
      %v2158 = vmax.f32 %v2128, %v1418
      %v2159 = vmax.f32 %v2129, %v1419
      %v2160 = vmax.f32 %v2130, %v1420
      %v2161 = vmax.f32 %v2131, %v1421
      %v2162 = vmax.f32 %v2132, %v1422
      %v2163 = vmax.f32 %v2133, %v1423
      %v2164 = vmax.f32 %v2134, %v1424
      %v2165 = vmax.f32 %v2135, %v1425
      %v2166 = vmax.f32 %v2136, %v1426
      %v2167 = vmax.f32 %v2137, %v1427
      %v2168 = vmax.f32 %v2138, %v1428
      %v2169 = vmax.f32 %v2139, %v1429
      %v2170 = vmax.f32 %v2140, %v1430
      %v2171 = vmax.f32 %v2141, -3.4028235e+38
      %v2172 = vmax.f32 %v2142, -3.4028235e+38
      %v2173 = vmax.f32 %v2143, %v1405
      %v2174 = vmax.f32 %v2144, %v1406
      %v2175 = vmax.f32 %v2145, %v1407
      %v2176 = vmax.f32 %v2146, %v1408
      %v2177 = vmax.f32 %v2147, %v1409
      %v2178 = vmax.f32 %v2148, %v1410
      %v2179 = vmax.f32 %v2149, %v1411
      %v2180 = vmax.f32 %v2150, %v1412
      %v2181 = vmax.f32 %v2151, %v1413
      %v2182 = vmax.f32 %v2152, %v1414
      %v2183 = vmax.f32 %v2153, %v1415
      %v2184 = vmax.f32 %v2154, %v1416
      %v2185 = vmax.f32 %v2155, %v1417
      %v2186 = vmax.f32 %v2156, %v1418
      %v2187 = vmax.f32 %v2157, %v1419
      %v2188 = vmax.f32 %v2158, %v1420
      %v2189 = vmax.f32 %v2159, %v1421
      %v2190 = vmax.f32 %v2160, %v1422
      %v2191 = vmax.f32 %v2161, %v1423
      %v2192 = vmax.f32 %v2162, %v1424
      %v2193 = vmax.f32 %v2163, %v1425
      %v2194 = vmax.f32 %v2164, %v1426
      %v2195 = vmax.f32 %v2165, %v1427
      %v2196 = vmax.f32 %v2166, %v1428
      %v2197 = vmax.f32 %v2167, %v1429
      %v2198 = vmax.f32 %v2168, %v1430
      %v2199 = vmax.f32 %v2169, -3.4028235e+38
      %v2200 = vmax.f32 %v2170, -3.4028235e+38
      %v2201 = vmax.f32 %v2171, -3.4028235e+38
      %v2202 = vmax.f32 %v2172, -3.4028235e+38
      %v2203 = vrot.slane %v2143, 1
      %v2204 = vrot.slane %v2173, 1
      %v2205 = vrot.slane %v2175, 1
      %v2206 = vrot.slane %v2177, 1
      %v2207 = vrot.slane %v2179, 1
      %v2208 = vrot.slane %v2181, 1
      %v2209 = vrot.slane %v2183, 1
      %v2210 = vrot.slane %v2185, 1
      %v2211 = vrot.slane %v2187, 1
      %v2212 = vrot.slane %v2189, 1
      %v2213 = vrot.slane %v2191, 1
      %v2214 = vrot.slane %v2193, 1
      %v2215 = vrot.slane %v2195, 1
      %v2216 = vrot.slane %v2197, 1
      %v2217 = vrot.slane %v2199, 1
      %v2218 = vrot.slane %v2201, 1
      %v2219 = vrot.slane %v2144, 1
      %v2220 = vrot.slane %v2174, 1
      %v2221 = vrot.slane %v2176, 1
      %v2222 = vrot.slane %v2178, 1
      %v2223 = vrot.slane %v2180, 1
      %v2224 = vrot.slane %v2182, 1
      %v2225 = vrot.slane %v2184, 1
      %v2226 = vrot.slane %v2186, 1
      %v2227 = vrot.slane %v2188, 1
      %v2228 = vrot.slane %v2190, 1
      %v2229 = vrot.slane %v2192, 1
      %v2230 = vrot.slane %v2194, 1
      %v2231 = vrot.slane %v2196, 1
      %v2232 = vrot.slane %v2198, 1
      %v2233 = vrot.slane %v2200, 1
      %v2234 = vrot.slane %v2202, 1
      %v2235 = vsel %vm939, %v2203, %v2219
      %v2236 = vsel %vm939, %v2204, %v2220
      %v2237 = vsel %vm939, %v2205, %v2221
      %v2238 = vsel %vm939, %v2206, %v2222
      %v2239 = vsel %vm939, %v2207, %v2223
      %v2240 = vsel %vm939, %v2208, %v2224
      %v2241 = vsel %vm939, %v2209, %v2225
      %v2242 = vsel %vm939, %v2210, %v2226
      %v2243 = vsel %vm939, %v2211, %v2227
      %v2244 = vsel %vm939, %v2212, %v2228
      %v2245 = vsel %vm939, %v2213, %v2229
      %v2246 = vsel %vm939, %v2214, %v2230
      %v2247 = vsel %vm939, %v2215, %v2231
      %v2248 = vsel %vm939, %v2216, %v2232
      %v2249 = vsel %vm939, %v2217, %v2233
      %v2250 = vsel %vm939, %v2218, %v2234
      %v2251 = vsel %vm939, %v2219, %v2203
      %v2252 = vsel %vm939, %v2220, %v2204
      %v2253 = vsel %vm939, %v2221, %v2205
      %v2254 = vsel %vm939, %v2222, %v2206
      %v2255 = vsel %vm939, %v2223, %v2207
      %v2256 = vsel %vm939, %v2224, %v2208
      %v2257 = vsel %vm939, %v2225, %v2209
      %v2258 = vsel %vm939, %v2226, %v2210
      %v2259 = vsel %vm939, %v2227, %v2211
      %v2260 = vsel %vm939, %v2228, %v2212
      %v2261 = vsel %vm939, %v2229, %v2213
      %v2262 = vsel %vm939, %v2230, %v2214
      %v2263 = vsel %vm939, %v2231, %v2215
      %v2264 = vsel %vm939, %v2232, %v2216
      %v2265 = vsel %vm939, %v2233, %v2217
      %v2266 = vsel %vm939, %v2234, %v2218
      %v2267 = vsel %vm972, %v2235, -3.4028235e+38
      %v2268 = vsel %vm973, %v2251, -3.4028235e+38
      %v2269 = vsel %vm972, %v2236, -3.4028235e+38
      %v2270 = vsel %vm973, %v2252, -3.4028235e+38
      %v2271 = vsel %vm972, %v2237, -3.4028235e+38
      %v2272 = vsel %vm973, %v2253, -3.4028235e+38
      %v2273 = vsel %vm972, %v2238, -3.4028235e+38
      %v2274 = vsel %vm973, %v2254, -3.4028235e+38
      %v2275 = vsel %vm972, %v2239, -3.4028235e+38
      %v2276 = vsel %vm973, %v2255, -3.4028235e+38
      %v2277 = vsel %vm972, %v2240, -3.4028235e+38
      %v2278 = vsel %vm973, %v2256, -3.4028235e+38
      %v2279 = vsel %vm972, %v2241, -3.4028235e+38
      %v2280 = vsel %vm973, %v2257, -3.4028235e+38
      %v2281 = vsel %vm972, %v2242, -3.4028235e+38
      %v2282 = vsel %vm973, %v2258, -3.4028235e+38
      %v2283 = vsel %vm972, %v2243, -3.4028235e+38
      %v2284 = vsel %vm973, %v2259, -3.4028235e+38
      %v2285 = vsel %vm972, %v2244, -3.4028235e+38
      %v2286 = vsel %vm973, %v2260, -3.4028235e+38
      %v2287 = vsel %vm972, %v2245, -3.4028235e+38
      %v2288 = vsel %vm973, %v2261, -3.4028235e+38
      %v2289 = vsel %vm972, %v2246, -3.4028235e+38
      %v2290 = vsel %vm973, %v2262, -3.4028235e+38
      %v2291 = vsel %vm972, %v2247, -3.4028235e+38
      %v2292 = vsel %vm973, %v2263, -3.4028235e+38
      %v2293 = vsel %vm972, %v2248, -3.4028235e+38
      %v2294 = vsel %vm973, %v2264, -3.4028235e+38
      %v2295 = vsel %vm972, %v2249, -3.4028235e+38
      %v2296 = vsel %vm973, %v2265, -3.4028235e+38
      %v2297 = vsel %vm972, %v2250, -3.4028235e+38
      %v2298 = vsel %vm973, %v2266, -3.4028235e+38
      %v2299 = vrot.slane %v2143, 7
      %v2300 = vrot.slane %v2173, 7
      %v2301 = vrot.slane %v2175, 7
      %v2302 = vrot.slane %v2177, 7
      %v2303 = vrot.slane %v2179, 7
      %v2304 = vrot.slane %v2181, 7
      %v2305 = vrot.slane %v2183, 7
      %v2306 = vrot.slane %v2185, 7
      %v2307 = vrot.slane %v2187, 7
      %v2308 = vrot.slane %v2189, 7
      %v2309 = vrot.slane %v2191, 7
      %v2310 = vrot.slane %v2193, 7
      %v2311 = vrot.slane %v2195, 7
      %v2312 = vrot.slane %v2197, 7
      %v2313 = vrot.slane %v2199, 7
      %v2314 = vrot.slane %v2201, 7
      %v2315 = vrot.slane %v2144, 7
      %v2316 = vrot.slane %v2174, 7
      %v2317 = vrot.slane %v2176, 7
      %v2318 = vrot.slane %v2178, 7
      %v2319 = vrot.slane %v2180, 7
      %v2320 = vrot.slane %v2182, 7
      %v2321 = vrot.slane %v2184, 7
      %v2322 = vrot.slane %v2186, 7
      %v2323 = vrot.slane %v2188, 7
      %v2324 = vrot.slane %v2190, 7
      %v2325 = vrot.slane %v2192, 7
      %v2326 = vrot.slane %v2194, 7
      %v2327 = vrot.slane %v2196, 7
      %v2328 = vrot.slane %v2198, 7
      %v2329 = vrot.slane %v2200, 7
      %v2330 = vrot.slane %v2202, 7
      %v2331 = vsel %vm1038, %v2299, %v2315
      %v2332 = vsel %vm1038, %v2300, %v2316
      %v2333 = vsel %vm1038, %v2301, %v2317
      %v2334 = vsel %vm1038, %v2302, %v2318
      %v2335 = vsel %vm1038, %v2303, %v2319
      %v2336 = vsel %vm1038, %v2304, %v2320
      %v2337 = vsel %vm1038, %v2305, %v2321
      %v2338 = vsel %vm1038, %v2306, %v2322
      %v2339 = vsel %vm1038, %v2307, %v2323
      %v2340 = vsel %vm1038, %v2308, %v2324
      %v2341 = vsel %vm1038, %v2309, %v2325
      %v2342 = vsel %vm1038, %v2310, %v2326
      %v2343 = vsel %vm1038, %v2311, %v2327
      %v2344 = vsel %vm1038, %v2312, %v2328
      %v2345 = vsel %vm1038, %v2313, %v2329
      %v2346 = vsel %vm1038, %v2314, %v2330
      %v2347 = vsel %vm1038, %v2315, %v2299
      %v2348 = vsel %vm1038, %v2316, %v2300
      %v2349 = vsel %vm1038, %v2317, %v2301
      %v2350 = vsel %vm1038, %v2318, %v2302
      %v2351 = vsel %vm1038, %v2319, %v2303
      %v2352 = vsel %vm1038, %v2320, %v2304
      %v2353 = vsel %vm1038, %v2321, %v2305
      %v2354 = vsel %vm1038, %v2322, %v2306
      %v2355 = vsel %vm1038, %v2323, %v2307
      %v2356 = vsel %vm1038, %v2324, %v2308
      %v2357 = vsel %vm1038, %v2325, %v2309
      %v2358 = vsel %vm1038, %v2326, %v2310
      %v2359 = vsel %vm1038, %v2327, %v2311
      %v2360 = vsel %vm1038, %v2328, %v2312
      %v2361 = vsel %vm1038, %v2329, %v2313
      %v2362 = vsel %vm1038, %v2330, %v2314
      %v2363 = vsel %vm1071, %v2347, -3.4028235e+38
      %v2364 = vsel %vm1072, %v2331, -3.4028235e+38
      %v2365 = vsel %vm1071, %v2348, -3.4028235e+38
      %v2366 = vsel %vm1072, %v2332, -3.4028235e+38
      %v2367 = vsel %vm1071, %v2349, -3.4028235e+38
      %v2368 = vsel %vm1072, %v2333, -3.4028235e+38
      %v2369 = vsel %vm1071, %v2350, -3.4028235e+38
      %v2370 = vsel %vm1072, %v2334, -3.4028235e+38
      %v2371 = vsel %vm1071, %v2351, -3.4028235e+38
      %v2372 = vsel %vm1072, %v2335, -3.4028235e+38
      %v2373 = vsel %vm1071, %v2352, -3.4028235e+38
      %v2374 = vsel %vm1072, %v2336, -3.4028235e+38
      %v2375 = vsel %vm1071, %v2353, -3.4028235e+38
      %v2376 = vsel %vm1072, %v2337, -3.4028235e+38
      %v2377 = vsel %vm1071, %v2354, -3.4028235e+38
      %v2378 = vsel %vm1072, %v2338, -3.4028235e+38
      %v2379 = vsel %vm1071, %v2355, -3.4028235e+38
      %v2380 = vsel %vm1072, %v2339, -3.4028235e+38
      %v2381 = vsel %vm1071, %v2356, -3.4028235e+38
      %v2382 = vsel %vm1072, %v2340, -3.4028235e+38
      %v2383 = vsel %vm1071, %v2357, -3.4028235e+38
      %v2384 = vsel %vm1072, %v2341, -3.4028235e+38
      %v2385 = vsel %vm1071, %v2358, -3.4028235e+38
      %v2386 = vsel %vm1072, %v2342, -3.4028235e+38
      %v2387 = vsel %vm1071, %v2359, -3.4028235e+38
      %v2388 = vsel %vm1072, %v2343, -3.4028235e+38
      %v2389 = vsel %vm1071, %v2360, -3.4028235e+38
      %v2390 = vsel %vm1072, %v2344, -3.4028235e+38
      %v2391 = vsel %vm1071, %v2361, -3.4028235e+38
      %v2392 = vsel %vm1072, %v2345, -3.4028235e+38
      %v2393 = vsel %vm1071, %v2362, -3.4028235e+38
      %v2394 = vsel %vm1072, %v2346, -3.4028235e+38
      %v2395 = vmax.f32 %v2267, %v2363
      %v2396 = vmax.f32 %v2268, %v2364
      %v2397 = vmax.f32 %v2269, %v2365
      %v2398 = vmax.f32 %v2270, %v2366
      %v2399 = vmax.f32 %v2271, %v2367
      %v2400 = vmax.f32 %v2272, %v2368
      %v2401 = vmax.f32 %v2273, %v2369
      %v2402 = vmax.f32 %v2274, %v2370
      %v2403 = vmax.f32 %v2275, %v2371
      %v2404 = vmax.f32 %v2276, %v2372
      %v2405 = vmax.f32 %v2277, %v2373
      %v2406 = vmax.f32 %v2278, %v2374
      %v2407 = vmax.f32 %v2279, %v2375
      %v2408 = vmax.f32 %v2280, %v2376
      %v2409 = vmax.f32 %v2281, %v2377
      %v2410 = vmax.f32 %v2282, %v2378
      %v2411 = vmax.f32 %v2283, %v2379
      %v2412 = vmax.f32 %v2284, %v2380
      %v2413 = vmax.f32 %v2285, %v2381
      %v2414 = vmax.f32 %v2286, %v2382
      %v2415 = vmax.f32 %v2287, %v2383
      %v2416 = vmax.f32 %v2288, %v2384
      %v2417 = vmax.f32 %v2289, %v2385
      %v2418 = vmax.f32 %v2290, %v2386
      %v2419 = vmax.f32 %v2291, %v2387
      %v2420 = vmax.f32 %v2292, %v2388
      %v2421 = vmax.f32 %v2293, %v2389
      %v2422 = vmax.f32 %v2294, %v2390
      %v2423 = vmax.f32 %v2295, %v2391
      %v2424 = vmax.f32 %v2296, %v2392
      %v2425 = vmax.f32 %v2297, %v2393
      %v2426 = vmax.f32 %v2298, %v2394
      %v2427 = vmax.f32 %v2143, %v2395
      %v2428 = vmax.f32 %v2144, %v2396
      %v2429 = vmax.f32 %v2173, %v2397
      %v2430 = vmax.f32 %v2174, %v2398
      %v2431 = vmax.f32 %v2175, %v2399
      %v2432 = vmax.f32 %v2176, %v2400
      %v2433 = vmax.f32 %v2177, %v2401
      %v2434 = vmax.f32 %v2178, %v2402
      %v2435 = vmax.f32 %v2179, %v2403
      %v2436 = vmax.f32 %v2180, %v2404
      %v2437 = vmax.f32 %v2181, %v2405
      %v2438 = vmax.f32 %v2182, %v2406
      %v2439 = vmax.f32 %v2183, %v2407
      %v2440 = vmax.f32 %v2184, %v2408
      %v2441 = vmax.f32 %v2185, %v2409
      %v2442 = vmax.f32 %v2186, %v2410
      %v2443 = vmax.f32 %v2187, %v2411
      %v2444 = vmax.f32 %v2188, %v2412
      %v2445 = vmax.f32 %v2189, %v2413
      %v2446 = vmax.f32 %v2190, %v2414
      %v2447 = vmax.f32 %v2191, %v2415
      %v2448 = vmax.f32 %v2192, %v2416
      %v2449 = vmax.f32 %v2193, %v2417
      %v2450 = vmax.f32 %v2194, %v2418
      %v2451 = vmax.f32 %v2195, %v2419
      %v2452 = vmax.f32 %v2196, %v2420
      %v2453 = vmax.f32 %v2197, %v2421
      %v2454 = vmax.f32 %v2198, %v2422
      %v2455 = vmax.f32 %v2199, %v2423
      %v2456 = vmax.f32 %v2200, %v2424
      %v2457 = vmax.f32 %v2201, %v2425
      %v2458 = vmax.f32 %v2202, %v2426
      %v2459 = vrot.slane %v2143, 2
      %v2460 = vrot.slane %v2173, 2
      %v2461 = vrot.slane %v2175, 2
      %v2462 = vrot.slane %v2177, 2
      %v2463 = vrot.slane %v2179, 2
      %v2464 = vrot.slane %v2181, 2
      %v2465 = vrot.slane %v2183, 2
      %v2466 = vrot.slane %v2185, 2
      %v2467 = vrot.slane %v2187, 2
      %v2468 = vrot.slane %v2189, 2
      %v2469 = vrot.slane %v2191, 2
      %v2470 = vrot.slane %v2193, 2
      %v2471 = vrot.slane %v2195, 2
      %v2472 = vrot.slane %v2197, 2
      %v2473 = vrot.slane %v2199, 2
      %v2474 = vrot.slane %v2201, 2
      %v2475 = vrot.slane %v2144, 2
      %v2476 = vrot.slane %v2174, 2
      %v2477 = vrot.slane %v2176, 2
      %v2478 = vrot.slane %v2178, 2
      %v2479 = vrot.slane %v2180, 2
      %v2480 = vrot.slane %v2182, 2
      %v2481 = vrot.slane %v2184, 2
      %v2482 = vrot.slane %v2186, 2
      %v2483 = vrot.slane %v2188, 2
      %v2484 = vrot.slane %v2190, 2
      %v2485 = vrot.slane %v2192, 2
      %v2486 = vrot.slane %v2194, 2
      %v2487 = vrot.slane %v2196, 2
      %v2488 = vrot.slane %v2198, 2
      %v2489 = vrot.slane %v2200, 2
      %v2490 = vrot.slane %v2202, 2
      %v2491 = vsel %vm1201, %v2459, %v2475
      %v2492 = vsel %vm1201, %v2460, %v2476
      %v2493 = vsel %vm1201, %v2461, %v2477
      %v2494 = vsel %vm1201, %v2462, %v2478
      %v2495 = vsel %vm1201, %v2463, %v2479
      %v2496 = vsel %vm1201, %v2464, %v2480
      %v2497 = vsel %vm1201, %v2465, %v2481
      %v2498 = vsel %vm1201, %v2466, %v2482
      %v2499 = vsel %vm1201, %v2467, %v2483
      %v2500 = vsel %vm1201, %v2468, %v2484
      %v2501 = vsel %vm1201, %v2469, %v2485
      %v2502 = vsel %vm1201, %v2470, %v2486
      %v2503 = vsel %vm1201, %v2471, %v2487
      %v2504 = vsel %vm1201, %v2472, %v2488
      %v2505 = vsel %vm1201, %v2473, %v2489
      %v2506 = vsel %vm1201, %v2474, %v2490
      %v2507 = vsel %vm1201, %v2475, %v2459
      %v2508 = vsel %vm1201, %v2476, %v2460
      %v2509 = vsel %vm1201, %v2477, %v2461
      %v2510 = vsel %vm1201, %v2478, %v2462
      %v2511 = vsel %vm1201, %v2479, %v2463
      %v2512 = vsel %vm1201, %v2480, %v2464
      %v2513 = vsel %vm1201, %v2481, %v2465
      %v2514 = vsel %vm1201, %v2482, %v2466
      %v2515 = vsel %vm1201, %v2483, %v2467
      %v2516 = vsel %vm1201, %v2484, %v2468
      %v2517 = vsel %vm1201, %v2485, %v2469
      %v2518 = vsel %vm1201, %v2486, %v2470
      %v2519 = vsel %vm1201, %v2487, %v2471
      %v2520 = vsel %vm1201, %v2488, %v2472
      %v2521 = vsel %vm1201, %v2489, %v2473
      %v2522 = vsel %vm1201, %v2490, %v2474
      %v2523 = vsel %vm1234, %v2491, -3.4028235e+38
      %v2524 = vsel %vm1235, %v2507, -3.4028235e+38
      %v2525 = vsel %vm1234, %v2492, -3.4028235e+38
      %v2526 = vsel %vm1235, %v2508, -3.4028235e+38
      %v2527 = vsel %vm1234, %v2493, -3.4028235e+38
      %v2528 = vsel %vm1235, %v2509, -3.4028235e+38
      %v2529 = vsel %vm1234, %v2494, -3.4028235e+38
      %v2530 = vsel %vm1235, %v2510, -3.4028235e+38
      %v2531 = vsel %vm1234, %v2495, -3.4028235e+38
      %v2532 = vsel %vm1235, %v2511, -3.4028235e+38
      %v2533 = vsel %vm1234, %v2496, -3.4028235e+38
      %v2534 = vsel %vm1235, %v2512, -3.4028235e+38
      %v2535 = vsel %vm1234, %v2497, -3.4028235e+38
      %v2536 = vsel %vm1235, %v2513, -3.4028235e+38
      %v2537 = vsel %vm1234, %v2498, -3.4028235e+38
      %v2538 = vsel %vm1235, %v2514, -3.4028235e+38
      %v2539 = vsel %vm1234, %v2499, -3.4028235e+38
      %v2540 = vsel %vm1235, %v2515, -3.4028235e+38
      %v2541 = vsel %vm1234, %v2500, -3.4028235e+38
      %v2542 = vsel %vm1235, %v2516, -3.4028235e+38
      %v2543 = vsel %vm1234, %v2501, -3.4028235e+38
      %v2544 = vsel %vm1235, %v2517, -3.4028235e+38
      %v2545 = vsel %vm1234, %v2502, -3.4028235e+38
      %v2546 = vsel %vm1235, %v2518, -3.4028235e+38
      %v2547 = vsel %vm1234, %v2503, -3.4028235e+38
      %v2548 = vsel %vm1235, %v2519, -3.4028235e+38
      %v2549 = vsel %vm1234, %v2504, -3.4028235e+38
      %v2550 = vsel %vm1235, %v2520, -3.4028235e+38
      %v2551 = vsel %vm1234, %v2505, -3.4028235e+38
      %v2552 = vsel %vm1235, %v2521, -3.4028235e+38
      %v2553 = vsel %vm1234, %v2506, -3.4028235e+38
      %v2554 = vsel %vm1235, %v2522, -3.4028235e+38
      %v2555 = vrot.slane %v2143, 6
      %v2556 = vrot.slane %v2173, 6
      %v2557 = vrot.slane %v2175, 6
      %v2558 = vrot.slane %v2177, 6
      %v2559 = vrot.slane %v2179, 6
      %v2560 = vrot.slane %v2181, 6
      %v2561 = vrot.slane %v2183, 6
      %v2562 = vrot.slane %v2185, 6
      %v2563 = vrot.slane %v2187, 6
      %v2564 = vrot.slane %v2189, 6
      %v2565 = vrot.slane %v2191, 6
      %v2566 = vrot.slane %v2193, 6
      %v2567 = vrot.slane %v2195, 6
      %v2568 = vrot.slane %v2197, 6
      %v2569 = vrot.slane %v2199, 6
      %v2570 = vrot.slane %v2201, 6
      %v2571 = vrot.slane %v2144, 6
      %v2572 = vrot.slane %v2174, 6
      %v2573 = vrot.slane %v2176, 6
      %v2574 = vrot.slane %v2178, 6
      %v2575 = vrot.slane %v2180, 6
      %v2576 = vrot.slane %v2182, 6
      %v2577 = vrot.slane %v2184, 6
      %v2578 = vrot.slane %v2186, 6
      %v2579 = vrot.slane %v2188, 6
      %v2580 = vrot.slane %v2190, 6
      %v2581 = vrot.slane %v2192, 6
      %v2582 = vrot.slane %v2194, 6
      %v2583 = vrot.slane %v2196, 6
      %v2584 = vrot.slane %v2198, 6
      %v2585 = vrot.slane %v2200, 6
      %v2586 = vrot.slane %v2202, 6
      %v2587 = vsel %vm1300, %v2555, %v2571
      %v2588 = vsel %vm1300, %v2556, %v2572
      %v2589 = vsel %vm1300, %v2557, %v2573
      %v2590 = vsel %vm1300, %v2558, %v2574
      %v2591 = vsel %vm1300, %v2559, %v2575
      %v2592 = vsel %vm1300, %v2560, %v2576
      %v2593 = vsel %vm1300, %v2561, %v2577
      %v2594 = vsel %vm1300, %v2562, %v2578
      %v2595 = vsel %vm1300, %v2563, %v2579
      %v2596 = vsel %vm1300, %v2564, %v2580
      %v2597 = vsel %vm1300, %v2565, %v2581
      %v2598 = vsel %vm1300, %v2566, %v2582
      %v2599 = vsel %vm1300, %v2567, %v2583
      %v2600 = vsel %vm1300, %v2568, %v2584
      %v2601 = vsel %vm1300, %v2569, %v2585
      %v2602 = vsel %vm1300, %v2570, %v2586
      %v2603 = vsel %vm1300, %v2571, %v2555
      %v2604 = vsel %vm1300, %v2572, %v2556
      %v2605 = vsel %vm1300, %v2573, %v2557
      %v2606 = vsel %vm1300, %v2574, %v2558
      %v2607 = vsel %vm1300, %v2575, %v2559
      %v2608 = vsel %vm1300, %v2576, %v2560
      %v2609 = vsel %vm1300, %v2577, %v2561
      %v2610 = vsel %vm1300, %v2578, %v2562
      %v2611 = vsel %vm1300, %v2579, %v2563
      %v2612 = vsel %vm1300, %v2580, %v2564
      %v2613 = vsel %vm1300, %v2581, %v2565
      %v2614 = vsel %vm1300, %v2582, %v2566
      %v2615 = vsel %vm1300, %v2583, %v2567
      %v2616 = vsel %vm1300, %v2584, %v2568
      %v2617 = vsel %vm1300, %v2585, %v2569
      %v2618 = vsel %vm1300, %v2586, %v2570
      %v2619 = vsel %vm1333, %v2603, -3.4028235e+38
      %v2620 = vsel %vm1334, %v2587, -3.4028235e+38
      %v2621 = vsel %vm1333, %v2604, -3.4028235e+38
      %v2622 = vsel %vm1334, %v2588, -3.4028235e+38
      %v2623 = vsel %vm1333, %v2605, -3.4028235e+38
      %v2624 = vsel %vm1334, %v2589, -3.4028235e+38
      %v2625 = vsel %vm1333, %v2606, -3.4028235e+38
      %v2626 = vsel %vm1334, %v2590, -3.4028235e+38
      %v2627 = vsel %vm1333, %v2607, -3.4028235e+38
      %v2628 = vsel %vm1334, %v2591, -3.4028235e+38
      %v2629 = vsel %vm1333, %v2608, -3.4028235e+38
      %v2630 = vsel %vm1334, %v2592, -3.4028235e+38
      %v2631 = vsel %vm1333, %v2609, -3.4028235e+38
      %v2632 = vsel %vm1334, %v2593, -3.4028235e+38
      %v2633 = vsel %vm1333, %v2610, -3.4028235e+38
      %v2634 = vsel %vm1334, %v2594, -3.4028235e+38
      %v2635 = vsel %vm1333, %v2611, -3.4028235e+38
      %v2636 = vsel %vm1334, %v2595, -3.4028235e+38
      %v2637 = vsel %vm1333, %v2612, -3.4028235e+38
      %v2638 = vsel %vm1334, %v2596, -3.4028235e+38
      %v2639 = vsel %vm1333, %v2613, -3.4028235e+38
      %v2640 = vsel %vm1334, %v2597, -3.4028235e+38
      %v2641 = vsel %vm1333, %v2614, -3.4028235e+38
      %v2642 = vsel %vm1334, %v2598, -3.4028235e+38
      %v2643 = vsel %vm1333, %v2615, -3.4028235e+38
      %v2644 = vsel %vm1334, %v2599, -3.4028235e+38
      %v2645 = vsel %vm1333, %v2616, -3.4028235e+38
      %v2646 = vsel %vm1334, %v2600, -3.4028235e+38
      %v2647 = vsel %vm1333, %v2617, -3.4028235e+38
      %v2648 = vsel %vm1334, %v2601, -3.4028235e+38
      %v2649 = vsel %vm1333, %v2618, -3.4028235e+38
      %v2650 = vsel %vm1334, %v2602, -3.4028235e+38
      %v2651 = vmax.f32 %v2523, %v2619
      %v2652 = vmax.f32 %v2524, %v2620
      %v2653 = vmax.f32 %v2525, %v2621
      %v2654 = vmax.f32 %v2526, %v2622
      %v2655 = vmax.f32 %v2527, %v2623
      %v2656 = vmax.f32 %v2528, %v2624
      %v2657 = vmax.f32 %v2529, %v2625
      %v2658 = vmax.f32 %v2530, %v2626
      %v2659 = vmax.f32 %v2531, %v2627
      %v2660 = vmax.f32 %v2532, %v2628
      %v2661 = vmax.f32 %v2533, %v2629
      %v2662 = vmax.f32 %v2534, %v2630
      %v2663 = vmax.f32 %v2535, %v2631
      %v2664 = vmax.f32 %v2536, %v2632
      %v2665 = vmax.f32 %v2537, %v2633
      %v2666 = vmax.f32 %v2538, %v2634
      %v2667 = vmax.f32 %v2539, %v2635
      %v2668 = vmax.f32 %v2540, %v2636
      %v2669 = vmax.f32 %v2541, %v2637
      %v2670 = vmax.f32 %v2542, %v2638
      %v2671 = vmax.f32 %v2543, %v2639
      %v2672 = vmax.f32 %v2544, %v2640
      %v2673 = vmax.f32 %v2545, %v2641
      %v2674 = vmax.f32 %v2546, %v2642
      %v2675 = vmax.f32 %v2547, %v2643
      %v2676 = vmax.f32 %v2548, %v2644
      %v2677 = vmax.f32 %v2549, %v2645
      %v2678 = vmax.f32 %v2550, %v2646
      %v2679 = vmax.f32 %v2551, %v2647
      %v2680 = vmax.f32 %v2552, %v2648
      %v2681 = vmax.f32 %v2553, %v2649
      %v2682 = vmax.f32 %v2554, %v2650
      %v2683 = vmax.f32 %v2427, %v2651
      %v2684 = vmax.f32 %v2428, %v2652
      %v2685 = vmax.f32 %v2429, %v2653
      %v2686 = vmax.f32 %v2430, %v2654
      %v2687 = vmax.f32 %v2431, %v2655
      %v2688 = vmax.f32 %v2432, %v2656
      %v2689 = vmax.f32 %v2433, %v2657
      %v2690 = vmax.f32 %v2434, %v2658
      %v2691 = vmax.f32 %v2435, %v2659
      %v2692 = vmax.f32 %v2436, %v2660
      %v2693 = vmax.f32 %v2437, %v2661
      %v2694 = vmax.f32 %v2438, %v2662
      %v2695 = vmax.f32 %v2439, %v2663
      %v2696 = vmax.f32 %v2440, %v2664
      %v2697 = vmax.f32 %v2441, %v2665
      %v2698 = vmax.f32 %v2442, %v2666
      %v2699 = vmax.f32 %v2443, %v2667
      %v2700 = vmax.f32 %v2444, %v2668
      %v2701 = vmax.f32 %v2445, %v2669
      %v2702 = vmax.f32 %v2446, %v2670
      %v2703 = vmax.f32 %v2447, %v2671
      %v2704 = vmax.f32 %v2448, %v2672
      %v2705 = vmax.f32 %v2449, %v2673
      %v2706 = vmax.f32 %v2450, %v2674
      %v2707 = vmax.f32 %v2451, %v2675
      %v2708 = vmax.f32 %v2452, %v2676
      %v2709 = vmax.f32 %v2453, %v2677
      %v2710 = vmax.f32 %v2454, %v2678
      %v2711 = vmax.f32 %v2455, %v2679
      %v2712 = vmax.f32 %v2456, %v2680
      %v2713 = vmax.f32 %v2457, %v2681
      %v2714 = vmax.f32 %v2458, %v2682
      %s2715 = scalar_lea.vmem %s3, 4
      %v2716 = vld [vmem:[%s2715] sm:$0x3]
      %v2718 = vsel %vm1433, %v2683, 0
      %v2721 = vsel %vm1433, %v2684, 0
      %v2724 = vsel %vm1433, %v2685, 0
      %v2727 = vsel %vm1433, %v2686, 0
      %v2730 = vsel %vm1433, %v2687, 0
      %v2733 = vsel %vm1433, %v2688, 0
      %v2736 = vsel %vm1433, %v2689, 0
      %v2739 = vsel %vm1433, %v2690, 0
      %v2742 = vsel %vm1433, %v2691, 0
      %v2745 = vsel %vm1433, %v2692, 0
      %v2748 = vsel %vm1433, %v2693, 0
      %v2751 = vsel %vm1433, %v2694, 0
      %v2754 = vsel %vm1433, %v2695, 0
      %v2757 = vsel %vm1433, %v2696, 0
      %v2760 = vsel %vm1433, %v2697, 0
      %v2763 = vsel %vm1433, %v2698, 0
      %v2766 = vsel %vm1433, %v2699, 0
      %v2769 = vsel %vm1433, %v2700, 0
      %v2772 = vsel %vm1433, %v2701, 0
      %v2775 = vsel %vm1433, %v2702, 0
      %v2778 = vsel %vm1433, %v2703, 0
      %v2781 = vsel %vm1433, %v2704, 0
      %v2784 = vsel %vm1433, %v2705, 0
      %v2787 = vsel %vm1433, %v2706, 0
      %v2790 = vsel %vm1433, %v2707, 0
      %v2793 = vsel %vm1433, %v2708, 0
      %v2796 = vsel %vm1433, %v2709, 0
      %v2799 = vsel %vm1433, %v2710, 0
      %v2802 = vsel %vm1433, %v2711, 0
      %v2805 = vsel %vm1433, %v2712, 0
      %v2808 = vsel %vm1433, %v2713, 0
      %v2811 = vsel %vm1433, %v2714, 0
      %v2814 = vsel %vm1530, %v2716, 0
      %2816 = vmatprep.subr.mxu0 0.0
      %2817 = vmatpush1.msra.mxu0 %v2814
      %2818 = vmatprep.subr.mxu0 0.0
      %2819 = vmatpush1.msra.mxu0 0.0
      %2820 = vmatprep.subr.mxu0 0.0
      %2821 = vmatpush1.msra.mxu0 0.0
      %2822 = vmatprep.subr.mxu0 0.0
      %2823 = vmatpush1.msra.mxu0 0.0
      %2824 = vmatprep.subr.mxu0 0.0
      %2825 = vmatpush1.msra.mxu0 0.0
      %2826 = vmatprep.subr.mxu0 0.0
      %2827 = vmatpush1.msra.mxu0 0.0
      %2828 = vmatprep.subr.mxu0 0.0
      %2829 = vmatpush1.msra.mxu0 0.0
      %2830 = vmatprep.subr.mxu0 0.0
      %2831 = vmatpush1.msra.mxu0 0.0
      %2832 = vmatprep.subr.mxu0 0.0
      %2833 = vmatpush1.msra.mxu0 0.0
      %2834 = vmatprep.subr.mxu0 0.0
      %2835 = vmatpush1.msra.mxu0 0.0
      %2836 = vmatprep.subr.mxu0 0.0
      %2837 = vmatpush1.msra.mxu0 0.0
      %2838 = vmatprep.subr.mxu0 0.0
      %2839 = vmatpush1.msra.mxu0 0.0
      %2840 = vmatprep.subr.mxu0 0.0
      %2841 = vmatpush1.msra.mxu0 0.0
      %2842 = vmatprep.subr.mxu0 0.0
      %2843 = vmatpush1.msra.mxu0 0.0
      %2844 = vmatprep.subr.mxu0 0.0
      %2845 = vmatpush1.msra.mxu0 0.0
      %2846 = vmatprep.subr.mxu0 0.0
      %2847 = vmatpush1.msra.mxu0 0.0
      %2848 = vmatprep.subr.mxu0 0.0
      %2849 = vmatpush1.msra.mxu0 0.0
      %2850 = vmatprep.subr.mxu0 0.0
      %2851 = vmatpush1.msra.mxu0 0.0
      %2852 = vmatprep.subr.mxu0 0.0
      %2853 = vmatpush1.msra.mxu0 0.0
      %2854 = vmatprep.subr.mxu0 0.0
      %2855 = vmatpush1.msra.mxu0 0.0
      %2856 = vmatprep.subr.mxu0 0.0
      %2857 = vmatpush1.msra.mxu0 0.0
      %2858 = vmatprep.subr.mxu0 0.0
      %2859 = vmatpush1.msra.mxu0 0.0
      %2860 = vmatprep.subr.mxu0 0.0
      %2861 = vmatpush1.msra.mxu0 0.0
      %2862 = vmatprep.subr.mxu0 0.0
      %2863 = vmatpush1.msra.mxu0 0.0
      %2864 = vmatprep.subr.mxu0 0.0
      %2865 = vmatpush1.msra.mxu0 0.0
      %2866 = vmatprep.subr.mxu0 0.0
      %2867 = vmatpush1.msra.mxu0 0.0
      %2868 = vmatprep.subr.mxu0 0.0
      %2869 = vmatpush1.msra.mxu0 0.0
      %2870 = vmatprep.subr.mxu0 0.0
      %2871 = vmatpush1.msra.mxu0 0.0
      %2872 = vmatprep.subr.mxu0 0.0
      %2873 = vmatpush1.msra.mxu0 0.0
      %2874 = vmatprep.subr.mxu0 0.0
      %2875 = vmatpush1.msra.mxu0 0.0
      %2876 = vmatprep.subr.mxu0 0.0
      %2877 = vmatpush1.msra.mxu0 0.0
      %2878 = vmatprep.subr.mxu0 0.0
      %2879 = vmatpush1.msra.mxu0 0.0
      %2880 = vmatprep.mubr.f32.mxu0 0.0
      %2881 = vmatmul.mubr.f32.gmra.mrb[0].mxu0 %v2718
      %v2882 = vpop.f32.mrb[0].mxu0
      %v2883 = vadd.f32 0.0, %v2882
      %v2884 = vpop.f32.mrb[0].mxu0
      %2885 = vmatprep.mubr.f32.mxu0 0.0
      %2886 = vmatmul.mubr.f32.gmra.mrb[0].mxu0 %v2721
      %v2887 = vpop.f32.mrb[0].mxu0
      %v2888 = vadd.f32 0.0, %v2887
      %v2889 = vpop.f32.mrb[0].mxu0
      %2890 = vmatprep.mubr.f32.mxu0 0.0
      %2891 = vmatmul.mubr.f32.gmra.mrb[0].mxu0 %v2724
      %v2892 = vpop.f32.mrb[0].mxu0
      %v2893 = vadd.f32 0.0, %v2892
      %v2894 = vpop.f32.mrb[0].mxu0
      %2895 = vmatprep.mubr.f32.mxu0 0.0
      %2896 = vmatmul.mubr.f32.gmra.mrb[0].mxu0 %v2727
      %v2897 = vpop.f32.mrb[0].mxu0
      %v2898 = vadd.f32 0.0, %v2897
      %v2899 = vpop.f32.mrb[0].mxu0
      %2900 = vmatprep.mubr.f32.mxu0 0.0
      %2901 = vmatmul.mubr.f32.gmra.mrb[0].mxu0 %v2730
      %v2902 = vpop.f32.mrb[0].mxu0
      %v2903 = vadd.f32 0.0, %v2902
      %v2904 = vpop.f32.mrb[0].mxu0
      %2905 = vmatprep.mubr.f32.mxu0 0.0
      %2906 = vmatmul.mubr.f32.gmra.mrb[0].mxu0 %v2733
      %v2907 = vpop.f32.mrb[0].mxu0
      %v2908 = vadd.f32 0.0, %v2907
      %v2909 = vpop.f32.mrb[0].mxu0
      %2910 = vmatprep.mubr.f32.mxu0 0.0
      %2911 = vmatmul.mubr.f32.gmra.mrb[0].mxu0 %v2736
      %v2912 = vpop.f32.mrb[0].mxu0
      %v2913 = vadd.f32 0.0, %v2912
      %v2914 = vpop.f32.mrb[0].mxu0
      %2915 = vmatprep.mubr.f32.mxu0 0.0
      %2916 = vmatmul.mubr.f32.gmra.mrb[0].mxu0 %v2739
      %v2917 = vpop.f32.mrb[0].mxu0
      %v2918 = vadd.f32 0.0, %v2917
      %v2919 = vpop.f32.mrb[0].mxu0
      %2920 = vmatprep.mubr.f32.mxu0 0.0
      %2921 = vmatmul.mubr.f32.gmra.mrb[0].mxu0 %v2742
      %v2922 = vpop.f32.mrb[0].mxu0
      %v2923 = vadd.f32 0.0, %v2922
      %v2924 = vpop.f32.mrb[0].mxu0
      %2925 = vmatprep.mubr.f32.mxu0 0.0
      %2926 = vmatmul.mubr.f32.gmra.mrb[0].mxu0 %v2745
      %v2927 = vpop.f32.mrb[0].mxu0
      %v2928 = vadd.f32 0.0, %v2927
      %v2929 = vpop.f32.mrb[0].mxu0
      %2930 = vmatprep.mubr.f32.mxu0 0.0
      %2931 = vmatmul.mubr.f32.gmra.mrb[0].mxu0 %v2748
      %v2932 = vpop.f32.mrb[0].mxu0
      %v2933 = vadd.f32 0.0, %v2932
      %v2934 = vpop.f32.mrb[0].mxu0
      %2935 = vmatprep.mubr.f32.mxu0 0.0
      %2936 = vmatmul.mubr.f32.gmra.mrb[0].mxu0 %v2751
      %v2937 = vpop.f32.mrb[0].mxu0
      %v2938 = vadd.f32 0.0, %v2937
      %v2939 = vpop.f32.mrb[0].mxu0
      %2940 = vmatprep.mubr.f32.mxu0 0.0
      %2941 = vmatmul.mubr.f32.gmra.mrb[0].mxu0 %v2754
      %v2942 = vpop.f32.mrb[0].mxu0
      %v2943 = vadd.f32 0.0, %v2942
      %v2944 = vpop.f32.mrb[0].mxu0
      %2945 = vmatprep.mubr.f32.mxu0 0.0
      %2946 = vmatmul.mubr.f32.gmra.mrb[0].mxu0 %v2757
      %v2947 = vpop.f32.mrb[0].mxu0
      %v2948 = vadd.f32 0.0, %v2947
      %v2949 = vpop.f32.mrb[0].mxu0
      %2950 = vmatprep.mubr.f32.mxu0 0.0
      %2951 = vmatmul.mubr.f32.gmra.mrb[0].mxu0 %v2760
      %v2952 = vpop.f32.mrb[0].mxu0
      %v2953 = vadd.f32 0.0, %v2952
      %v2954 = vpop.f32.mrb[0].mxu0
      %2955 = vmatprep.mubr.f32.mxu0 0.0
      %2956 = vmatmul.mubr.f32.gmra.mrb[0].mxu0 %v2763
      %v2957 = vpop.f32.mrb[0].mxu0
      %v2958 = vadd.f32 0.0, %v2957
      %v2959 = vpop.f32.mrb[0].mxu0
      %2960 = vmatprep.mubr.f32.mxu0 0.0
      %2961 = vmatmul.mubr.f32.gmra.mrb[0].mxu0 %v2766
      %v2962 = vpop.f32.mrb[0].mxu0
      %v2963 = vadd.f32 0.0, %v2962
      %v2964 = vpop.f32.mrb[0].mxu0
      %2965 = vmatprep.mubr.f32.mxu0 0.0
      %2966 = vmatmul.mubr.f32.gmra.mrb[0].mxu0 %v2769
      %v2967 = vpop.f32.mrb[0].mxu0
      %v2968 = vadd.f32 0.0, %v2967
      %v2969 = vpop.f32.mrb[0].mxu0
      %2970 = vmatprep.mubr.f32.mxu0 0.0
      %2971 = vmatmul.mubr.f32.gmra.mrb[0].mxu0 %v2772
      %v2972 = vpop.f32.mrb[0].mxu0
      %v2973 = vadd.f32 0.0, %v2972
      %v2974 = vpop.f32.mrb[0].mxu0
      %2975 = vmatprep.mubr.f32.mxu0 0.0
      %2976 = vmatmul.mubr.f32.gmra.mrb[0].mxu0 %v2775
      %v2977 = vpop.f32.mrb[0].mxu0
      %v2978 = vadd.f32 0.0, %v2977
      %v2979 = vpop.f32.mrb[0].mxu0
      %2980 = vmatprep.mubr.f32.mxu0 0.0
      %2981 = vmatmul.mubr.f32.gmra.mrb[0].mxu0 %v2778
      %v2982 = vpop.f32.mrb[0].mxu0
      %v2983 = vadd.f32 0.0, %v2982
      %v2984 = vpop.f32.mrb[0].mxu0
      %2985 = vmatprep.mubr.f32.mxu0 0.0
      %2986 = vmatmul.mubr.f32.gmra.mrb[0].mxu0 %v2781
      %v2987 = vpop.f32.mrb[0].mxu0
      %v2988 = vadd.f32 0.0, %v2987
      %v2989 = vpop.f32.mrb[0].mxu0
      %2990 = vmatprep.mubr.f32.mxu0 0.0
      %2991 = vmatmul.mubr.f32.gmra.mrb[0].mxu0 %v2784
      %v2992 = vpop.f32.mrb[0].mxu0
      %v2993 = vadd.f32 0.0, %v2992
      %v2994 = vpop.f32.mrb[0].mxu0
      %2995 = vmatprep.mubr.f32.mxu0 0.0
      %2996 = vmatmul.mubr.f32.gmra.mrb[0].mxu0 %v2787
      %v2997 = vpop.f32.mrb[0].mxu0
      %v2998 = vadd.f32 0.0, %v2997
      %v2999 = vpop.f32.mrb[0].mxu0
      %3000 = vmatprep.mubr.f32.mxu0 0.0
      %3001 = vmatmul.mubr.f32.gmra.mrb[0].mxu0 %v2790
      %v3002 = vpop.f32.mrb[0].mxu0
      %v3003 = vadd.f32 0.0, %v3002
      %v3004 = vpop.f32.mrb[0].mxu0
      %3005 = vmatprep.mubr.f32.mxu0 0.0
      %3006 = vmatmul.mubr.f32.gmra.mrb[0].mxu0 %v2793
      %v3007 = vpop.f32.mrb[0].mxu0
      %v3008 = vadd.f32 0.0, %v3007
      %v3009 = vpop.f32.mrb[0].mxu0
      %3010 = vmatprep.mubr.f32.mxu0 0.0
      %3011 = vmatmul.mubr.f32.gmra.mrb[0].mxu0 %v2796
      %v3012 = vpop.f32.mrb[0].mxu0
      %v3013 = vadd.f32 0.0, %v3012
      %v3014 = vpop.f32.mrb[0].mxu0
      %3015 = vmatprep.mubr.f32.mxu0 0.0
      %3016 = vmatmul.mubr.f32.gmra.mrb[0].mxu0 %v2799
      %v3017 = vpop.f32.mrb[0].mxu0
      %v3018 = vadd.f32 0.0, %v3017
      %v3019 = vpop.f32.mrb[0].mxu0
      %3020 = vmatprep.mubr.f32.mxu0 0.0
      %3021 = vmatmul.mubr.f32.gmra.mrb[0].mxu0 %v2802
      %v3022 = vpop.f32.mrb[0].mxu0
      %v3023 = vadd.f32 0.0, %v3022
      %v3024 = vpop.f32.mrb[0].mxu0
      %3025 = vmatprep.mubr.f32.mxu0 0.0
      %3026 = vmatmul.mubr.f32.gmra.mrb[0].mxu0 %v2805
      %v3027 = vpop.f32.mrb[0].mxu0
      %v3028 = vadd.f32 0.0, %v3027
      %v3029 = vpop.f32.mrb[0].mxu0
      %3030 = vmatprep.mubr.f32.mxu0 0.0
      %3031 = vmatmul.mubr.f32.gmra.mrb[0].mxu0 %v2808
      %v3032 = vpop.f32.mrb[0].mxu0
      %v3033 = vadd.f32 0.0, %v3032
      %v3034 = vpop.f32.mrb[0].mxu0
      %3035 = vmatprep.mubr.f32.mxu0 0.0
      %3036 = vmatmul.mubr.f32.gmra.mrb[0].mxu0 %v2811
      %v3037 = vpop.f32.mrb[0].mxu0
      %v3038 = vadd.f32 0.0, %v3037
      %v3039 = vpop.f32.mrb[0].mxu0
      %3040 = vdwg.mxu0
      %v3041 = vadd.f32 %v1925, %v2883
      %v3042 = vadd.f32 %v1930, %v2888
      %v3043 = vadd.f32 %v1935, %v2893
      %v3044 = vadd.f32 %v1940, %v2898
      %v3045 = vadd.f32 %v1945, %v2903
      %v3046 = vadd.f32 %v1950, %v2908
      %v3047 = vadd.f32 %v1955, %v2913
      %v3048 = vadd.f32 %v1960, %v2918
      %v3049 = vadd.f32 %v1965, %v2923
      %v3050 = vadd.f32 %v1970, %v2928
      %v3051 = vadd.f32 %v1975, %v2933
      %v3052 = vadd.f32 %v1980, %v2938
      %v3053 = vadd.f32 %v1985, %v2943
      %v3054 = vadd.f32 %v1990, %v2948
      %v3055 = vadd.f32 %v1995, %v2953
      %v3056 = vadd.f32 %v2000, %v2958
      %v3057 = vadd.f32 %v2005, %v2963
      %v3058 = vadd.f32 %v2010, %v2968
      %v3059 = vadd.f32 %v2015, %v2973
      %v3060 = vadd.f32 %v2020, %v2978
      %v3061 = vadd.f32 %v2025, %v2983
      %v3062 = vadd.f32 %v2030, %v2988
      %v3063 = vadd.f32 %v2035, %v2993
      %v3064 = vadd.f32 %v2040, %v2998
      %v3065 = vadd.f32 %v2045, %v3003
      %v3066 = vadd.f32 %v2050, %v3008
      %v3067 = vadd.f32 %v2055, %v3013
      %v3068 = vadd.f32 %v2060, %v3018
      %v3069 = vadd.f32 %v2065, %v3023
      %v3070 = vadd.f32 %v2070, %v3028
      %v3071 = vadd.f32 %v2075, %v3033
      %v3072 = vadd.f32 %v2080, %v3038
      %v3073 = vmax.f32 %v2683, -3.4028235e+38
      %v3074 = vmax.f32 %v2684, -3.4028235e+38
      %v3075 = vmax.f32 %v2683, %v2685
      %v3076 = vmax.f32 %v2684, %v2686
      %v3077 = vmax.f32 %v2685, %v2687
      %v3078 = vmax.f32 %v2686, %v2688
      %v3079 = vmax.f32 %v2687, %v2689
      %v3080 = vmax.f32 %v2688, %v2690
      %v3081 = vmax.f32 %v2689, %v2691
      %v3082 = vmax.f32 %v2690, %v2692
      %v3083 = vmax.f32 %v2691, %v2693
      %v3084 = vmax.f32 %v2692, %v2694
      %v3085 = vmax.f32 %v2693, %v2695
      %v3086 = vmax.f32 %v2694, %v2696
      %v3087 = vmax.f32 %v2695, %v2697
      %v3088 = vmax.f32 %v2696, %v2698
      %v3089 = vmax.f32 %v2697, %v2699
      %v3090 = vmax.f32 %v2698, %v2700
      %v3091 = vmax.f32 %v2699, %v2701
      %v3092 = vmax.f32 %v2700, %v2702
      %v3093 = vmax.f32 %v2701, %v2703
      %v3094 = vmax.f32 %v2702, %v2704
      %v3095 = vmax.f32 %v2703, %v2705
      %v3096 = vmax.f32 %v2704, %v2706
      %v3097 = vmax.f32 %v2705, %v2707
      %v3098 = vmax.f32 %v2706, %v2708
      %v3099 = vmax.f32 %v2707, %v2709
      %v3100 = vmax.f32 %v2708, %v2710
      %v3101 = vmax.f32 %v2709, %v2711
      %v3102 = vmax.f32 %v2710, %v2712
      %v3103 = vmax.f32 %v3073, %v2685
      %v3104 = vmax.f32 %v3074, %v2686
      %v3105 = vmax.f32 %v3075, %v2687
      %v3106 = vmax.f32 %v3076, %v2688
      %v3107 = vmax.f32 %v3077, %v2689
      %v3108 = vmax.f32 %v3078, %v2690
      %v3109 = vmax.f32 %v3079, %v2691
      %v3110 = vmax.f32 %v3080, %v2692
      %v3111 = vmax.f32 %v3081, %v2693
      %v3112 = vmax.f32 %v3082, %v2694
      %v3113 = vmax.f32 %v3083, %v2695
      %v3114 = vmax.f32 %v3084, %v2696
      %v3115 = vmax.f32 %v3085, %v2697
      %v3116 = vmax.f32 %v3086, %v2698
      %v3117 = vmax.f32 %v3087, %v2699
      %v3118 = vmax.f32 %v3088, %v2700
      %v3119 = vmax.f32 %v3089, %v2701
      %v3120 = vmax.f32 %v3090, %v2702
      %v3121 = vmax.f32 %v3091, %v2703
      %v3122 = vmax.f32 %v3092, %v2704
      %v3123 = vmax.f32 %v3093, %v2705
      %v3124 = vmax.f32 %v3094, %v2706
      %v3125 = vmax.f32 %v3095, %v2707
      %v3126 = vmax.f32 %v3096, %v2708
      %v3127 = vmax.f32 %v3097, %v2709
      %v3128 = vmax.f32 %v3098, %v2710
      %v3129 = vmax.f32 %v3099, %v2711
      %v3130 = vmax.f32 %v3100, %v2712
      %v3131 = vmax.f32 %v3101, %v2713
      %v3132 = vmax.f32 %v3102, %v2714
      %v3133 = vmax.f32 %v3103, %v2687
      %v3134 = vmax.f32 %v3104, %v2688
      %v3135 = vmax.f32 %v3105, %v2689
      %v3136 = vmax.f32 %v3106, %v2690
      %v3137 = vmax.f32 %v3107, %v2691
      %v3138 = vmax.f32 %v3108, %v2692
      %v3139 = vmax.f32 %v3109, %v2693
      %v3140 = vmax.f32 %v3110, %v2694
      %v3141 = vmax.f32 %v3111, %v2695
      %v3142 = vmax.f32 %v3112, %v2696
      %v3143 = vmax.f32 %v3113, %v2697
      %v3144 = vmax.f32 %v3114, %v2698
      %v3145 = vmax.f32 %v3115, %v2699
      %v3146 = vmax.f32 %v3116, %v2700
      %v3147 = vmax.f32 %v3117, %v2701
      %v3148 = vmax.f32 %v3118, %v2702
      %v3149 = vmax.f32 %v3119, %v2703
      %v3150 = vmax.f32 %v3120, %v2704
      %v3151 = vmax.f32 %v3121, %v2705
      %v3152 = vmax.f32 %v3122, %v2706
      %v3153 = vmax.f32 %v3123, %v2707
      %v3154 = vmax.f32 %v3124, %v2708
      %v3155 = vmax.f32 %v3125, %v2709
      %v3156 = vmax.f32 %v3126, %v2710
      %v3157 = vmax.f32 %v3127, %v2711
      %v3158 = vmax.f32 %v3128, %v2712
      %v3159 = vmax.f32 %v3129, %v2713
      %v3160 = vmax.f32 %v3130, %v2714
      %v3161 = vmax.f32 %v3131, -3.4028235e+38
      %v3162 = vmax.f32 %v3132, -3.4028235e+38
      %v3163 = vmax.f32 %v3133, %v2689
      %v3164 = vmax.f32 %v3134, %v2690
      %v3165 = vmax.f32 %v3135, %v2691
      %v3166 = vmax.f32 %v3136, %v2692
      %v3167 = vmax.f32 %v3137, %v2693
      %v3168 = vmax.f32 %v3138, %v2694
      %v3169 = vmax.f32 %v3139, %v2695
      %v3170 = vmax.f32 %v3140, %v2696
      %v3171 = vmax.f32 %v3141, %v2697
      %v3172 = vmax.f32 %v3142, %v2698
      %v3173 = vmax.f32 %v3143, %v2699
      %v3174 = vmax.f32 %v3144, %v2700
      %v3175 = vmax.f32 %v3145, %v2701
      %v3176 = vmax.f32 %v3146, %v2702
      %v3177 = vmax.f32 %v3147, %v2703
      %v3178 = vmax.f32 %v3148, %v2704
      %v3179 = vmax.f32 %v3149, %v2705
      %v3180 = vmax.f32 %v3150, %v2706
      %v3181 = vmax.f32 %v3151, %v2707
      %v3182 = vmax.f32 %v3152, %v2708
      %v3183 = vmax.f32 %v3153, %v2709
      %v3184 = vmax.f32 %v3154, %v2710
      %v3185 = vmax.f32 %v3155, %v2711
      %v3186 = vmax.f32 %v3156, %v2712
      %v3187 = vmax.f32 %v3157, %v2713
      %v3188 = vmax.f32 %v3158, %v2714
      %v3189 = vmax.f32 %v3159, -3.4028235e+38
      %v3190 = vmax.f32 %v3160, -3.4028235e+38
      %v3191 = vmax.f32 %v3161, -3.4028235e+38
      %v3192 = vmax.f32 %v3162, -3.4028235e+38
      %v3193 = vrot.slane %v3133, 1
      %v3194 = vrot.slane %v3163, 1
      %v3195 = vrot.slane %v3165, 1
      %v3196 = vrot.slane %v3167, 1
      %v3197 = vrot.slane %v3169, 1
      %v3198 = vrot.slane %v3171, 1
      %v3199 = vrot.slane %v3173, 1
      %v3200 = vrot.slane %v3175, 1
      %v3201 = vrot.slane %v3177, 1
      %v3202 = vrot.slane %v3179, 1
      %v3203 = vrot.slane %v3181, 1
      %v3204 = vrot.slane %v3183, 1
      %v3205 = vrot.slane %v3185, 1
      %v3206 = vrot.slane %v3187, 1
      %v3207 = vrot.slane %v3189, 1
      %v3208 = vrot.slane %v3191, 1
      %v3209 = vrot.slane %v3134, 1
      %v3210 = vrot.slane %v3164, 1
      %v3211 = vrot.slane %v3166, 1
      %v3212 = vrot.slane %v3168, 1
      %v3213 = vrot.slane %v3170, 1
      %v3214 = vrot.slane %v3172, 1
      %v3215 = vrot.slane %v3174, 1
      %v3216 = vrot.slane %v3176, 1
      %v3217 = vrot.slane %v3178, 1
      %v3218 = vrot.slane %v3180, 1
      %v3219 = vrot.slane %v3182, 1
      %v3220 = vrot.slane %v3184, 1
      %v3221 = vrot.slane %v3186, 1
      %v3222 = vrot.slane %v3188, 1
      %v3223 = vrot.slane %v3190, 1
      %v3224 = vrot.slane %v3192, 1
      %v3225 = vsel %vm939, %v3193, %v3209
      %v3226 = vsel %vm939, %v3194, %v3210
      %v3227 = vsel %vm939, %v3195, %v3211
      %v3228 = vsel %vm939, %v3196, %v3212
      %v3229 = vsel %vm939, %v3197, %v3213
      %v3230 = vsel %vm939, %v3198, %v3214
      %v3231 = vsel %vm939, %v3199, %v3215
      %v3232 = vsel %vm939, %v3200, %v3216
      %v3233 = vsel %vm939, %v3201, %v3217
      %v3234 = vsel %vm939, %v3202, %v3218
      %v3235 = vsel %vm939, %v3203, %v3219
      %v3236 = vsel %vm939, %v3204, %v3220
      %v3237 = vsel %vm939, %v3205, %v3221
      %v3238 = vsel %vm939, %v3206, %v3222
      %v3239 = vsel %vm939, %v3207, %v3223
      %v3240 = vsel %vm939, %v3208, %v3224
      %v3241 = vsel %vm939, %v3209, %v3193
      %v3242 = vsel %vm939, %v3210, %v3194
      %v3243 = vsel %vm939, %v3211, %v3195
      %v3244 = vsel %vm939, %v3212, %v3196
      %v3245 = vsel %vm939, %v3213, %v3197
      %v3246 = vsel %vm939, %v3214, %v3198
      %v3247 = vsel %vm939, %v3215, %v3199
      %v3248 = vsel %vm939, %v3216, %v3200
      %v3249 = vsel %vm939, %v3217, %v3201
      %v3250 = vsel %vm939, %v3218, %v3202
      %v3251 = vsel %vm939, %v3219, %v3203
      %v3252 = vsel %vm939, %v3220, %v3204
      %v3253 = vsel %vm939, %v3221, %v3205
      %v3254 = vsel %vm939, %v3222, %v3206
      %v3255 = vsel %vm939, %v3223, %v3207
      %v3256 = vsel %vm939, %v3224, %v3208
      %v3257 = vsel %vm972, %v3225, -3.4028235e+38
      %v3258 = vsel %vm973, %v3241, -3.4028235e+38
      %v3259 = vsel %vm972, %v3226, -3.4028235e+38
      %v3260 = vsel %vm973, %v3242, -3.4028235e+38
      %v3261 = vsel %vm972, %v3227, -3.4028235e+38
      %v3262 = vsel %vm973, %v3243, -3.4028235e+38
      %v3263 = vsel %vm972, %v3228, -3.4028235e+38
      %v3264 = vsel %vm973, %v3244, -3.4028235e+38
      %v3265 = vsel %vm972, %v3229, -3.4028235e+38
      %v3266 = vsel %vm973, %v3245, -3.4028235e+38
      %v3267 = vsel %vm972, %v3230, -3.4028235e+38
      %v3268 = vsel %vm973, %v3246, -3.4028235e+38
      %v3269 = vsel %vm972, %v3231, -3.4028235e+38
      %v3270 = vsel %vm973, %v3247, -3.4028235e+38
      %v3271 = vsel %vm972, %v3232, -3.4028235e+38
      %v3272 = vsel %vm973, %v3248, -3.4028235e+38
      %v3273 = vsel %vm972, %v3233, -3.4028235e+38
      %v3274 = vsel %vm973, %v3249, -3.4028235e+38
      %v3275 = vsel %vm972, %v3234, -3.4028235e+38
      %v3276 = vsel %vm973, %v3250, -3.4028235e+38
      %v3277 = vsel %vm972, %v3235, -3.4028235e+38
      %v3278 = vsel %vm973, %v3251, -3.4028235e+38
      %v3279 = vsel %vm972, %v3236, -3.4028235e+38
      %v3280 = vsel %vm973, %v3252, -3.4028235e+38
      %v3281 = vsel %vm972, %v3237, -3.4028235e+38
      %v3282 = vsel %vm973, %v3253, -3.4028235e+38
      %v3283 = vsel %vm972, %v3238, -3.4028235e+38
      %v3284 = vsel %vm973, %v3254, -3.4028235e+38
      %v3285 = vsel %vm972, %v3239, -3.4028235e+38
      %v3286 = vsel %vm973, %v3255, -3.4028235e+38
      %v3287 = vsel %vm972, %v3240, -3.4028235e+38
      %v3288 = vsel %vm973, %v3256, -3.4028235e+38
      %v3289 = vrot.slane %v3133, 7
      %v3290 = vrot.slane %v3163, 7
      %v3291 = vrot.slane %v3165, 7
      %v3292 = vrot.slane %v3167, 7
      %v3293 = vrot.slane %v3169, 7
      %v3294 = vrot.slane %v3171, 7
      %v3295 = vrot.slane %v3173, 7
      %v3296 = vrot.slane %v3175, 7
      %v3297 = vrot.slane %v3177, 7
      %v3298 = vrot.slane %v3179, 7
      %v3299 = vrot.slane %v3181, 7
      %v3300 = vrot.slane %v3183, 7
      %v3301 = vrot.slane %v3185, 7
      %v3302 = vrot.slane %v3187, 7
      %v3303 = vrot.slane %v3189, 7
      %v3304 = vrot.slane %v3191, 7
      %v3305 = vrot.slane %v3134, 7
      %v3306 = vrot.slane %v3164, 7
      %v3307 = vrot.slane %v3166, 7
      %v3308 = vrot.slane %v3168, 7
      %v3309 = vrot.slane %v3170, 7
      %v3310 = vrot.slane %v3172, 7
      %v3311 = vrot.slane %v3174, 7
      %v3312 = vrot.slane %v3176, 7
      %v3313 = vrot.slane %v3178, 7
      %v3314 = vrot.slane %v3180, 7
      %v3315 = vrot.slane %v3182, 7
      %v3316 = vrot.slane %v3184, 7
      %v3317 = vrot.slane %v3186, 7
      %v3318 = vrot.slane %v3188, 7
      %v3319 = vrot.slane %v3190, 7
      %v3320 = vrot.slane %v3192, 7
      %v3321 = vsel %vm1038, %v3289, %v3305
      %v3322 = vsel %vm1038, %v3290, %v3306
      %v3323 = vsel %vm1038, %v3291, %v3307
      %v3324 = vsel %vm1038, %v3292, %v3308
      %v3325 = vsel %vm1038, %v3293, %v3309
      %v3326 = vsel %vm1038, %v3294, %v3310
      %v3327 = vsel %vm1038, %v3295, %v3311
      %v3328 = vsel %vm1038, %v3296, %v3312
      %v3329 = vsel %vm1038, %v3297, %v3313
      %v3330 = vsel %vm1038, %v3298, %v3314
      %v3331 = vsel %vm1038, %v3299, %v3315
      %v3332 = vsel %vm1038, %v3300, %v3316
      %v3333 = vsel %vm1038, %v3301, %v3317
      %v3334 = vsel %vm1038, %v3302, %v3318
      %v3335 = vsel %vm1038, %v3303, %v3319
      %v3336 = vsel %vm1038, %v3304, %v3320
      %v3337 = vsel %vm1038, %v3305, %v3289
      %v3338 = vsel %vm1038, %v3306, %v3290
      %v3339 = vsel %vm1038, %v3307, %v3291
      %v3340 = vsel %vm1038, %v3308, %v3292
      %v3341 = vsel %vm1038, %v3309, %v3293
      %v3342 = vsel %vm1038, %v3310, %v3294
      %v3343 = vsel %vm1038, %v3311, %v3295
      %v3344 = vsel %vm1038, %v3312, %v3296
      %v3345 = vsel %vm1038, %v3313, %v3297
      %v3346 = vsel %vm1038, %v3314, %v3298
      %v3347 = vsel %vm1038, %v3315, %v3299
      %v3348 = vsel %vm1038, %v3316, %v3300
      %v3349 = vsel %vm1038, %v3317, %v3301
      %v3350 = vsel %vm1038, %v3318, %v3302
      %v3351 = vsel %vm1038, %v3319, %v3303
      %v3352 = vsel %vm1038, %v3320, %v3304
      %v3353 = vsel %vm1071, %v3337, -3.4028235e+38
      %v3354 = vsel %vm1072, %v3321, -3.4028235e+38
      %v3355 = vsel %vm1071, %v3338, -3.4028235e+38
      %v3356 = vsel %vm1072, %v3322, -3.4028235e+38
      %v3357 = vsel %vm1071, %v3339, -3.4028235e+38
      %v3358 = vsel %vm1072, %v3323, -3.4028235e+38
      %v3359 = vsel %vm1071, %v3340, -3.4028235e+38
      %v3360 = vsel %vm1072, %v3324, -3.4028235e+38
      %v3361 = vsel %vm1071, %v3341, -3.4028235e+38
      %v3362 = vsel %vm1072, %v3325, -3.4028235e+38
      %v3363 = vsel %vm1071, %v3342, -3.4028235e+38
      %v3364 = vsel %vm1072, %v3326, -3.4028235e+38
      %v3365 = vsel %vm1071, %v3343, -3.4028235e+38
      %v3366 = vsel %vm1072, %v3327, -3.4028235e+38
      %v3367 = vsel %vm1071, %v3344, -3.4028235e+38
      %v3368 = vsel %vm1072, %v3328, -3.4028235e+38
      %v3369 = vsel %vm1071, %v3345, -3.4028235e+38
      %v3370 = vsel %vm1072, %v3329, -3.4028235e+38
      %v3371 = vsel %vm1071, %v3346, -3.4028235e+38
      %v3372 = vsel %vm1072, %v3330, -3.4028235e+38
      %v3373 = vsel %vm1071, %v3347, -3.4028235e+38
      %v3374 = vsel %vm1072, %v3331, -3.4028235e+38
      %v3375 = vsel %vm1071, %v3348, -3.4028235e+38
      %v3376 = vsel %vm1072, %v3332, -3.4028235e+38
      %v3377 = vsel %vm1071, %v3349, -3.4028235e+38
      %v3378 = vsel %vm1072, %v3333, -3.4028235e+38
      %v3379 = vsel %vm1071, %v3350, -3.4028235e+38
      %v3380 = vsel %vm1072, %v3334, -3.4028235e+38
      %v3381 = vsel %vm1071, %v3351, -3.4028235e+38
      %v3382 = vsel %vm1072, %v3335, -3.4028235e+38
      %v3383 = vsel %vm1071, %v3352, -3.4028235e+38
      %v3384 = vsel %vm1072, %v3336, -3.4028235e+38
      %v3385 = vmax.f32 %v3257, %v3353
      %v3386 = vmax.f32 %v3258, %v3354
      %v3387 = vmax.f32 %v3259, %v3355
      %v3388 = vmax.f32 %v3260, %v3356
      %v3389 = vmax.f32 %v3261, %v3357
      %v3390 = vmax.f32 %v3262, %v3358
      %v3391 = vmax.f32 %v3263, %v3359
      %v3392 = vmax.f32 %v3264, %v3360
      %v3393 = vmax.f32 %v3265, %v3361
      %v3394 = vmax.f32 %v3266, %v3362
      %v3395 = vmax.f32 %v3267, %v3363
      %v3396 = vmax.f32 %v3268, %v3364
      %v3397 = vmax.f32 %v3269, %v3365
      %v3398 = vmax.f32 %v3270, %v3366
      %v3399 = vmax.f32 %v3271, %v3367
      %v3400 = vmax.f32 %v3272, %v3368
      %v3401 = vmax.f32 %v3273, %v3369
      %v3402 = vmax.f32 %v3274, %v3370
      %v3403 = vmax.f32 %v3275, %v3371
      %v3404 = vmax.f32 %v3276, %v3372
      %v3405 = vmax.f32 %v3277, %v3373
      %v3406 = vmax.f32 %v3278, %v3374
      %v3407 = vmax.f32 %v3279, %v3375
      %v3408 = vmax.f32 %v3280, %v3376
      %v3409 = vmax.f32 %v3281, %v3377
      %v3410 = vmax.f32 %v3282, %v3378
      %v3411 = vmax.f32 %v3283, %v3379
      %v3412 = vmax.f32 %v3284, %v3380
      %v3413 = vmax.f32 %v3285, %v3381
      %v3414 = vmax.f32 %v3286, %v3382
      %v3415 = vmax.f32 %v3287, %v3383
      %v3416 = vmax.f32 %v3288, %v3384
      %v3417 = vmax.f32 %v3133, %v3385
      %v3418 = vmax.f32 %v3134, %v3386
      %v3419 = vmax.f32 %v3163, %v3387
      %v3420 = vmax.f32 %v3164, %v3388
      %v3421 = vmax.f32 %v3165, %v3389
      %v3422 = vmax.f32 %v3166, %v3390
      %v3423 = vmax.f32 %v3167, %v3391
      %v3424 = vmax.f32 %v3168, %v3392
      %v3425 = vmax.f32 %v3169, %v3393
      %v3426 = vmax.f32 %v3170, %v3394
      %v3427 = vmax.f32 %v3171, %v3395
      %v3428 = vmax.f32 %v3172, %v3396
      %v3429 = vmax.f32 %v3173, %v3397
      %v3430 = vmax.f32 %v3174, %v3398
      %v3431 = vmax.f32 %v3175, %v3399
      %v3432 = vmax.f32 %v3176, %v3400
      %v3433 = vmax.f32 %v3177, %v3401
      %v3434 = vmax.f32 %v3178, %v3402
      %v3435 = vmax.f32 %v3179, %v3403
      %v3436 = vmax.f32 %v3180, %v3404
      %v3437 = vmax.f32 %v3181, %v3405
      %v3438 = vmax.f32 %v3182, %v3406
      %v3439 = vmax.f32 %v3183, %v3407
      %v3440 = vmax.f32 %v3184, %v3408
      %v3441 = vmax.f32 %v3185, %v3409
      %v3442 = vmax.f32 %v3186, %v3410
      %v3443 = vmax.f32 %v3187, %v3411
      %v3444 = vmax.f32 %v3188, %v3412
      %v3445 = vmax.f32 %v3189, %v3413
      %v3446 = vmax.f32 %v3190, %v3414
      %v3447 = vmax.f32 %v3191, %v3415
      %v3448 = vmax.f32 %v3192, %v3416
      %v3449 = vrot.slane %v3133, 2
      %v3450 = vrot.slane %v3163, 2
      %v3451 = vrot.slane %v3165, 2
      %v3452 = vrot.slane %v3167, 2
      %v3453 = vrot.slane %v3169, 2
      %v3454 = vrot.slane %v3171, 2
      %v3455 = vrot.slane %v3173, 2
      %v3456 = vrot.slane %v3175, 2
      %v3457 = vrot.slane %v3177, 2
      %v3458 = vrot.slane %v3179, 2
      %v3459 = vrot.slane %v3181, 2
      %v3460 = vrot.slane %v3183, 2
      %v3461 = vrot.slane %v3185, 2
      %v3462 = vrot.slane %v3187, 2
      %v3463 = vrot.slane %v3189, 2
      %v3464 = vrot.slane %v3191, 2
      %v3465 = vrot.slane %v3134, 2
      %v3466 = vrot.slane %v3164, 2
      %v3467 = vrot.slane %v3166, 2
      %v3468 = vrot.slane %v3168, 2
      %v3469 = vrot.slane %v3170, 2
      %v3470 = vrot.slane %v3172, 2
      %v3471 = vrot.slane %v3174, 2
      %v3472 = vrot.slane %v3176, 2
      %v3473 = vrot.slane %v3178, 2
      %v3474 = vrot.slane %v3180, 2
      %v3475 = vrot.slane %v3182, 2
      %v3476 = vrot.slane %v3184, 2
      %v3477 = vrot.slane %v3186, 2
      %v3478 = vrot.slane %v3188, 2
      %v3479 = vrot.slane %v3190, 2
      %v3480 = vrot.slane %v3192, 2
      %v3481 = vsel %vm1201, %v3449, %v3465
      %v3482 = vsel %vm1201, %v3450, %v3466
      %v3483 = vsel %vm1201, %v3451, %v3467
      %v3484 = vsel %vm1201, %v3452, %v3468
      %v3485 = vsel %vm1201, %v3453, %v3469
      %v3486 = vsel %vm1201, %v3454, %v3470
      %v3487 = vsel %vm1201, %v3455, %v3471
      %v3488 = vsel %vm1201, %v3456, %v3472
      %v3489 = vsel %vm1201, %v3457, %v3473
      %v3490 = vsel %vm1201, %v3458, %v3474
      %v3491 = vsel %vm1201, %v3459, %v3475
      %v3492 = vsel %vm1201, %v3460, %v3476
      %v3493 = vsel %vm1201, %v3461, %v3477
      %v3494 = vsel %vm1201, %v3462, %v3478
      %v3495 = vsel %vm1201, %v3463, %v3479
      %v3496 = vsel %vm1201, %v3464, %v3480
      %v3497 = vsel %vm1201, %v3465, %v3449
      %v3498 = vsel %vm1201, %v3466, %v3450
      %v3499 = vsel %vm1201, %v3467, %v3451
      %v3500 = vsel %vm1201, %v3468, %v3452
      %v3501 = vsel %vm1201, %v3469, %v3453
      %v3502 = vsel %vm1201, %v3470, %v3454
      %v3503 = vsel %vm1201, %v3471, %v3455
      %v3504 = vsel %vm1201, %v3472, %v3456
      %v3505 = vsel %vm1201, %v3473, %v3457
      %v3506 = vsel %vm1201, %v3474, %v3458
      %v3507 = vsel %vm1201, %v3475, %v3459
      %v3508 = vsel %vm1201, %v3476, %v3460
      %v3509 = vsel %vm1201, %v3477, %v3461
      %v3510 = vsel %vm1201, %v3478, %v3462
      %v3511 = vsel %vm1201, %v3479, %v3463
      %v3512 = vsel %vm1201, %v3480, %v3464
      %v3513 = vsel %vm1234, %v3481, -3.4028235e+38
      %v3514 = vsel %vm1235, %v3497, -3.4028235e+38
      %v3515 = vsel %vm1234, %v3482, -3.4028235e+38
      %v3516 = vsel %vm1235, %v3498, -3.4028235e+38
      %v3517 = vsel %vm1234, %v3483, -3.4028235e+38
      %v3518 = vsel %vm1235, %v3499, -3.4028235e+38
      %v3519 = vsel %vm1234, %v3484, -3.4028235e+38
      %v3520 = vsel %vm1235, %v3500, -3.4028235e+38
      %v3521 = vsel %vm1234, %v3485, -3.4028235e+38
      %v3522 = vsel %vm1235, %v3501, -3.4028235e+38
      %v3523 = vsel %vm1234, %v3486, -3.4028235e+38
      %v3524 = vsel %vm1235, %v3502, -3.4028235e+38
      %v3525 = vsel %vm1234, %v3487, -3.4028235e+38
      %v3526 = vsel %vm1235, %v3503, -3.4028235e+38
      %v3527 = vsel %vm1234, %v3488, -3.4028235e+38
      %v3528 = vsel %vm1235, %v3504, -3.4028235e+38
      %v3529 = vsel %vm1234, %v3489, -3.4028235e+38
      %v3530 = vsel %vm1235, %v3505, -3.4028235e+38
      %v3531 = vsel %vm1234, %v3490, -3.4028235e+38
      %v3532 = vsel %vm1235, %v3506, -3.4028235e+38
      %v3533 = vsel %vm1234, %v3491, -3.4028235e+38
      %v3534 = vsel %vm1235, %v3507, -3.4028235e+38
      %v3535 = vsel %vm1234, %v3492, -3.4028235e+38
      %v3536 = vsel %vm1235, %v3508, -3.4028235e+38
      %v3537 = vsel %vm1234, %v3493, -3.4028235e+38
      %v3538 = vsel %vm1235, %v3509, -3.4028235e+38
      %v3539 = vsel %vm1234, %v3494, -3.4028235e+38
      %v3540 = vsel %vm1235, %v3510, -3.4028235e+38
      %v3541 = vsel %vm1234, %v3495, -3.4028235e+38
      %v3542 = vsel %vm1235, %v3511, -3.4028235e+38
      %v3543 = vsel %vm1234, %v3496, -3.4028235e+38
      %v3544 = vsel %vm1235, %v3512, -3.4028235e+38
      %v3545 = vrot.slane %v3133, 6
      %v3546 = vrot.slane %v3163, 6
      %v3547 = vrot.slane %v3165, 6
      %v3548 = vrot.slane %v3167, 6
      %v3549 = vrot.slane %v3169, 6
      %v3550 = vrot.slane %v3171, 6
      %v3551 = vrot.slane %v3173, 6
      %v3552 = vrot.slane %v3175, 6
      %v3553 = vrot.slane %v3177, 6
      %v3554 = vrot.slane %v3179, 6
      %v3555 = vrot.slane %v3181, 6
      %v3556 = vrot.slane %v3183, 6
      %v3557 = vrot.slane %v3185, 6
      %v3558 = vrot.slane %v3187, 6
      %v3559 = vrot.slane %v3189, 6
      %v3560 = vrot.slane %v3191, 6
      %v3561 = vrot.slane %v3134, 6
      %v3562 = vrot.slane %v3164, 6
      %v3563 = vrot.slane %v3166, 6
      %v3564 = vrot.slane %v3168, 6
      %v3565 = vrot.slane %v3170, 6
      %v3566 = vrot.slane %v3172, 6
      %v3567 = vrot.slane %v3174, 6
      %v3568 = vrot.slane %v3176, 6
      %v3569 = vrot.slane %v3178, 6
      %v3570 = vrot.slane %v3180, 6
      %v3571 = vrot.slane %v3182, 6
      %v3572 = vrot.slane %v3184, 6
      %v3573 = vrot.slane %v3186, 6
      %v3574 = vrot.slane %v3188, 6
      %v3575 = vrot.slane %v3190, 6
      %v3576 = vrot.slane %v3192, 6
      %v3577 = vsel %vm1300, %v3545, %v3561
      %v3578 = vsel %vm1300, %v3546, %v3562
      %v3579 = vsel %vm1300, %v3547, %v3563
      %v3580 = vsel %vm1300, %v3548, %v3564
      %v3581 = vsel %vm1300, %v3549, %v3565
      %v3582 = vsel %vm1300, %v3550, %v3566
      %v3583 = vsel %vm1300, %v3551, %v3567
      %v3584 = vsel %vm1300, %v3552, %v3568
      %v3585 = vsel %vm1300, %v3553, %v3569
      %v3586 = vsel %vm1300, %v3554, %v3570
      %v3587 = vsel %vm1300, %v3555, %v3571
      %v3588 = vsel %vm1300, %v3556, %v3572
      %v3589 = vsel %vm1300, %v3557, %v3573
      %v3590 = vsel %vm1300, %v3558, %v3574
      %v3591 = vsel %vm1300, %v3559, %v3575
      %v3592 = vsel %vm1300, %v3560, %v3576
      %v3593 = vsel %vm1300, %v3561, %v3545
      %v3594 = vsel %vm1300, %v3562, %v3546
      %v3595 = vsel %vm1300, %v3563, %v3547
      %v3596 = vsel %vm1300, %v3564, %v3548
      %v3597 = vsel %vm1300, %v3565, %v3549
      %v3598 = vsel %vm1300, %v3566, %v3550
      %v3599 = vsel %vm1300, %v3567, %v3551
      %v3600 = vsel %vm1300, %v3568, %v3552
      %v3601 = vsel %vm1300, %v3569, %v3553
      %v3602 = vsel %vm1300, %v3570, %v3554
      %v3603 = vsel %vm1300, %v3571, %v3555
      %v3604 = vsel %vm1300, %v3572, %v3556
      %v3605 = vsel %vm1300, %v3573, %v3557
      %v3606 = vsel %vm1300, %v3574, %v3558
      %v3607 = vsel %vm1300, %v3575, %v3559
      %v3608 = vsel %vm1300, %v3576, %v3560
      %v3609 = vsel %vm1333, %v3593, -3.4028235e+38
      %v3610 = vsel %vm1334, %v3577, -3.4028235e+38
      %v3611 = vsel %vm1333, %v3594, -3.4028235e+38
      %v3612 = vsel %vm1334, %v3578, -3.4028235e+38
      %v3613 = vsel %vm1333, %v3595, -3.4028235e+38
      %v3614 = vsel %vm1334, %v3579, -3.4028235e+38
      %v3615 = vsel %vm1333, %v3596, -3.4028235e+38
      %v3616 = vsel %vm1334, %v3580, -3.4028235e+38
      %v3617 = vsel %vm1333, %v3597, -3.4028235e+38
      %v3618 = vsel %vm1334, %v3581, -3.4028235e+38
      %v3619 = vsel %vm1333, %v3598, -3.4028235e+38
      %v3620 = vsel %vm1334, %v3582, -3.4028235e+38
      %v3621 = vsel %vm1333, %v3599, -3.4028235e+38
      %v3622 = vsel %vm1334, %v3583, -3.4028235e+38
      %v3623 = vsel %vm1333, %v3600, -3.4028235e+38
      %v3624 = vsel %vm1334, %v3584, -3.4028235e+38
      %v3625 = vsel %vm1333, %v3601, -3.4028235e+38
      %v3626 = vsel %vm1334, %v3585, -3.4028235e+38
      %v3627 = vsel %vm1333, %v3602, -3.4028235e+38
      %v3628 = vsel %vm1334, %v3586, -3.4028235e+38
      %v3629 = vsel %vm1333, %v3603, -3.4028235e+38
      %v3630 = vsel %vm1334, %v3587, -3.4028235e+38
      %v3631 = vsel %vm1333, %v3604, -3.4028235e+38
      %v3632 = vsel %vm1334, %v3588, -3.4028235e+38
      %v3633 = vsel %vm1333, %v3605, -3.4028235e+38
      %v3634 = vsel %vm1334, %v3589, -3.4028235e+38
      %v3635 = vsel %vm1333, %v3606, -3.4028235e+38
      %v3636 = vsel %vm1334, %v3590, -3.4028235e+38
      %v3637 = vsel %vm1333, %v3607, -3.4028235e+38
      %v3638 = vsel %vm1334, %v3591, -3.4028235e+38
      %v3639 = vsel %vm1333, %v3608, -3.4028235e+38
      %v3640 = vsel %vm1334, %v3592, -3.4028235e+38
      %v3641 = vmax.f32 %v3513, %v3609
      %v3642 = vmax.f32 %v3514, %v3610
      %v3643 = vmax.f32 %v3515, %v3611
      %v3644 = vmax.f32 %v3516, %v3612
      %v3645 = vmax.f32 %v3517, %v3613
      %v3646 = vmax.f32 %v3518, %v3614
      %v3647 = vmax.f32 %v3519, %v3615
      %v3648 = vmax.f32 %v3520, %v3616
      %v3649 = vmax.f32 %v3521, %v3617
      %v3650 = vmax.f32 %v3522, %v3618
      %v3651 = vmax.f32 %v3523, %v3619
      %v3652 = vmax.f32 %v3524, %v3620
      %v3653 = vmax.f32 %v3525, %v3621
      %v3654 = vmax.f32 %v3526, %v3622
      %v3655 = vmax.f32 %v3527, %v3623
      %v3656 = vmax.f32 %v3528, %v3624
      %v3657 = vmax.f32 %v3529, %v3625
      %v3658 = vmax.f32 %v3530, %v3626
      %v3659 = vmax.f32 %v3531, %v3627
      %v3660 = vmax.f32 %v3532, %v3628
      %v3661 = vmax.f32 %v3533, %v3629
      %v3662 = vmax.f32 %v3534, %v3630
      %v3663 = vmax.f32 %v3535, %v3631
      %v3664 = vmax.f32 %v3536, %v3632
      %v3665 = vmax.f32 %v3537, %v3633
      %v3666 = vmax.f32 %v3538, %v3634
      %v3667 = vmax.f32 %v3539, %v3635
      %v3668 = vmax.f32 %v3540, %v3636
      %v3669 = vmax.f32 %v3541, %v3637
      %v3670 = vmax.f32 %v3542, %v3638
      %v3671 = vmax.f32 %v3543, %v3639
      %v3672 = vmax.f32 %v3544, %v3640
      %v3673 = vmax.f32 %v3417, %v3641
      %v3674 = vmax.f32 %v3418, %v3642
      %v3675 = vmax.f32 %v3419, %v3643
      %v3676 = vmax.f32 %v3420, %v3644
      %v3677 = vmax.f32 %v3421, %v3645
      %v3678 = vmax.f32 %v3422, %v3646
      %v3679 = vmax.f32 %v3423, %v3647
      %v3680 = vmax.f32 %v3424, %v3648
      %v3681 = vmax.f32 %v3425, %v3649
      %v3682 = vmax.f32 %v3426, %v3650
      %v3683 = vmax.f32 %v3427, %v3651
      %v3684 = vmax.f32 %v3428, %v3652
      %v3685 = vmax.f32 %v3429, %v3653
      %v3686 = vmax.f32 %v3430, %v3654
      %v3687 = vmax.f32 %v3431, %v3655
      %v3688 = vmax.f32 %v3432, %v3656
      %v3689 = vmax.f32 %v3433, %v3657
      %v3690 = vmax.f32 %v3434, %v3658
      %v3691 = vmax.f32 %v3435, %v3659
      %v3692 = vmax.f32 %v3436, %v3660
      %v3693 = vmax.f32 %v3437, %v3661
      %v3694 = vmax.f32 %v3438, %v3662
      %v3695 = vmax.f32 %v3439, %v3663
      %v3696 = vmax.f32 %v3440, %v3664
      %v3697 = vmax.f32 %v3441, %v3665
      %v3698 = vmax.f32 %v3442, %v3666
      %v3699 = vmax.f32 %v3443, %v3667
      %v3700 = vmax.f32 %v3444, %v3668
      %v3701 = vmax.f32 %v3445, %v3669
      %v3702 = vmax.f32 %v3446, %v3670
      %v3703 = vmax.f32 %v3447, %v3671
      %v3704 = vmax.f32 %v3448, %v3672
      %s3705 = scalar_lea.vmem %s3, 6
      %v3706 = vld [vmem:[%s3705] sm:$0x3]
      %v3708 = vsel %vm1433, %v3673, 0
      %v3711 = vsel %vm1433, %v3674, 0
      %v3714 = vsel %vm1433, %v3675, 0
      %v3717 = vsel %vm1433, %v3676, 0
      %v3720 = vsel %vm1433, %v3677, 0
      %v3723 = vsel %vm1433, %v3678, 0
      %v3726 = vsel %vm1433, %v3679, 0
      %v3729 = vsel %vm1433, %v3680, 0
      %v3732 = vsel %vm1433, %v3681, 0
      %v3735 = vsel %vm1433, %v3682, 0
      %v3738 = vsel %vm1433, %v3683, 0
      %v3741 = vsel %vm1433, %v3684, 0
      %v3744 = vsel %vm1433, %v3685, 0
      %v3747 = vsel %vm1433, %v3686, 0
      %v3750 = vsel %vm1433, %v3687, 0
      %v3753 = vsel %vm1433, %v3688, 0
      %v3756 = vsel %vm1433, %v3689, 0
      %v3759 = vsel %vm1433, %v3690, 0
      %v3762 = vsel %vm1433, %v3691, 0
      %v3765 = vsel %vm1433, %v3692, 0
      %v3768 = vsel %vm1433, %v3693, 0
      %v3771 = vsel %vm1433, %v3694, 0
      %v3774 = vsel %vm1433, %v3695, 0
      %v3777 = vsel %vm1433, %v3696, 0
      %v3780 = vsel %vm1433, %v3697, 0
      %v3783 = vsel %vm1433, %v3698, 0
      %v3786 = vsel %vm1433, %v3699, 0
      %v3789 = vsel %vm1433, %v3700, 0
      %v3792 = vsel %vm1433, %v3701, 0
      %v3795 = vsel %vm1433, %v3702, 0
      %v3798 = vsel %vm1433, %v3703, 0
      %v3801 = vsel %vm1433, %v3704, 0
      %v3804 = vsel %vm1530, %v3706, 0
      %3806 = vmatprep.subr.mxu0 0.0
      %3807 = vmatpush1.msra.mxu0 %v3804
      %3808 = vmatprep.subr.mxu0 0.0
      %3809 = vmatpush1.msra.mxu0 0.0
      %3810 = vmatprep.subr.mxu0 0.0
      %3811 = vmatpush1.msra.mxu0 0.0
      %3812 = vmatprep.subr.mxu0 0.0
      %3813 = vmatpush1.msra.mxu0 0.0
      %3814 = vmatprep.subr.mxu0 0.0
      %3815 = vmatpush1.msra.mxu0 0.0
      %3816 = vmatprep.subr.mxu0 0.0
      %3817 = vmatpush1.msra.mxu0 0.0
      %3818 = vmatprep.subr.mxu0 0.0
      %3819 = vmatpush1.msra.mxu0 0.0
      %3820 = vmatprep.subr.mxu0 0.0
      %3821 = vmatpush1.msra.mxu0 0.0
      %3822 = vmatprep.subr.mxu0 0.0
      %3823 = vmatpush1.msra.mxu0 0.0
      %3824 = vmatprep.subr.mxu0 0.0
      %3825 = vmatpush1.msra.mxu0 0.0
      %3826 = vmatprep.subr.mxu0 0.0
      %3827 = vmatpush1.msra.mxu0 0.0
      %3828 = vmatprep.subr.mxu0 0.0
      %3829 = vmatpush1.msra.mxu0 0.0
      %3830 = vmatprep.subr.mxu0 0.0
      %3831 = vmatpush1.msra.mxu0 0.0
      %3832 = vmatprep.subr.mxu0 0.0
      %3833 = vmatpush1.msra.mxu0 0.0
      %3834 = vmatprep.subr.mxu0 0.0
      %3835 = vmatpush1.msra.mxu0 0.0
      %3836 = vmatprep.subr.mxu0 0.0
      %3837 = vmatpush1.msra.mxu0 0.0
      %3838 = vmatprep.subr.mxu0 0.0
      %3839 = vmatpush1.msra.mxu0 0.0
      %3840 = vmatprep.subr.mxu0 0.0
      %3841 = vmatpush1.msra.mxu0 0.0
      %3842 = vmatprep.subr.mxu0 0.0
      %3843 = vmatpush1.msra.mxu0 0.0
      %3844 = vmatprep.subr.mxu0 0.0
      %3845 = vmatpush1.msra.mxu0 0.0
      %3846 = vmatprep.subr.mxu0 0.0
      %3847 = vmatpush1.msra.mxu0 0.0
      %3848 = vmatprep.subr.mxu0 0.0
      %3849 = vmatpush1.msra.mxu0 0.0
      %3850 = vmatprep.subr.mxu0 0.0
      %3851 = vmatpush1.msra.mxu0 0.0
      %3852 = vmatprep.subr.mxu0 0.0
      %3853 = vmatpush1.msra.mxu0 0.0
      %3854 = vmatprep.subr.mxu0 0.0
      %3855 = vmatpush1.msra.mxu0 0.0
      %3856 = vmatprep.subr.mxu0 0.0
      %3857 = vmatpush1.msra.mxu0 0.0
      %3858 = vmatprep.subr.mxu0 0.0
      %3859 = vmatpush1.msra.mxu0 0.0
      %3860 = vmatprep.subr.mxu0 0.0
      %3861 = vmatpush1.msra.mxu0 0.0
      %3862 = vmatprep.subr.mxu0 0.0
      %3863 = vmatpush1.msra.mxu0 0.0
      %3864 = vmatprep.subr.mxu0 0.0
      %3865 = vmatpush1.msra.mxu0 0.0
      %3866 = vmatprep.subr.mxu0 0.0
      %3867 = vmatpush1.msra.mxu0 0.0
      %3868 = vmatprep.subr.mxu0 0.0
      %3869 = vmatpush1.msra.mxu0 0.0
      %3870 = vmatprep.mubr.f32.mxu0 0.0
      %3871 = vmatmul.mubr.f32.gmra.mrb[0].mxu0 %v3708
      %v3872 = vpop.f32.mrb[0].mxu0
      %v3873 = vadd.f32 0.0, %v3872
      %v3874 = vpop.f32.mrb[0].mxu0
      %3875 = vmatprep.mubr.f32.mxu0 0.0
      %3876 = vmatmul.mubr.f32.gmra.mrb[0].mxu0 %v3711
      %v3877 = vpop.f32.mrb[0].mxu0
      %v3878 = vadd.f32 0.0, %v3877
      %v3879 = vpop.f32.mrb[0].mxu0
      %3880 = vmatprep.mubr.f32.mxu0 0.0
      %3881 = vmatmul.mubr.f32.gmra.mrb[0].mxu0 %v3714
      %v3882 = vpop.f32.mrb[0].mxu0
      %v3883 = vadd.f32 0.0, %v3882
      %v3884 = vpop.f32.mrb[0].mxu0
      %3885 = vmatprep.mubr.f32.mxu0 0.0
      %3886 = vmatmul.mubr.f32.gmra.mrb[0].mxu0 %v3717
      %v3887 = vpop.f32.mrb[0].mxu0
      %v3888 = vadd.f32 0.0, %v3887
      %v3889 = vpop.f32.mrb[0].mxu0
      %3890 = vmatprep.mubr.f32.mxu0 0.0
      %3891 = vmatmul.mubr.f32.gmra.mrb[0].mxu0 %v3720
      %v3892 = vpop.f32.mrb[0].mxu0
      %v3893 = vadd.f32 0.0, %v3892
      %v3894 = vpop.f32.mrb[0].mxu0
      %3895 = vmatprep.mubr.f32.mxu0 0.0
      %3896 = vmatmul.mubr.f32.gmra.mrb[0].mxu0 %v3723
      %v3897 = vpop.f32.mrb[0].mxu0
      %v3898 = vadd.f32 0.0, %v3897
      %v3899 = vpop.f32.mrb[0].mxu0
      %3900 = vmatprep.mubr.f32.mxu0 0.0
      %3901 = vmatmul.mubr.f32.gmra.mrb[0].mxu0 %v3726
      %v3902 = vpop.f32.mrb[0].mxu0
      %v3903 = vadd.f32 0.0, %v3902
      %v3904 = vpop.f32.mrb[0].mxu0
      %3905 = vmatprep.mubr.f32.mxu0 0.0
      %3906 = vmatmul.mubr.f32.gmra.mrb[0].mxu0 %v3729
      %v3907 = vpop.f32.mrb[0].mxu0
      %v3908 = vadd.f32 0.0, %v3907
      %v3909 = vpop.f32.mrb[0].mxu0
      %3910 = vmatprep.mubr.f32.mxu0 0.0
      %3911 = vmatmul.mubr.f32.gmra.mrb[0].mxu0 %v3732
      %v3912 = vpop.f32.mrb[0].mxu0
      %v3913 = vadd.f32 0.0, %v3912
      %v3914 = vpop.f32.mrb[0].mxu0
      %3915 = vmatprep.mubr.f32.mxu0 0.0
      %3916 = vmatmul.mubr.f32.gmra.mrb[0].mxu0 %v3735
      %v3917 = vpop.f32.mrb[0].mxu0
      %v3918 = vadd.f32 0.0, %v3917
      %v3919 = vpop.f32.mrb[0].mxu0
      %3920 = vmatprep.mubr.f32.mxu0 0.0
      %3921 = vmatmul.mubr.f32.gmra.mrb[0].mxu0 %v3738
      %v3922 = vpop.f32.mrb[0].mxu0
      %v3923 = vadd.f32 0.0, %v3922
      %v3924 = vpop.f32.mrb[0].mxu0
      %3925 = vmatprep.mubr.f32.mxu0 0.0
      %3926 = vmatmul.mubr.f32.gmra.mrb[0].mxu0 %v3741
      %v3927 = vpop.f32.mrb[0].mxu0
      %v3928 = vadd.f32 0.0, %v3927
      %v3929 = vpop.f32.mrb[0].mxu0
      %3930 = vmatprep.mubr.f32.mxu0 0.0
      %3931 = vmatmul.mubr.f32.gmra.mrb[0].mxu0 %v3744
      %v3932 = vpop.f32.mrb[0].mxu0
      %v3933 = vadd.f32 0.0, %v3932
      %v3934 = vpop.f32.mrb[0].mxu0
      %3935 = vmatprep.mubr.f32.mxu0 0.0
      %3936 = vmatmul.mubr.f32.gmra.mrb[0].mxu0 %v3747
      %v3937 = vpop.f32.mrb[0].mxu0
      %v3938 = vadd.f32 0.0, %v3937
      %v3939 = vpop.f32.mrb[0].mxu0
      %3940 = vmatprep.mubr.f32.mxu0 0.0
      %3941 = vmatmul.mubr.f32.gmra.mrb[0].mxu0 %v3750
      %v3942 = vpop.f32.mrb[0].mxu0
      %v3943 = vadd.f32 0.0, %v3942
      %v3944 = vpop.f32.mrb[0].mxu0
      %3945 = vmatprep.mubr.f32.mxu0 0.0
      %3946 = vmatmul.mubr.f32.gmra.mrb[0].mxu0 %v3753
      %v3947 = vpop.f32.mrb[0].mxu0
      %v3948 = vadd.f32 0.0, %v3947
      %v3949 = vpop.f32.mrb[0].mxu0
      %3950 = vmatprep.mubr.f32.mxu0 0.0
      %3951 = vmatmul.mubr.f32.gmra.mrb[0].mxu0 %v3756
      %v3952 = vpop.f32.mrb[0].mxu0
      %v3953 = vadd.f32 0.0, %v3952
      %v3954 = vpop.f32.mrb[0].mxu0
      %3955 = vmatprep.mubr.f32.mxu0 0.0
      %3956 = vmatmul.mubr.f32.gmra.mrb[0].mxu0 %v3759
      %v3957 = vpop.f32.mrb[0].mxu0
      %v3958 = vadd.f32 0.0, %v3957
      %v3959 = vpop.f32.mrb[0].mxu0
      %3960 = vmatprep.mubr.f32.mxu0 0.0
      %3961 = vmatmul.mubr.f32.gmra.mrb[0].mxu0 %v3762
      %v3962 = vpop.f32.mrb[0].mxu0
      %v3963 = vadd.f32 0.0, %v3962
      %v3964 = vpop.f32.mrb[0].mxu0
      %3965 = vmatprep.mubr.f32.mxu0 0.0
      %3966 = vmatmul.mubr.f32.gmra.mrb[0].mxu0 %v3765
      %v3967 = vpop.f32.mrb[0].mxu0
      %v3968 = vadd.f32 0.0, %v3967
      %v3969 = vpop.f32.mrb[0].mxu0
      %3970 = vmatprep.mubr.f32.mxu0 0.0
      %3971 = vmatmul.mubr.f32.gmra.mrb[0].mxu0 %v3768
      %v3972 = vpop.f32.mrb[0].mxu0
      %v3973 = vadd.f32 0.0, %v3972
      %v3974 = vpop.f32.mrb[0].mxu0
      %3975 = vmatprep.mubr.f32.mxu0 0.0
      %3976 = vmatmul.mubr.f32.gmra.mrb[0].mxu0 %v3771
      %v3977 = vpop.f32.mrb[0].mxu0
      %v3978 = vadd.f32 0.0, %v3977
      %v3979 = vpop.f32.mrb[0].mxu0
      %3980 = vmatprep.mubr.f32.mxu0 0.0
      %3981 = vmatmul.mubr.f32.gmra.mrb[0].mxu0 %v3774
      %v3982 = vpop.f32.mrb[0].mxu0
      %v3983 = vadd.f32 0.0, %v3982
      %v3984 = vpop.f32.mrb[0].mxu0
      %3985 = vmatprep.mubr.f32.mxu0 0.0
      %3986 = vmatmul.mubr.f32.gmra.mrb[0].mxu0 %v3777
      %v3987 = vpop.f32.mrb[0].mxu0
      %v3988 = vadd.f32 0.0, %v3987
      %v3989 = vpop.f32.mrb[0].mxu0
      %3990 = vmatprep.mubr.f32.mxu0 0.0
      %3991 = vmatmul.mubr.f32.gmra.mrb[0].mxu0 %v3780
      %v3992 = vpop.f32.mrb[0].mxu0
      %v3993 = vadd.f32 0.0, %v3992
      %v3994 = vpop.f32.mrb[0].mxu0
      %3995 = vmatprep.mubr.f32.mxu0 0.0
      %3996 = vmatmul.mubr.f32.gmra.mrb[0].mxu0 %v3783
      %v3997 = vpop.f32.mrb[0].mxu0
      %v3998 = vadd.f32 0.0, %v3997
      %v3999 = vpop.f32.mrb[0].mxu0
      %4000 = vmatprep.mubr.f32.mxu0 0.0
      %4001 = vmatmul.mubr.f32.gmra.mrb[0].mxu0 %v3786
      %v4002 = vpop.f32.mrb[0].mxu0
      %v4003 = vadd.f32 0.0, %v4002
      %v4004 = vpop.f32.mrb[0].mxu0
      %4005 = vmatprep.mubr.f32.mxu0 0.0
      %4006 = vmatmul.mubr.f32.gmra.mrb[0].mxu0 %v3789
      %v4007 = vpop.f32.mrb[0].mxu0
      %v4008 = vadd.f32 0.0, %v4007
      %v4009 = vpop.f32.mrb[0].mxu0
      %4010 = vmatprep.mubr.f32.mxu0 0.0
      %4011 = vmatmul.mubr.f32.gmra.mrb[0].mxu0 %v3792
      %v4012 = vpop.f32.mrb[0].mxu0
      %v4013 = vadd.f32 0.0, %v4012
      %v4014 = vpop.f32.mrb[0].mxu0
      %4015 = vmatprep.mubr.f32.mxu0 0.0
      %4016 = vmatmul.mubr.f32.gmra.mrb[0].mxu0 %v3795
      %v4017 = vpop.f32.mrb[0].mxu0
      %v4018 = vadd.f32 0.0, %v4017
      %v4019 = vpop.f32.mrb[0].mxu0
      %4020 = vmatprep.mubr.f32.mxu0 0.0
      %4021 = vmatmul.mubr.f32.gmra.mrb[0].mxu0 %v3798
      %v4022 = vpop.f32.mrb[0].mxu0
      %v4023 = vadd.f32 0.0, %v4022
      %v4024 = vpop.f32.mrb[0].mxu0
      %4025 = vmatprep.mubr.f32.mxu0 0.0
      %4026 = vmatmul.mubr.f32.gmra.mrb[0].mxu0 %v3801
      %v4027 = vpop.f32.mrb[0].mxu0
      %v4028 = vadd.f32 0.0, %v4027
      %v4029 = vpop.f32.mrb[0].mxu0
      %4030 = vdwg.mxu0
      %v4031 = vadd.f32 %v3041, %v3873
      %v4032 = vadd.f32 %v3042, %v3878
      %v4033 = vadd.f32 %v3043, %v3883
      %v4034 = vadd.f32 %v3044, %v3888
      %v4035 = vadd.f32 %v3045, %v3893
      %v4036 = vadd.f32 %v3046, %v3898
      %v4037 = vadd.f32 %v3047, %v3903
      %v4038 = vadd.f32 %v3048, %v3908
      %v4039 = vadd.f32 %v3049, %v3913
      %v4040 = vadd.f32 %v3050, %v3918
      %v4041 = vadd.f32 %v3051, %v3923
      %v4042 = vadd.f32 %v3052, %v3928
      %v4043 = vadd.f32 %v3053, %v3933
      %v4044 = vadd.f32 %v3054, %v3938
      %v4045 = vadd.f32 %v3055, %v3943
      %v4046 = vadd.f32 %v3056, %v3948
      %v4047 = vadd.f32 %v3057, %v3953
      %v4048 = vadd.f32 %v3058, %v3958
      %v4049 = vadd.f32 %v3059, %v3963
      %v4050 = vadd.f32 %v3060, %v3968
      %v4051 = vadd.f32 %v3061, %v3973
      %v4052 = vadd.f32 %v3062, %v3978
      %v4053 = vadd.f32 %v3063, %v3983
      %v4054 = vadd.f32 %v3064, %v3988
      %v4055 = vadd.f32 %v3065, %v3993
      %v4056 = vadd.f32 %v3066, %v3998
      %v4057 = vadd.f32 %v3067, %v4003
      %v4058 = vadd.f32 %v3068, %v4008
      %v4059 = vadd.f32 %v3069, %v4013
      %v4060 = vadd.f32 %v3070, %v4018
      %v4061 = vadd.f32 %v3071, %v4023
      %v4062 = vadd.f32 %v3072, %v4028
      %v4063 = vld [vmem:[%s4] sm:$0x1]
      %v4065 = vlaneseq
      %v4066 = vshrl.u32 %v4065, 7
      %v4067 = vsub.s32 0, %v4066
      %v4068 = vrot.slane %v4063, %v4067
      %v4070 = vadd.f32 %v4031, %v4068
      %v4071 = vadd.f32 %v4032, %v4068
      %v4072 = vadd.f32 %v4033, %v4068
      %v4073 = vadd.f32 %v4034, %v4068
      %v4074 = vadd.f32 %v4035, %v4068
      %v4075 = vadd.f32 %v4036, %v4068
      %v4076 = vadd.f32 %v4037, %v4068
      %v4077 = vadd.f32 %v4038, %v4068
      %v4078 = vadd.f32 %v4039, %v4068
      %v4079 = vadd.f32 %v4040, %v4068
      %v4080 = vadd.f32 %v4041, %v4068
      %v4081 = vadd.f32 %v4042, %v4068
      %v4082 = vadd.f32 %v4043, %v4068
      %v4083 = vadd.f32 %v4044, %v4068
      %v4084 = vadd.f32 %v4045, %v4068
      %v4085 = vadd.f32 %v4046, %v4068
      %v4086 = vadd.f32 %v4047, %v4068
      %v4087 = vadd.f32 %v4048, %v4068
      %v4088 = vadd.f32 %v4049, %v4068
      %v4089 = vadd.f32 %v4050, %v4068
      %v4090 = vadd.f32 %v4051, %v4068
      %v4091 = vadd.f32 %v4052, %v4068
      %v4092 = vadd.f32 %v4053, %v4068
      %v4093 = vadd.f32 %v4054, %v4068
      %v4094 = vadd.f32 %v4055, %v4068
      %v4095 = vadd.f32 %v4056, %v4068
      %v4096 = vadd.f32 %v4057, %v4068
      %v4097 = vadd.f32 %v4058, %v4068
      %v4098 = vadd.f32 %v4059, %v4068
      %v4099 = vadd.f32 %v4060, %v4068
      %v4100 = vadd.f32 %v4061, %v4068
      %v4101 = vadd.f32 %v4062, %v4068
      %v4102 = vsub.f32 0.0, %v4070
      %v4103 = vsub.f32 0.0, %v4071
      %v4104 = vsub.f32 0.0, %v4072
      %v4105 = vsub.f32 0.0, %v4073
      %v4106 = vsub.f32 0.0, %v4074
      %v4107 = vsub.f32 0.0, %v4075
      %v4108 = vsub.f32 0.0, %v4076
      %v4109 = vsub.f32 0.0, %v4077
      %v4110 = vsub.f32 0.0, %v4078
      %v4111 = vsub.f32 0.0, %v4079
      %v4112 = vsub.f32 0.0, %v4080
      %v4113 = vsub.f32 0.0, %v4081
      %v4114 = vsub.f32 0.0, %v4082
      %v4115 = vsub.f32 0.0, %v4083
      %v4116 = vsub.f32 0.0, %v4084
      %v4117 = vsub.f32 0.0, %v4085
      %v4118 = vsub.f32 0.0, %v4086
      %v4119 = vsub.f32 0.0, %v4087
      %v4120 = vsub.f32 0.0, %v4088
      %v4121 = vsub.f32 0.0, %v4089
      %v4122 = vsub.f32 0.0, %v4090
      %v4123 = vsub.f32 0.0, %v4091
      %v4124 = vsub.f32 0.0, %v4092
      %v4125 = vsub.f32 0.0, %v4093
      %v4126 = vsub.f32 0.0, %v4094
      %v4127 = vsub.f32 0.0, %v4095
      %v4128 = vsub.f32 0.0, %v4096
      %v4129 = vsub.f32 0.0, %v4097
      %v4130 = vsub.f32 0.0, %v4098
      %v4131 = vsub.f32 0.0, %v4099
      %v4132 = vsub.f32 0.0, %v4100
      %v4133 = vsub.f32 0.0, %v4101
      %v4134 = vmul.f32 %v4102, 1.442695
      %v4135 = vpow.pop %v4134
      %v4136 = vmul.f32 %v4103, 1.442695
      %v4137 = vpow.pop %v4136
      %v4138 = vmul.f32 %v4104, 1.442695
      %v4139 = vpow.pop %v4138
      %v4140 = vmul.f32 %v4105, 1.442695
      %v4141 = vpow.pop %v4140
      %v4142 = vmul.f32 %v4106, 1.442695
      %v4143 = vpow.pop %v4142
      %v4144 = vmul.f32 %v4107, 1.442695
      %v4145 = vpow.pop %v4144
      %v4146 = vmul.f32 %v4108, 1.442695
      %v4147 = vpow.pop %v4146
      %v4148 = vmul.f32 %v4109, 1.442695
      %v4149 = vpow.pop %v4148
      %v4150 = vmul.f32 %v4110, 1.442695
      %v4151 = vpow.pop %v4150
      %v4152 = vmul.f32 %v4111, 1.442695
      %v4153 = vpow.pop %v4152
      %v4154 = vmul.f32 %v4112, 1.442695
      %v4155 = vpow.pop %v4154
      %v4156 = vmul.f32 %v4113, 1.442695
      %v4157 = vpow.pop %v4156
      %v4158 = vmul.f32 %v4114, 1.442695
      %v4159 = vpow.pop %v4158
      %v4160 = vmul.f32 %v4115, 1.442695
      %v4161 = vpow.pop %v4160
      %v4162 = vmul.f32 %v4116, 1.442695
      %v4163 = vpow.pop %v4162
      %v4164 = vmul.f32 %v4117, 1.442695
      %v4165 = vpow.pop %v4164
      %v4166 = vmul.f32 %v4118, 1.442695
      %v4167 = vpow.pop %v4166
      %v4168 = vmul.f32 %v4119, 1.442695
      %v4169 = vpow.pop %v4168
      %v4170 = vmul.f32 %v4120, 1.442695
      %v4171 = vpow.pop %v4170
      %v4172 = vmul.f32 %v4121, 1.442695
      %v4173 = vpow.pop %v4172
      %v4174 = vmul.f32 %v4122, 1.442695
      %v4175 = vpow.pop %v4174
      %v4176 = vmul.f32 %v4123, 1.442695
      %v4177 = vpow.pop %v4176
      %v4178 = vmul.f32 %v4124, 1.442695
      %v4179 = vpow.pop %v4178
      %v4180 = vmul.f32 %v4125, 1.442695
      %v4181 = vpow.pop %v4180
      %v4182 = vmul.f32 %v4126, 1.442695
      %v4183 = vpow.pop %v4182
      %v4184 = vmul.f32 %v4127, 1.442695
      %v4185 = vpow.pop %v4184
      %v4186 = vmul.f32 %v4128, 1.442695
      %v4187 = vpow.pop %v4186
      %v4188 = vmul.f32 %v4129, 1.442695
      %v4189 = vpow.pop %v4188
      %v4190 = vmul.f32 %v4130, 1.442695
      %v4191 = vpow.pop %v4190
      %v4192 = vmul.f32 %v4131, 1.442695
      %v4193 = vpow.pop %v4192
      %v4194 = vmul.f32 %v4132, 1.442695
      %v4195 = vpow.pop %v4194
      %v4196 = vmul.f32 %v4133, 1.442695
      %v4197 = vpow.pop %v4196
      %v4198 = vadd.f32 %v4135, 1.0
      %v4199 = vadd.f32 %v4137, 1.0
      %v4200 = vadd.f32 %v4139, 1.0
      %v4201 = vadd.f32 %v4141, 1.0
      %v4202 = vadd.f32 %v4143, 1.0
      %v4203 = vadd.f32 %v4145, 1.0
      %v4204 = vadd.f32 %v4147, 1.0
      %v4205 = vadd.f32 %v4149, 1.0
      %v4206 = vadd.f32 %v4151, 1.0
      %v4207 = vadd.f32 %v4153, 1.0
      %v4208 = vadd.f32 %v4155, 1.0
      %v4209 = vadd.f32 %v4157, 1.0
      %v4210 = vadd.f32 %v4159, 1.0
      %v4211 = vadd.f32 %v4161, 1.0
      %v4212 = vadd.f32 %v4163, 1.0
      %v4213 = vadd.f32 %v4165, 1.0
      %v4214 = vadd.f32 %v4167, 1.0
      %v4215 = vadd.f32 %v4169, 1.0
      %v4216 = vadd.f32 %v4171, 1.0
      %v4217 = vadd.f32 %v4173, 1.0
      %v4218 = vadd.f32 %v4175, 1.0
      %v4219 = vadd.f32 %v4177, 1.0
      %v4220 = vadd.f32 %v4179, 1.0
      %v4221 = vadd.f32 %v4181, 1.0
      %v4222 = vadd.f32 %v4183, 1.0
      %v4223 = vadd.f32 %v4185, 1.0
      %v4224 = vadd.f32 %v4187, 1.0
      %v4225 = vadd.f32 %v4189, 1.0
      %v4226 = vadd.f32 %v4191, 1.0
      %v4227 = vadd.f32 %v4193, 1.0
      %v4228 = vadd.f32 %v4195, 1.0
      %v4229 = vadd.f32 %v4197, 1.0
      %v4230 = vrcp.pop %v4198
      %v4231 = vrcp.pop %v4199
      %v4232 = vrcp.pop %v4200
      %v4233 = vrcp.pop %v4201
      %v4234 = vrcp.pop %v4202
      %v4235 = vrcp.pop %v4203
      %v4236 = vrcp.pop %v4204
      %v4237 = vrcp.pop %v4205
      %v4238 = vrcp.pop %v4206
      %v4239 = vrcp.pop %v4207
      %v4240 = vrcp.pop %v4208
      %v4241 = vrcp.pop %v4209
      %v4242 = vrcp.pop %v4210
      %v4243 = vrcp.pop %v4211
      %v4244 = vrcp.pop %v4212
      %v4245 = vrcp.pop %v4213
      %v4246 = vrcp.pop %v4214
      %v4247 = vrcp.pop %v4215
      %v4248 = vrcp.pop %v4216
      %v4249 = vrcp.pop %v4217
      %v4250 = vrcp.pop %v4218
      %v4251 = vrcp.pop %v4219
      %v4252 = vrcp.pop %v4220
      %v4253 = vrcp.pop %v4221
      %v4254 = vrcp.pop %v4222
      %v4255 = vrcp.pop %v4223
      %v4256 = vrcp.pop %v4224
      %v4257 = vrcp.pop %v4225
      %v4258 = vrcp.pop %v4226
      %v4259 = vrcp.pop %v4227
      %v4260 = vrcp.pop %v4228
      %v4261 = vrcp.pop %v4229
      %v4262 = vmul.f32 %v4070, %v4230
      %v4263 = vmul.f32 %v4071, %v4231
      %v4264 = vmul.f32 %v4072, %v4232
      %v4265 = vmul.f32 %v4073, %v4233
      %v4266 = vmul.f32 %v4074, %v4234
      %v4267 = vmul.f32 %v4075, %v4235
      %v4268 = vmul.f32 %v4076, %v4236
      %v4269 = vmul.f32 %v4077, %v4237
      %v4270 = vmul.f32 %v4078, %v4238
      %v4271 = vmul.f32 %v4079, %v4239
      %v4272 = vmul.f32 %v4080, %v4240
      %v4273 = vmul.f32 %v4081, %v4241
      %v4274 = vmul.f32 %v4082, %v4242
      %v4275 = vmul.f32 %v4083, %v4243
      %v4276 = vmul.f32 %v4084, %v4244
      %v4277 = vmul.f32 %v4085, %v4245
      %v4278 = vmul.f32 %v4086, %v4246
      %v4279 = vmul.f32 %v4087, %v4247
      %v4280 = vmul.f32 %v4088, %v4248
      %v4281 = vmul.f32 %v4089, %v4249
      %v4282 = vmul.f32 %v4090, %v4250
      %v4283 = vmul.f32 %v4091, %v4251
      %v4284 = vmul.f32 %v4092, %v4252
      %v4285 = vmul.f32 %v4093, %v4253
      %v4286 = vmul.f32 %v4094, %v4254
      %v4287 = vmul.f32 %v4095, %v4255
      %v4288 = vmul.f32 %v4096, %v4256
      %v4289 = vmul.f32 %v4097, %v4257
      %v4290 = vmul.f32 %v4098, %v4258
      %v4291 = vmul.f32 %v4099, %v4259
      %v4292 = vmul.f32 %v4100, %v4260
      %v4293 = vmul.f32 %v4101, %v4261
      %4294 = vst.msk [vmem:[%s224] sm:$0xff] %vm265, %v4262
      %4295 = vst.msk [vmem:[%s224 + $0x8] sm:$0xff] %vm265, %v4263
      %4296 = vst.msk [vmem:[%s224 + $0x10] sm:$0xff] %vm265, %v4264
      %4297 = vst.msk [vmem:[%s224 + $0x18] sm:$0xff] %vm265, %v4265
      %4298 = vst.msk [vmem:[%s224 + $0x20] sm:$0xff] %vm265, %v4266
      %4299 = vst.msk [vmem:[%s224 + $0x28] sm:$0xff] %vm265, %v4267
      %4300 = vst.msk [vmem:[%s224 + $0x30] sm:$0xff] %vm265, %v4268
      %4301 = vst.msk [vmem:[%s224 + $0x38] sm:$0xff] %vm265, %v4269
      %4302 = vst.msk [vmem:[%s224 + $0x40] sm:$0xff] %vm265, %v4270
      %4303 = vst.msk [vmem:[%s224 + $0x48] sm:$0xff] %vm265, %v4271
      %4304 = vst.msk [vmem:[%s224 + $0x50] sm:$0xff] %vm265, %v4272
      %4305 = vst.msk [vmem:[%s224 + $0x58] sm:$0xff] %vm265, %v4273
      %4306 = vst.msk [vmem:[%s224 + $0x60] sm:$0xff] %vm265, %v4274
      %4307 = vst.msk [vmem:[%s224 + $0x68] sm:$0xff] %vm265, %v4275
      %4308 = vst.msk [vmem:[%s224 + $0x70] sm:$0xff] %vm265, %v4276
      %4309 = vst.msk [vmem:[%s224 + $0x78] sm:$0xff] %vm265, %v4277
      %4310 = vst.msk [vmem:[%s224 + $0x80] sm:$0xff] %vm265, %v4278
      %4311 = vst.msk [vmem:[%s224 + $0x88] sm:$0xff] %vm265, %v4279
      %4312 = vst.msk [vmem:[%s224 + $0x90] sm:$0xff] %vm265, %v4280
      %4313 = vst.msk [vmem:[%s224 + $0x98] sm:$0xff] %vm265, %v4281
      %4314 = vst.msk [vmem:[%s224 + $0xa0] sm:$0xff] %vm265, %v4282
      %4315 = vst.msk [vmem:[%s224 + $0xa8] sm:$0xff] %vm265, %v4283
      %4316 = vst.msk [vmem:[%s224 + $0xb0] sm:$0xff] %vm265, %v4284
      %4317 = vst.msk [vmem:[%s224 + $0xb8] sm:$0xff] %vm265, %v4285
      %4318 = vst.msk [vmem:[%s224 + $0xc0] sm:$0xff] %vm265, %v4286
      %4319 = vst.msk [vmem:[%s224 + $0xc8] sm:$0xff] %vm265, %v4287
      %4320 = vst.msk [vmem:[%s224 + $0xd0] sm:$0xff] %vm265, %v4288
      %4321 = vst.msk [vmem:[%s224 + $0xd8] sm:$0xff] %vm265, %v4289
      %4322 = vst.msk [vmem:[%s224 + $0xe0] sm:$0xff] %vm265, %v4290
      %4323 = vst.msk [vmem:[%s224 + $0xe8] sm:$0xff] %vm265, %v4291
      %4324 = vst.msk [vmem:[%s224 + $0xf0] sm:$0xff] %vm265, %v4292
      %4325 = vst.msk [vmem:[%s224 + $0xf8] sm:$0xff] %vm265, %v4293
      %p4326 = scmp.lt.s32.totalorder %s16, 1
      %s4327 = scalar_select %p4326, %s16, 1
      %s4328 = smul.addr %s4327, 32
      %s4329 = smul.addr %s4328, 8
      %s4330 = scalar_lea.vmem %s5, %s4329
      // Predicated region
      $region41: #{sppf_forward_nhwc.1} parent=39 // pred_check
        %p4331 = pneg %p144
      $region42: #{sppf_forward_nhwc.1} parent=39 // pred_check_branch
        %4333 = sbr.rel (%p4331) target = $region44
      $region43: #{sppf_forward_nhwc.1} parent=39 // pred_region
        _
      $region44: #{sppf_forward_nhwc.1} parent=39 // pred_fallthru
        _
    $region40: #{sppf_forward_nhwc.1} parent=5 // pred_fallthru
      _
    %p4334 = scmp.le.s32.totalorder 2, %s11
    // Predicated region
    $region45: #{sppf_forward_nhwc.1} parent=5 // pred_check
      %p4335 = pneg %p4334
    $region46: #{sppf_forward_nhwc.1} parent=5 // pred_check_branch
      %4337 = sbr.rel (%p4335) target = $region48
    $region47: #{sppf_forward_nhwc.1} parent=5 // pred_region
      %s4338 = ssub.s32 %s11, 2
      // Predicated region
      $region49: #{sppf_forward_nhwc.1} parent=47 // pred_check
        %p4339 = pneg %p150
      $region50: #{sppf_forward_nhwc.1} parent=47 // pred_check_branch
        %4341 = sbr.rel (%p4339) target = $region52
      $region51: #{sppf_forward_nhwc.1} parent=47 // pred_region
        %p4342 = scmp.lt.s32.totalorder %s17, 1
        %s4343 = scalar_select %p4342, %s17, 1
        %s4344 = smul.addr %s4343, 32
        %s4345 = smul.addr %s4344, 8
        %s4346 = scalar_lea.vmem %s5, %s4345
      $region52: #{sppf_forward_nhwc.1} parent=47 // pred_fallthru
        _
    $region48: #{sppf_forward_nhwc.1} parent=5 // pred_fallthru
      _
  $region6: #{sppf_forward_nhwc.1} parent=0 // loop_footer
    %s15 = sadd.s32 1, %s11
  $region7: #{sppf_forward_nhwc.1} parent=0 // loop_footer_branch
    %10 = sbr.rel target = $region3
  $region8: #{sppf_forward_nhwc.1} parent=0 // loop_exit
    _

</llo_original>
